<compile_context>
chip_gen: v7x
topology: tpu7x:2x2x1
jax: 0.10.0
libtpu: 0.0.40
codegen_flags: <defaults>
</compile_context>

<pallas_src>
import math
from functools import partial

import jax
import jax.numpy as jnp
from jax.experimental import pallas as pl
from jax.experimental.pallas import tpu as pltpu


def _round_up(x, m):
    return (x + m - 1) // m * m


def _pick_tm(M, target=128):
    """Row-tile size (multiple of 8); prefer >=2 blocks so both v7x TCs work."""
    tm = min(target, _round_up(M, 8))
    Mp = _round_up(M, tm)
    if Mp // tm < 2 and M > 8:
        tm = max(8, _round_up(Mp // 2, 8))
        Mp = _round_up(M, tm)
    return tm, Mp


def _const_spec(shape):
    nd = len(shape)
    return pl.BlockSpec(shape, lambda *_: (0,) * nd)


# --------------------------------------------------------------------------
# Shared in-kernel helpers
# --------------------------------------------------------------------------

def _residual_ln(acc_f32, resid, g_ref, b_ref, out_dtype, eps=1e-5):
    """Post-LN: LayerNorm(acc + resid), stats in f32."""
    z = acc_f32 + resid.astype(jnp.float32)
    mean = jnp.mean(z, axis=-1, keepdims=True)
    var = jnp.mean((z - mean) ** 2, axis=-1, keepdims=True)
    inv = jax.lax.rsqrt(var + eps)
    return ((z - mean) * inv * g_ref[...] + b_ref[...]).astype(out_dtype)


def _attend_project(q, k, v, mask, wo_ref, bo_ref, num_heads, dk):
    """Per-head softmax(q k^T) v, with the output projection accumulated per
    head (attn_out @ wo == sum_h attn_h @ wo[h*dk:(h+1)*dk, :]) — no concat."""
    Sq = q.shape[0]
    D = wo_ref.shape[1]
    acc = jnp.zeros((Sq, D), jnp.float32)
    for h in range(num_heads):
        sl = slice(h * dk, (h + 1) * dk)
        s = jax.lax.dot_general(q[:, sl], k[:, sl], (((1,), (1,)), ((), ())),
                                preferred_element_type=jnp.float32)
        if mask is not None:
            s = s + mask
        s = s - jnp.max(s, axis=-1, keepdims=True)
        p = jnp.exp(s)
        p = p * pl.reciprocal(jnp.sum(p, axis=-1, keepdims=True), approx=True)
        ah = jnp.dot(p.astype(v.dtype), v[:, sl],
                     preferred_element_type=jnp.float32)
        acc = acc + jnp.dot(ah.astype(jnp.bfloat16), wo_ref[sl, :],
                            preferred_element_type=jnp.float32)
    return acc + bo_ref[...]


# --------------------------------------------------------------------------
# Fused self-attention block kernel:
#   QKV projection + MHA + output projection + residual + LayerNorm
# --------------------------------------------------------------------------

def _self_attn_kernel(x_ref, wqkv_ref, bqkv_ref, wo_ref, bo_ref, g_ref, be_ref,
                      *rest, num_heads, scale, has_mask):
    if has_mask:
        m_ref, o_ref = rest
        mask = m_ref[...]
    else:
        (o_ref,) = rest
        mask = None

    x = x_ref[0]                                     # (S, D) bf16
    D = x.shape[-1]
    dk = D // num_heads

    qkv = jnp.dot(x, wqkv_ref[...],
                  preferred_element_type=jnp.float32) + bqkv_ref[...]
    q = (qkv[:, :D] * scale).astype(jnp.bfloat16)    # scale folded in once
    k = qkv[:, D:2 * D].astype(jnp.bfloat16)
    v = qkv[:, 2 * D:].astype(jnp.bfloat16)

    acc = _attend_project(q, k, v, mask, wo_ref, bo_ref, num_heads, dk)
    o_ref[0] = _residual_ln(acc, x, g_ref, be_ref, o_ref.dtype)


def self_attn_block(x, mask, p, gamma, beta, num_heads):
    B, S, D = x.shape
    scale = 1.0 / math.sqrt(D // num_heads)
    has_mask = mask is not None

    in_specs = [
        pl.BlockSpec((1, S, D), lambda b: (b, 0, 0)),
        _const_spec((D, 3 * D)),
        _const_spec((1, 3 * D)),
        _const_spec((D, D)),
        _const_spec((1, D)),
        _const_spec((1, D)),
        _const_spec((1, D)),
    ]
    args = [x, p["w_qkv"], p["b_qkv"], p["wo"], p["bo"], gamma, beta]
    if has_mask:
        in_specs.append(_const_spec((S, mask.shape[-1])))
        args.append(mask.astype(jnp.float32))

    return pl.pallas_call(
        partial(_self_attn_kernel, num_heads=num_heads, scale=scale,
                has_mask=has_mask),
        out_shape=jax.ShapeDtypeStruct((B, S, D), jnp.bfloat16),
        grid=(B,),
        in_specs=in_specs,
        out_specs=pl.BlockSpec((1, S, D), lambda b: (b, 0, 0)),
        compiler_params=pltpu.CompilerParams(
            dimension_semantics=("parallel",)),
    )(*args)


# --------------------------------------------------------------------------
# Fused cross-attention block kernel (Q proj + fused KV proj + MHA + out proj
# + residual + LayerNorm)
# --------------------------------------------------------------------------

def _cross_attn_kernel(xq_ref, xkv_ref, wq_ref, bq_ref, wkv_ref, bkv_ref,
                       wo_ref, bo_ref, g_ref, be_ref, *rest,
                       num_heads, scale, has_mask):
    if has_mask:
        m_ref, o_ref = rest
        mask = m_ref[...]
    else:
        (o_ref,) = rest
        mask = None

    xq = xq_ref[0]                                   # (Sq, D) bf16
    xkv = xkv_ref[0]                                 # (Sk, D) bf16
    D = xq.shape[-1]
    dk = D // num_heads

    q = (jnp.dot(xq, wq_ref[...], preferred_element_type=jnp.float32)
         + bq_ref[...]) * scale
    q = q.astype(jnp.bfloat16)
    kv = jnp.dot(xkv, wkv_ref[...],
                 preferred_element_type=jnp.float32) + bkv_ref[...]
    k = kv[:, :D].astype(jnp.bfloat16)
    v = kv[:, D:].astype(jnp.bfloat16)

    acc = _attend_project(q, k, v, mask, wo_ref, bo_ref, num_heads, dk)
    o_ref[0] = _residual_ln(acc, xq, g_ref, be_ref, o_ref.dtype)


def cross_attn_block(x_q, x_kv, mask, p, gamma, beta, num_heads):
    B, Sq, D = x_q.shape
    _, Sk, _ = x_kv.shape
    scale = 1.0 / math.sqrt(D // num_heads)
    has_mask = mask is not None

    in_specs = [
        pl.BlockSpec((1, Sq, D), lambda b: (b, 0, 0)),
        pl.BlockSpec((1, Sk, D), lambda b: (b, 0, 0)),
        _const_spec((D, D)),
        _const_spec((1, D)),
        _const_spec((D, 2 * D)),
        _const_spec((1, 2 * D)),
        _const_spec((D, D)),
        _const_spec((1, D)),
        _const_spec((1, D)),
        _const_spec((1, D)),
    ]
    args = [x_q, x_kv, p["wq"], p["bq"], p["w_kv"], p["b_kv"],
            p["wo"], p["bo"], gamma, beta]
    if has_mask:
        in_specs.append(_const_spec((Sq, Sk)))
        args.append(mask.astype(jnp.float32))

    return pl.pallas_call(
        partial(_cross_attn_kernel, num_heads=num_heads, scale=scale,
                has_mask=has_mask),
        out_shape=jax.ShapeDtypeStruct((B, Sq, D), jnp.bfloat16),
        grid=(B,),
        in_specs=in_specs,
        out_specs=pl.BlockSpec((1, Sq, D), lambda b: (b, 0, 0)),
        compiler_params=pltpu.CompilerParams(
            dimension_semantics=("parallel",)),
    )(*args)


# --------------------------------------------------------------------------
# Fused FFN block kernel: (x@w1+b1, ReLU) @ w2 + b2, residual + LayerNorm
# --------------------------------------------------------------------------

def _ffn_kernel(x_ref, w1_ref, b1_ref, w2_ref, b2_ref, g_ref, be_ref, o_ref):
    x = x_ref[...]                                    # (tm, D) bf16
    h = jnp.dot(x, w1_ref[...],
                preferred_element_type=jnp.float32) + b1_ref[...]
    h = jnp.maximum(h, 0.0).astype(jnp.bfloat16)
    y = jnp.dot(h, w2_ref[...],
                preferred_element_type=jnp.float32) + b2_ref[...]
    o_ref[...] = _residual_ln(y, x, g_ref, be_ref, o_ref.dtype)


def ffn_block(x, w1, b1, w2, b2, gamma, beta):
    B, S, D = x.shape
    F = w1.shape[1]
    M = B * S
    tm, Mp = _pick_tm(M)
    x2 = x.reshape(M, D)
    if Mp != M:
        x2 = jnp.pad(x2, ((0, Mp - M), (0, 0)))

    out = pl.pallas_call(
        _ffn_kernel,
        out_shape=jax.ShapeDtypeStruct((Mp, D), jnp.bfloat16),
        grid=(Mp // tm,),
        in_specs=[
            pl.BlockSpec((tm, D), lambda i: (i, 0)),
            _const_spec((D, F)),
            _const_spec((1, F)),
            _const_spec((F, D)),
            _const_spec((1, D)),
            _const_spec((1, D)),
            _const_spec((1, D)),
        ],
        out_specs=pl.BlockSpec((tm, D), lambda i: (i, 0)),
        compiler_params=pltpu.CompilerParams(
            dimension_semantics=("parallel",)),
    )(x2, w1, b1, w2, b2, gamma, beta)
    if Mp != M:
        out = out[:M]
    return out.reshape(B, S, D)


# --------------------------------------------------------------------------
# Final vocab projection (single kernel, f32 output; full-dim K and N blocks)
# --------------------------------------------------------------------------

def _out_proj_kernel(x_ref, w_ref, b_ref, o_ref):
    o_ref[...] = (jnp.dot(x_ref[...], w_ref[...],
                          preferred_element_type=jnp.float32)
                  + b_ref[...]).astype(o_ref.dtype)


def output_projection(x, w, b):
    B, S, D = x.shape
    V = w.shape[1]
    M = B * S
    tm, Mp = _pick_tm(M)
    x2 = x.reshape(M, D)
    if Mp != M:
        x2 = jnp.pad(x2, ((0, Mp - M), (0, 0)))

    out = pl.pallas_call(
        _out_proj_kernel,
        out_shape=jax.ShapeDtypeStruct((Mp, V), jnp.float32),
        grid=(Mp // tm,),
        in_specs=[
            pl.BlockSpec((tm, D), lambda i: (i, 0)),
            _const_spec((D, V)),
            _const_spec((1, V)),
        ],
        out_specs=pl.BlockSpec((tm, V), lambda i: (i, 0)),
        compiler_params=pltpu.CompilerParams(
            dimension_semantics=("parallel",)),
    )(x2, w, b)
    if Mp != M:
        out = out[:M]
    return out.reshape(B, S, V)


# --------------------------------------------------------------------------
# Transformer glue (embedding gather + PE kept in XLA)
# --------------------------------------------------------------------------

def sinusoidal_pe(max_len, d_model):
    pos = jnp.arange(max_len, dtype=jnp.float32)[:, None]
    div = jnp.exp(jnp.arange(0, d_model, 2, dtype=jnp.float32)
                  * (-math.log(10000.0) / d_model))
    pe = jnp.zeros((max_len, d_model), jnp.float32)
    pe = pe.at[:, 0::2].set(jnp.sin(pos * div))
    pe = pe.at[:, 1::2].set(jnp.cos(pos * div))
    return pe


def embed(tok, table, pe, d_model):
    # Embedding gather + scale + PE kept in XLA (no clean Pallas gain);
    # activations carried as bf16 through the Pallas kernels.
    S = tok.shape[1]
    x = table[tok] * math.sqrt(d_model) + pe[:S][None, :, :]
    return x.astype(jnp.bfloat16)


def encoder_forward(tok, params, cfg):
    x = embed(tok, params["enc_emb"], params["pe"], cfg["d_model"])
    # TODO(synk): dropout is identity in eval mode; not implemented.
    for lp in params["enc_layers"]:
        x = self_attn_block(x, None, lp["self_attn"],
                            lp["ln1_g"], lp["ln1_b"], cfg["num_heads"])
        x = ffn_block(x, lp["ffn_w1"], lp["ffn_b1"], lp["ffn_w2"], lp["ffn_b2"],
                      lp["ln2_g"], lp["ln2_b"])
    return x


def decoder_forward(tok, enc_out, tgt_mask, src_mask, params, cfg):
    y = embed(tok, params["dec_emb"], params["pe"], cfg["d_model"])
    for lp in params["dec_layers"]:
        y = self_attn_block(y, tgt_mask, lp["self_attn"],
                            lp["ln1_g"], lp["ln1_b"], cfg["num_heads"])
        y = cross_attn_block(y, enc_out, src_mask, lp["cross_attn"],
                             lp["ln2_g"], lp["ln2_b"], cfg["num_heads"])
        y = ffn_block(y, lp["ffn_w1"], lp["ffn_b1"], lp["ffn_w2"], lp["ffn_b2"],
                      lp["ln3_g"], lp["ln3_b"])
    return y


def transformer_forward(input_seq, target_seq, target_mask, params, cfg,
                        src_mask=None):
    enc_out = encoder_forward(input_seq, params, cfg)
    dec_out = decoder_forward(target_seq, enc_out, target_mask, src_mask,
                              params, cfg)
    return output_projection(dec_out, params["out_w"], params["out_b"])


# --------------------------------------------------------------------------
# Deterministic parameter construction: matmul weights stored bf16, all
# biases / LN params stored as (1, N) f32 — nothing is padded or cast at
# forward time.
# --------------------------------------------------------------------------

def init_params(cfg, seed=1234):
    key = jax.random.PRNGKey(seed)
    D, F = cfg["d_model"], cfg["d_ffn"]

    def nxt():
        nonlocal key
        key, sub = jax.random.split(key)
        return sub

    def w(shape, scale=0.02, dtype=jnp.bfloat16):
        return (jax.random.normal(nxt(), shape, jnp.float32) * scale).astype(dtype)

    def zrow(n):
        return jnp.zeros((1, n), jnp.float32)

    def self_attn_params():
        return {"w_qkv": w((D, 3 * D)), "b_qkv": zrow(3 * D),
                "wo": w((D, D)), "bo": zrow(D)}

    def cross_attn_params():
        return {"wq": w((D, D)), "bq": zrow(D),
                "w_kv": w((D, 2 * D)), "b_kv": zrow(2 * D),
                "wo": w((D, D)), "bo": zrow(D)}

    def ffn_ln(layer, n_ln):
        layer["ffn_w1"] = w((D, F)); layer["ffn_b1"] = zrow(F)
        layer["ffn_w2"] = w((F, D)); layer["ffn_b2"] = zrow(D)
        for i in range(1, n_ln + 1):
            layer[f"ln{i}_g"] = jnp.ones((1, D), jnp.float32)
            layer[f"ln{i}_b"] = jnp.zeros((1, D), jnp.float32)
        return layer

    enc_layers = [ffn_ln({"self_attn": self_attn_params()}, 2)
                  for _ in range(cfg["num_layers"])]
    dec_layers = [ffn_ln({"self_attn": self_attn_params(),
                          "cross_attn": cross_attn_params()}, 3)
                  for _ in range(cfg["num_layers"])]

    return {
        "enc_emb": w((cfg["input_vocab_size"], D), scale=1.0, dtype=jnp.float32),
        "dec_emb": w((cfg["output_vocab_size"], D), scale=1.0, dtype=jnp.float32),
        "pe": sinusoidal_pe(cfg["max_seq_length"], D),
        "enc_layers": enc_layers,
        "dec_layers": dec_layers,
        "out_w": w((D, cfg["output_vocab_size"])),
        "out_b": zrow(cfg["output_vocab_size"]),
    }


# --------------------------------------------------------------------------

if __name__ == "__main__":
    cfg = dict(
        num_layers=2,
        d_model=32,
        num_heads=4,
        d_ffn=64,
        input_vocab_size=50,
        output_vocab_size=60,
        max_seq_length=16,
    )
    B, S_in, S_tgt = 2, 8, 8

    key = jax.random.PRNGKey(0)
    k_in, k_tgt = jax.random.split(key)
    input_seq = jax.random.randint(k_in, (B, S_in), 0,
                                   cfg["input_vocab_size"], jnp.int32)
    target_seq = jax.random.randint(k_tgt, (B, S_tgt), 0,
                                    cfg["output_vocab_size"], jnp.int32)

    # causal additive target mask (0 where visible, -1e9 where masked)
    causal = jnp.tril(jnp.ones((S_tgt, S_tgt), jnp.float32))
    target_mask = jnp.where(causal > 0, 0.0, -1e9).astype(jnp.float32)

    params = init_params(cfg)

    fwd = jax.jit(partial(transformer_forward, cfg=cfg))
    out = fwd(input_seq, target_seq, target_mask, params)
    out = jax.block_until_ready(out)
    assert out.shape == (B, S_tgt, cfg["output_vocab_size"])
    assert bool(jnp.all(jnp.isfinite(out)))
    print("KERNEL_OK")
</pallas_src>

<mosaic_0001>
module attributes {stable_mosaic.version = 11 : i64} {
  func.func @_self_attn_kernel(%arg0: i32, %arg1: memref<1x8x32xbf16, #tpu.memory_space<vmem>>, %arg2: memref<32x96xbf16, #tpu.memory_space<vmem>>, %arg3: memref<1x96xf32, #tpu.memory_space<vmem>>, %arg4: memref<32x32xbf16, #tpu.memory_space<vmem>>, %arg5: memref<1x32xf32, #tpu.memory_space<vmem>>, %arg6: memref<1x32xf32, #tpu.memory_space<vmem>>, %arg7: memref<1x32xf32, #tpu.memory_space<vmem>>, %arg8: memref<1x8x32xbf16, #tpu.memory_space<vmem>>) attributes {dimension_semantics = [#tpu.dimension_semantics<parallel>], iteration_bounds = array<i64: 2>, scalar_prefetch = 0 : i64, scratch_operands = 0 : i64, tpu.core_type = #tpu.core_type<tc>, window_params = [{transform_indices = @transform_0, window_bounds = array<i64: 1, 8, 32>}, {pipeline_mode = #tpu.pipeline_mode<synchronous>, transform_indices = @transform_1, window_bounds = array<i64: 32, 96>}, {pipeline_mode = #tpu.pipeline_mode<synchronous>, transform_indices = @transform_2, window_bounds = array<i64: 1, 96>}, {pipeline_mode = #tpu.pipeline_mode<synchronous>, transform_indices = @transform_3, window_bounds = array<i64: 32, 32>}, {pipeline_mode = #tpu.pipeline_mode<synchronous>, transform_indices = @transform_4, window_bounds = array<i64: 1, 32>}, {pipeline_mode = #tpu.pipeline_mode<synchronous>, transform_indices = @transform_5, window_bounds = array<i64: 1, 32>}, {pipeline_mode = #tpu.pipeline_mode<synchronous>, transform_indices = @transform_6, window_bounds = array<i64: 1, 32>}, {transform_indices = @transform_7, window_bounds = array<i64: 1, 8, 32>}]} {
    %c0 = arith.constant 0 : index
    %c0_0 = arith.constant 0 : index
    %c0_1 = arith.constant 0 : index
    %0 = vector.load %arg1[%c0, %c0_0, %c0_1] : memref<1x8x32xbf16, #tpu.memory_space<vmem>>, vector<1x8x32xbf16>
    %1 = vector.shape_cast %0 : vector<1x8x32xbf16> to vector<8x32xbf16>
    %c0_2 = arith.constant 0 : index
    %c0_3 = arith.constant 0 : index
    %2 = vector.load %arg2[%c0_2, %c0_3] : memref<32x96xbf16, #tpu.memory_space<vmem>>, vector<32x96xbf16>
    %cst = arith.constant dense<0.000000e+00> : vector<8x96xf32>
    %3 = tpu.matmul %1, %2, %cst {dimension_numbers = #tpu.dot_dimension_numbers<[1], [0], [0], [1], [0, 0, 1, 1], [], []>} : vector<8x32xbf16>, vector<32x96xbf16>, vector<8x96xf32> -> vector<8x96xf32>
    %c0_4 = arith.constant 0 : index
    %c0_5 = arith.constant 0 : index
    %4 = vector.load %arg3[%c0_4, %c0_5] : memref<1x96xf32, #tpu.memory_space<vmem>>, vector<1x96xf32>
    %5 = vector.broadcast %4 : vector<1x96xf32> to vector<8x96xf32>
    %6 = arith.addf %3, %5 : vector<8x96xf32>
    %7 = vector.extract_strided_slice %6 {offsets = [0, 0], sizes = [8, 32], strides = [1, 1]} : vector<8x96xf32> to vector<8x32xf32>
    %cst_6 = arith.constant 0.353553385 : f32
    %8 = vector.broadcast %cst_6 : f32 to vector<8x32xf32>
    %9 = arith.mulf %7, %8 : vector<8x32xf32>
    %10 = arith.truncf %9 : vector<8x32xf32> to vector<8x32xbf16>
    %11 = vector.extract_strided_slice %6 {offsets = [0, 32], sizes = [8, 32], strides = [1, 1]} : vector<8x96xf32> to vector<8x32xf32>
    %12 = arith.truncf %11 : vector<8x32xf32> to vector<8x32xbf16>
    %13 = vector.extract_strided_slice %6 {offsets = [0, 64], sizes = [8, 32], strides = [1, 1]} : vector<8x96xf32> to vector<8x32xf32>
    %14 = arith.truncf %13 : vector<8x32xf32> to vector<8x32xbf16>
    %cst_7 = arith.constant 0.000000e+00 : f32
    %15 = vector.broadcast %cst_7 : f32 to vector<8x32xf32>
    %16 = vector.extract_strided_slice %10 {offsets = [0, 0], sizes = [8, 8], strides = [1, 1]} : vector<8x32xbf16> to vector<8x8xbf16>
    %17 = vector.extract_strided_slice %12 {offsets = [0, 0], sizes = [8, 8], strides = [1, 1]} : vector<8x32xbf16> to vector<8x8xbf16>
    %cst_8 = arith.constant dense<0.000000e+00> : vector<8x8xf32>
    %18 = tpu.matmul %16, %17, %cst_8 {dimension_numbers = #tpu.dot_dimension_numbers<[1], [1], [0], [0], [0, 0, 1, 0], [], []>} : vector<8x8xbf16>, vector<8x8xbf16>, vector<8x8xf32> -> vector<8x8xf32>
    %cst_9 = arith.constant dense<0xFF800000> : vector<8xf32>
    %19 = vector.multi_reduction <maximumf>, %18, %cst_9 [1] : vector<8x8xf32> to vector<8xf32>
    %20 = vector.shape_cast %19 : vector<8xf32> to vector<8x1xf32>
    %21 = vector.broadcast %20 : vector<8x1xf32> to vector<8x8xf32>
    %22 = arith.subf %18, %21 : vector<8x8xf32>
    %23 = math.exp %22 : vector<8x8xf32>
    %cst_10 = arith.constant dense<0.000000e+00> : vector<8xf32>
    %24 = vector.multi_reduction <add>, %23, %cst_10 [1] : vector<8x8xf32> to vector<8xf32>
    %25 = vector.shape_cast %24 : vector<8xf32> to vector<8x1xf32>
    %26 = tpu.reciprocal %25 {approx = true} : vector<8x1xf32> -> vector<8x1xf32>
    %27 = vector.broadcast %26 : vector<8x1xf32> to vector<8x8xf32>
    %28 = arith.mulf %23, %27 : vector<8x8xf32>
    %29 = arith.truncf %28 : vector<8x8xf32> to vector<8x8xbf16>
    %30 = vector.extract_strided_slice %14 {offsets = [0, 0], sizes = [8, 8], strides = [1, 1]} : vector<8x32xbf16> to vector<8x8xbf16>
    %cst_11 = arith.constant dense<0.000000e+00> : vector<8x8xf32>
    %31 = tpu.matmul %29, %30, %cst_11 {dimension_numbers = #tpu.dot_dimension_numbers<[1], [0], [0], [1], [0, 0, 1, 1], [], []>} : vector<8x8xbf16>, vector<8x8xbf16>, vector<8x8xf32> -> vector<8x8xf32>
    %32 = arith.truncf %31 : vector<8x8xf32> to vector<8x8xbf16>
    %c0_12 = arith.constant 0 : index
    %c0_13 = arith.constant 0 : index
    %33 = vector.load %arg4[%c0_12, %c0_13] : memref<32x32xbf16, #tpu.memory_space<vmem>>, vector<8x32xbf16>
    %cst_14 = arith.constant dense<0.000000e+00> : vector<8x32xf32>
    %34 = tpu.matmul %32, %33, %cst_14 {dimension_numbers = #tpu.dot_dimension_numbers<[1], [0], [0], [1], [0, 0, 1, 1], [], []>} : vector<8x8xbf16>, vector<8x32xbf16>, vector<8x32xf32> -> vector<8x32xf32>
    %35 = arith.addf %15, %34 : vector<8x32xf32>
    %36 = vector.extract_strided_slice %10 {offsets = [0, 8], sizes = [8, 8], strides = [1, 1]} : vector<8x32xbf16> to vector<8x8xbf16>
    %37 = vector.extract_strided_slice %12 {offsets = [0, 8], sizes = [8, 8], strides = [1, 1]} : vector<8x32xbf16> to vector<8x8xbf16>
    %cst_15 = arith.constant dense<0.000000e+00> : vector<8x8xf32>
    %38 = tpu.matmul %36, %37, %cst_15 {dimension_numbers = #tpu.dot_dimension_numbers<[1], [1], [0], [0], [0, 0, 1, 0], [], []>} : vector<8x8xbf16>, vector<8x8xbf16>, vector<8x8xf32> -> vector<8x8xf32>
    %cst_16 = arith.constant dense<0xFF800000> : vector<8xf32>
    %39 = vector.multi_reduction <maximumf>, %38, %cst_16 [1] : vector<8x8xf32> to vector<8xf32>
    %40 = vector.shape_cast %39 : vector<8xf32> to vector<8x1xf32>
    %41 = vector.broadcast %40 : vector<8x1xf32> to vector<8x8xf32>
    %42 = arith.subf %38, %41 : vector<8x8xf32>
    %43 = math.exp %42 : vector<8x8xf32>
    %cst_17 = arith.constant dense<0.000000e+00> : vector<8xf32>
    %44 = vector.multi_reduction <add>, %43, %cst_17 [1] : vector<8x8xf32> to vector<8xf32>
    %45 = vector.shape_cast %44 : vector<8xf32> to vector<8x1xf32>
    %46 = tpu.reciprocal %45 {approx = true} : vector<8x1xf32> -> vector<8x1xf32>
    %47 = vector.broadcast %46 : vector<8x1xf32> to vector<8x8xf32>
    %48 = arith.mulf %43, %47 : vector<8x8xf32>
    %49 = arith.truncf %48 : vector<8x8xf32> to vector<8x8xbf16>
    %50 = vector.extract_strided_slice %14 {offsets = [0, 8], sizes = [8, 8], strides = [1, 1]} : vector<8x32xbf16> to vector<8x8xbf16>
    %cst_18 = arith.constant dense<0.000000e+00> : vector<8x8xf32>
    %51 = tpu.matmul %49, %50, %cst_18 {dimension_numbers = #tpu.dot_dimension_numbers<[1], [0], [0], [1], [0, 0, 1, 1], [], []>} : vector<8x8xbf16>, vector<8x8xbf16>, vector<8x8xf32> -> vector<8x8xf32>
    %52 = arith.truncf %51 : vector<8x8xf32> to vector<8x8xbf16>
    %c8 = arith.constant 8 : index
    %c0_19 = arith.constant 0 : index
    %53 = vector.load %arg4[%c8, %c0_19] : memref<32x32xbf16, #tpu.memory_space<vmem>>, vector<8x32xbf16>
    %cst_20 = arith.constant dense<0.000000e+00> : vector<8x32xf32>
    %54 = tpu.matmul %52, %53, %cst_20 {dimension_numbers = #tpu.dot_dimension_numbers<[1], [0], [0], [1], [0, 0, 1, 1], [], []>} : vector<8x8xbf16>, vector<8x32xbf16>, vector<8x32xf32> -> vector<8x32xf32>
    %55 = arith.addf %35, %54 : vector<8x32xf32>
    %56 = vector.extract_strided_slice %10 {offsets = [0, 16], sizes = [8, 8], strides = [1, 1]} : vector<8x32xbf16> to vector<8x8xbf16>
    %57 = vector.extract_strided_slice %12 {offsets = [0, 16], sizes = [8, 8], strides = [1, 1]} : vector<8x32xbf16> to vector<8x8xbf16>
    %cst_21 = arith.constant dense<0.000000e+00> : vector<8x8xf32>
    %58 = tpu.matmul %56, %57, %cst_21 {dimension_numbers = #tpu.dot_dimension_numbers<[1], [1], [0], [0], [0, 0, 1, 0], [], []>} : vector<8x8xbf16>, vector<8x8xbf16>, vector<8x8xf32> -> vector<8x8xf32>
    %cst_22 = arith.constant dense<0xFF800000> : vector<8xf32>
    %59 = vector.multi_reduction <maximumf>, %58, %cst_22 [1] : vector<8x8xf32> to vector<8xf32>
    %60 = vector.shape_cast %59 : vector<8xf32> to vector<8x1xf32>
    %61 = vector.broadcast %60 : vector<8x1xf32> to vector<8x8xf32>
    %62 = arith.subf %58, %61 : vector<8x8xf32>
    %63 = math.exp %62 : vector<8x8xf32>
    %cst_23 = arith.constant dense<0.000000e+00> : vector<8xf32>
    %64 = vector.multi_reduction <add>, %63, %cst_23 [1] : vector<8x8xf32> to vector<8xf32>
    %65 = vector.shape_cast %64 : vector<8xf32> to vector<8x1xf32>
    %66 = tpu.reciprocal %65 {approx = true} : vector<8x1xf32> -> vector<8x1xf32>
    %67 = vector.broadcast %66 : vector<8x1xf32> to vector<8x8xf32>
    %68 = arith.mulf %63, %67 : vector<8x8xf32>
    %69 = arith.truncf %68 : vector<8x8xf32> to vector<8x8xbf16>
    %70 = vector.extract_strided_slice %14 {offsets = [0, 16], sizes = [8, 8], strides = [1, 1]} : vector<8x32xbf16> to vector<8x8xbf16>
    %cst_24 = arith.constant dense<0.000000e+00> : vector<8x8xf32>
    %71 = tpu.matmul %69, %70, %cst_24 {dimension_numbers = #tpu.dot_dimension_numbers<[1], [0], [0], [1], [0, 0, 1, 1], [], []>} : vector<8x8xbf16>, vector<8x8xbf16>, vector<8x8xf32> -> vector<8x8xf32>
    %72 = arith.truncf %71 : vector<8x8xf32> to vector<8x8xbf16>
    %c16 = arith.constant 16 : index
    %c0_25 = arith.constant 0 : index
    %73 = vector.load %arg4[%c16, %c0_25] : memref<32x32xbf16, #tpu.memory_space<vmem>>, vector<8x32xbf16>
    %cst_26 = arith.constant dense<0.000000e+00> : vector<8x32xf32>
    %74 = tpu.matmul %72, %73, %cst_26 {dimension_numbers = #tpu.dot_dimension_numbers<[1], [0], [0], [1], [0, 0, 1, 1], [], []>} : vector<8x8xbf16>, vector<8x32xbf16>, vector<8x32xf32> -> vector<8x32xf32>
    %75 = arith.addf %55, %74 : vector<8x32xf32>
    %76 = vector.extract_strided_slice %10 {offsets = [0, 24], sizes = [8, 8], strides = [1, 1]} : vector<8x32xbf16> to vector<8x8xbf16>
    %77 = vector.extract_strided_slice %12 {offsets = [0, 24], sizes = [8, 8], strides = [1, 1]} : vector<8x32xbf16> to vector<8x8xbf16>
    %cst_27 = arith.constant dense<0.000000e+00> : vector<8x8xf32>
    %78 = tpu.matmul %76, %77, %cst_27 {dimension_numbers = #tpu.dot_dimension_numbers<[1], [1], [0], [0], [0, 0, 1, 0], [], []>} : vector<8x8xbf16>, vector<8x8xbf16>, vector<8x8xf32> -> vector<8x8xf32>
    %cst_28 = arith.constant dense<0xFF800000> : vector<8xf32>
    %79 = vector.multi_reduction <maximumf>, %78, %cst_28 [1] : vector<8x8xf32> to vector<8xf32>
    %80 = vector.shape_cast %79 : vector<8xf32> to vector<8x1xf32>
    %81 = vector.broadcast %80 : vector<8x1xf32> to vector<8x8xf32>
    %82 = arith.subf %78, %81 : vector<8x8xf32>
    %83 = math.exp %82 : vector<8x8xf32>
    %cst_29 = arith.constant dense<0.000000e+00> : vector<8xf32>
    %84 = vector.multi_reduction <add>, %83, %cst_29 [1] : vector<8x8xf32> to vector<8xf32>
    %85 = vector.shape_cast %84 : vector<8xf32> to vector<8x1xf32>
    %86 = tpu.reciprocal %85 {approx = true} : vector<8x1xf32> -> vector<8x1xf32>
    %87 = vector.broadcast %86 : vector<8x1xf32> to vector<8x8xf32>
    %88 = arith.mulf %83, %87 : vector<8x8xf32>
    %89 = arith.truncf %88 : vector<8x8xf32> to vector<8x8xbf16>
    %90 = vector.extract_strided_slice %14 {offsets = [0, 24], sizes = [8, 8], strides = [1, 1]} : vector<8x32xbf16> to vector<8x8xbf16>
    %cst_30 = arith.constant dense<0.000000e+00> : vector<8x8xf32>
    %91 = tpu.matmul %89, %90, %cst_30 {dimension_numbers = #tpu.dot_dimension_numbers<[1], [0], [0], [1], [0, 0, 1, 1], [], []>} : vector<8x8xbf16>, vector<8x8xbf16>, vector<8x8xf32> -> vector<8x8xf32>
    %92 = arith.truncf %91 : vector<8x8xf32> to vector<8x8xbf16>
    %c24 = arith.constant 24 : index
    %c0_31 = arith.constant 0 : index
    %93 = vector.load %arg4[%c24, %c0_31] : memref<32x32xbf16, #tpu.memory_space<vmem>>, vector<8x32xbf16>
    %cst_32 = arith.constant dense<0.000000e+00> : vector<8x32xf32>
    %94 = tpu.matmul %92, %93, %cst_32 {dimension_numbers = #tpu.dot_dimension_numbers<[1], [0], [0], [1], [0, 0, 1, 1], [], []>} : vector<8x8xbf16>, vector<8x32xbf16>, vector<8x32xf32> -> vector<8x32xf32>
    %95 = arith.addf %75, %94 : vector<8x32xf32>
    %c0_33 = arith.constant 0 : index
    %c0_34 = arith.constant 0 : index
    %96 = vector.load %arg5[%c0_33, %c0_34] : memref<1x32xf32, #tpu.memory_space<vmem>>, vector<1x32xf32>
    %97 = vector.broadcast %96 : vector<1x32xf32> to vector<8x32xf32>
    %98 = arith.addf %95, %97 : vector<8x32xf32>
    %99 = arith.extf %1 : vector<8x32xbf16> to vector<8x32xf32>
    %100 = arith.addf %98, %99 : vector<8x32xf32>
    %cst_35 = arith.constant dense<0.000000e+00> : vector<8xf32>
    %101 = vector.multi_reduction <add>, %100, %cst_35 [1] : vector<8x32xf32> to vector<8xf32>
    %102 = vector.shape_cast %101 : vector<8xf32> to vector<8x1xf32>
    %cst_36 = arith.constant 3.200000e+01 : f32
    %103 = vector.broadcast %cst_36 : f32 to vector<8x1xf32>
    %104 = arith.divf %102, %103 : vector<8x1xf32>
    %105 = vector.broadcast %104 : vector<8x1xf32> to vector<8x32xf32>
    %106 = arith.subf %100, %105 : vector<8x32xf32>
    %107 = arith.mulf %106, %106 : vector<8x32xf32>
    %cst_37 = arith.constant dense<0.000000e+00> : vector<8xf32>
    %108 = vector.multi_reduction <add>, %107, %cst_37 [1] : vector<8x32xf32> to vector<8xf32>
    %109 = vector.shape_cast %108 : vector<8xf32> to vector<8x1xf32>
    %cst_38 = arith.constant 3.200000e+01 : f32
    %110 = vector.broadcast %cst_38 : f32 to vector<8x1xf32>
    %111 = arith.divf %109, %110 : vector<8x1xf32>
    %cst_39 = arith.constant 9.99999974E-6 : f32
    %112 = vector.broadcast %cst_39 : f32 to vector<8x1xf32>
    %113 = arith.addf %111, %112 : vector<8x1xf32>
    %114 = math.rsqrt %113 : vector<8x1xf32>
    %115 = vector.broadcast %104 : vector<8x1xf32> to vector<8x32xf32>
    %116 = arith.subf %100, %115 : vector<8x32xf32>
    %117 = vector.broadcast %114 : vector<8x1xf32> to vector<8x32xf32>
    %118 = arith.mulf %116, %117 : vector<8x32xf32>
    %c0_40 = arith.constant 0 : index
    %c0_41 = arith.constant 0 : index
    %119 = vector.load %arg6[%c0_40, %c0_41] : memref<1x32xf32, #tpu.memory_space<vmem>>, vector<1x32xf32>
    %120 = vector.broadcast %119 : vector<1x32xf32> to vector<8x32xf32>
    %121 = arith.mulf %118, %120 : vector<8x32xf32>
    %c0_42 = arith.constant 0 : index
    %c0_43 = arith.constant 0 : index
    %122 = vector.load %arg7[%c0_42, %c0_43] : memref<1x32xf32, #tpu.memory_space<vmem>>, vector<1x32xf32>
    %123 = vector.broadcast %122 : vector<1x32xf32> to vector<8x32xf32>
    %124 = arith.addf %121, %123 : vector<8x32xf32>
    %125 = arith.truncf %124 : vector<8x32xf32> to vector<8x32xbf16>
    %c0_44 = arith.constant 0 : index
    %c0_45 = arith.constant 0 : index
    %c0_46 = arith.constant 0 : index
    %126 = vector.load %arg8[%c0_44, %c0_45, %c0_46] : memref<1x8x32xbf16, #tpu.memory_space<vmem>>, vector<1x8x32xbf16>
    %127 = vector.shape_cast %126 : vector<1x8x32xbf16> to vector<8x32xbf16>
    %128 = vector.shape_cast %125 : vector<8x32xbf16> to vector<1x8x32xbf16>
    tpu.vector_store %arg8[%c0_44, %c0_45, %c0_46], %128 {strides = array<i32>} : memref<1x8x32xbf16, #tpu.memory_space<vmem>>, vector<1x8x32xbf16>,
    return
  }
  func.func @transform_0(%arg0: i32) -> (i32, i32, i32) {
    %c0_i32 = arith.constant 0 : i32
    %c0_i32_0 = arith.constant 0 : i32
    %c0_i32_1 = arith.constant 0 : i32
    return %arg0, %c0_i32, %c0_i32_0 : i32, i32, i32
  }
  func.func @transform_1(%arg0: i32) -> (i32, i32) {
    %c0_i32 = arith.constant 0 : i32
    %c0_i32_0 = arith.constant 0 : i32
    %c0_i32_1 = arith.constant 0 : i32
    return %c0_i32, %c0_i32_0 : i32, i32
  }
  func.func @transform_2(%arg0: i32) -> (i32, i32) {
    %c0_i32 = arith.constant 0 : i32
    %c0_i32_0 = arith.constant 0 : i32
    %c0_i32_1 = arith.constant 0 : i32
    return %c0_i32, %c0_i32_0 : i32, i32
  }
  func.func @transform_3(%arg0: i32) -> (i32, i32) {
    %c0_i32 = arith.constant 0 : i32
    %c0_i32_0 = arith.constant 0 : i32
    %c0_i32_1 = arith.constant 0 : i32
    return %c0_i32, %c0_i32_0 : i32, i32
  }
  func.func @transform_4(%arg0: i32) -> (i32, i32) {
    %c0_i32 = arith.constant 0 : i32
    %c0_i32_0 = arith.constant 0 : i32
    %c0_i32_1 = arith.constant 0 : i32
    return %c0_i32, %c0_i32_0 : i32, i32
  }
  func.func @transform_5(%arg0: i32) -> (i32, i32) {
    %c0_i32 = arith.constant 0 : i32
    %c0_i32_0 = arith.constant 0 : i32
    %c0_i32_1 = arith.constant 0 : i32
    return %c0_i32, %c0_i32_0 : i32, i32
  }
  func.func @transform_6(%arg0: i32) -> (i32, i32) {
    %c0_i32 = arith.constant 0 : i32
    %c0_i32_0 = arith.constant 0 : i32
    %c0_i32_1 = arith.constant 0 : i32
    return %c0_i32, %c0_i32_0 : i32, i32
  }
  func.func @transform_7(%arg0: i32) -> (i32, i32, i32) {
    %c0_i32 = arith.constant 0 : i32
    %c0_i32_0 = arith.constant 0 : i32
    %c0_i32_1 = arith.constant 0 : i32
    return %arg0, %c0_i32, %c0_i32_0 : i32, i32, i32
  }
}

module attributes {stable_mosaic.version = 11 : i64} {
  func.func @_ffn_kernel(%arg0: i32, %arg1: memref<8x32xbf16, #tpu.memory_space<vmem>>, %arg2: memref<32x64xbf16, #tpu.memory_space<vmem>>, %arg3: memref<1x64xf32, #tpu.memory_space<vmem>>, %arg4: memref<64x32xbf16, #tpu.memory_space<vmem>>, %arg5: memref<1x32xf32, #tpu.memory_space<vmem>>, %arg6: memref<1x32xf32, #tpu.memory_space<vmem>>, %arg7: memref<1x32xf32, #tpu.memory_space<vmem>>, %arg8: memref<8x32xbf16, #tpu.memory_space<vmem>>) attributes {dimension_semantics = [#tpu.dimension_semantics<parallel>], iteration_bounds = array<i64: 2>, scalar_prefetch = 0 : i64, scratch_operands = 0 : i64, tpu.core_type = #tpu.core_type<tc>, window_params = [{transform_indices = @transform_0, window_bounds = array<i64: 8, 32>}, {pipeline_mode = #tpu.pipeline_mode<synchronous>, transform_indices = @transform_1, window_bounds = array<i64: 32, 64>}, {pipeline_mode = #tpu.pipeline_mode<synchronous>, transform_indices = @transform_2, window_bounds = array<i64: 1, 64>}, {pipeline_mode = #tpu.pipeline_mode<synchronous>, transform_indices = @transform_3, window_bounds = array<i64: 64, 32>}, {pipeline_mode = #tpu.pipeline_mode<synchronous>, transform_indices = @transform_4, window_bounds = array<i64: 1, 32>}, {pipeline_mode = #tpu.pipeline_mode<synchronous>, transform_indices = @transform_5, window_bounds = array<i64: 1, 32>}, {pipeline_mode = #tpu.pipeline_mode<synchronous>, transform_indices = @transform_6, window_bounds = array<i64: 1, 32>}, {transform_indices = @transform_7, window_bounds = array<i64: 8, 32>}]} {
    %c0 = arith.constant 0 : index
    %c0_0 = arith.constant 0 : index
    %0 = vector.load %arg1[%c0, %c0_0] : memref<8x32xbf16, #tpu.memory_space<vmem>>, vector<8x32xbf16>
    %c0_1 = arith.constant 0 : index
    %c0_2 = arith.constant 0 : index
    %1 = vector.load %arg2[%c0_1, %c0_2] : memref<32x64xbf16, #tpu.memory_space<vmem>>, vector<32x64xbf16>
    %cst = arith.constant dense<0.000000e+00> : vector<8x64xf32>
    %2 = tpu.matmul %0, %1, %cst {dimension_numbers = #tpu.dot_dimension_numbers<[1], [0], [0], [1], [0, 0, 1, 1], [], []>} : vector<8x32xbf16>, vector<32x64xbf16>, vector<8x64xf32> -> vector<8x64xf32>
    %c0_3 = arith.constant 0 : index
    %c0_4 = arith.constant 0 : index
    %3 = vector.load %arg3[%c0_3, %c0_4] : memref<1x64xf32, #tpu.memory_space<vmem>>, vector<1x64xf32>
    %4 = vector.broadcast %3 : vector<1x64xf32> to vector<8x64xf32>
    %5 = arith.addf %2, %4 : vector<8x64xf32>
    %cst_5 = arith.constant 0.000000e+00 : f32
    %6 = vector.broadcast %cst_5 : f32 to vector<8x64xf32>
    %7 = arith.maximumf %5, %6 : vector<8x64xf32>
    %8 = arith.truncf %7 : vector<8x64xf32> to vector<8x64xbf16>
    %c0_6 = arith.constant 0 : index
    %c0_7 = arith.constant 0 : index
    %9 = vector.load %arg4[%c0_6, %c0_7] : memref<64x32xbf16, #tpu.memory_space<vmem>>, vector<64x32xbf16>
    %cst_8 = arith.constant dense<0.000000e+00> : vector<8x32xf32>
    %10 = tpu.matmul %8, %9, %cst_8 {dimension_numbers = #tpu.dot_dimension_numbers<[1], [0], [0], [1], [0, 0, 1, 1], [], []>} : vector<8x64xbf16>, vector<64x32xbf16>, vector<8x32xf32> -> vector<8x32xf32>
    %c0_9 = arith.constant 0 : index
    %c0_10 = arith.constant 0 : index
    %11 = vector.load %arg5[%c0_9, %c0_10] : memref<1x32xf32, #tpu.memory_space<vmem>>, vector<1x32xf32>
    %12 = vector.broadcast %11 : vector<1x32xf32> to vector<8x32xf32>
    %13 = arith.addf %10, %12 : vector<8x32xf32>
    %14 = arith.extf %0 : vector<8x32xbf16> to vector<8x32xf32>
    %15 = arith.addf %13, %14 : vector<8x32xf32>
    %cst_11 = arith.constant dense<0.000000e+00> : vector<8xf32>
    %16 = vector.multi_reduction <add>, %15, %cst_11 [1] : vector<8x32xf32> to vector<8xf32>
    %17 = vector.shape_cast %16 : vector<8xf32> to vector<8x1xf32>
    %cst_12 = arith.constant 3.200000e+01 : f32
    %18 = vector.broadcast %cst_12 : f32 to vector<8x1xf32>
    %19 = arith.divf %17, %18 : vector<8x1xf32>
    %20 = vector.broadcast %19 : vector<8x1xf32> to vector<8x32xf32>
    %21 = arith.subf %15, %20 : vector<8x32xf32>
    %22 = arith.mulf %21, %21 : vector<8x32xf32>
    %cst_13 = arith.constant dense<0.000000e+00> : vector<8xf32>
    %23 = vector.multi_reduction <add>, %22, %cst_13 [1] : vector<8x32xf32> to vector<8xf32>
    %24 = vector.shape_cast %23 : vector<8xf32> to vector<8x1xf32>
    %cst_14 = arith.constant 3.200000e+01 : f32
    %25 = vector.broadcast %cst_14 : f32 to vector<8x1xf32>
    %26 = arith.divf %24, %25 : vector<8x1xf32>
    %cst_15 = arith.constant 9.99999974E-6 : f32
    %27 = vector.broadcast %cst_15 : f32 to vector<8x1xf32>
    %28 = arith.addf %26, %27 : vector<8x1xf32>
    %29 = math.rsqrt %28 : vector<8x1xf32>
    %30 = vector.broadcast %19 : vector<8x1xf32> to vector<8x32xf32>
    %31 = arith.subf %15, %30 : vector<8x32xf32>
    %32 = vector.broadcast %29 : vector<8x1xf32> to vector<8x32xf32>
    %33 = arith.mulf %31, %32 : vector<8x32xf32>
    %c0_16 = arith.constant 0 : index
    %c0_17 = arith.constant 0 : index
    %34 = vector.load %arg6[%c0_16, %c0_17] : memref<1x32xf32, #tpu.memory_space<vmem>>, vector<1x32xf32>
    %35 = vector.broadcast %34 : vector<1x32xf32> to vector<8x32xf32>
    %36 = arith.mulf %33, %35 : vector<8x32xf32>
    %c0_18 = arith.constant 0 : index
    %c0_19 = arith.constant 0 : index
    %37 = vector.load %arg7[%c0_18, %c0_19] : memref<1x32xf32, #tpu.memory_space<vmem>>, vector<1x32xf32>
    %38 = vector.broadcast %37 : vector<1x32xf32> to vector<8x32xf32>
    %39 = arith.addf %36, %38 : vector<8x32xf32>
    %40 = arith.truncf %39 : vector<8x32xf32> to vector<8x32xbf16>
    %c0_20 = arith.constant 0 : index
    %c0_21 = arith.constant 0 : index
    %41 = vector.load %arg8[%c0_20, %c0_21] : memref<8x32xbf16, #tpu.memory_space<vmem>>, vector<8x32xbf16>
    tpu.vector_store %arg8[%c0_20, %c0_21], %40 {strides = array<i32>} : memref<8x32xbf16, #tpu.memory_space<vmem>>, vector<8x32xbf16>,
    return
  }
  func.func @transform_0(%arg0: i32) -> (i32, i32) {
    %c0_i32 = arith.constant 0 : i32
    %c0_i32_0 = arith.constant 0 : i32
    return %arg0, %c0_i32 : i32, i32
  }
  func.func @transform_1(%arg0: i32) -> (i32, i32) {
    %c0_i32 = arith.constant 0 : i32
    %c0_i32_0 = arith.constant 0 : i32
    %c0_i32_1 = arith.constant 0 : i32
    return %c0_i32, %c0_i32_0 : i32, i32
  }
  func.func @transform_2(%arg0: i32) -> (i32, i32) {
    %c0_i32 = arith.constant 0 : i32
    %c0_i32_0 = arith.constant 0 : i32
    %c0_i32_1 = arith.constant 0 : i32
    return %c0_i32, %c0_i32_0 : i32, i32
  }
  func.func @transform_3(%arg0: i32) -> (i32, i32) {
    %c0_i32 = arith.constant 0 : i32
    %c0_i32_0 = arith.constant 0 : i32
    %c0_i32_1 = arith.constant 0 : i32
    return %c0_i32, %c0_i32_0 : i32, i32
  }
  func.func @transform_4(%arg0: i32) -> (i32, i32) {
    %c0_i32 = arith.constant 0 : i32
    %c0_i32_0 = arith.constant 0 : i32
    %c0_i32_1 = arith.constant 0 : i32
    return %c0_i32, %c0_i32_0 : i32, i32
  }
  func.func @transform_5(%arg0: i32) -> (i32, i32) {
    %c0_i32 = arith.constant 0 : i32
    %c0_i32_0 = arith.constant 0 : i32
    %c0_i32_1 = arith.constant 0 : i32
    return %c0_i32, %c0_i32_0 : i32, i32
  }
  func.func @transform_6(%arg0: i32) -> (i32, i32) {
    %c0_i32 = arith.constant 0 : i32
    %c0_i32_0 = arith.constant 0 : i32
    %c0_i32_1 = arith.constant 0 : i32
    return %c0_i32, %c0_i32_0 : i32, i32
  }
  func.func @transform_7(%arg0: i32) -> (i32, i32) {
    %c0_i32 = arith.constant 0 : i32
    %c0_i32_0 = arith.constant 0 : i32
    return %arg0, %c0_i32 : i32, i32
  }
}

module attributes {stable_mosaic.version = 11 : i64} {
  func.func @_self_attn_kernel(%arg0: i32, %arg1: memref<1x8x32xbf16, #tpu.memory_space<vmem>>, %arg2: memref<32x96xbf16, #tpu.memory_space<vmem>>, %arg3: memref<1x96xf32, #tpu.memory_space<vmem>>, %arg4: memref<32x32xbf16, #tpu.memory_space<vmem>>, %arg5: memref<1x32xf32, #tpu.memory_space<vmem>>, %arg6: memref<1x32xf32, #tpu.memory_space<vmem>>, %arg7: memref<1x32xf32, #tpu.memory_space<vmem>>, %arg8: memref<8x8xf32, #tpu.memory_space<vmem>>, %arg9: memref<1x8x32xbf16, #tpu.memory_space<vmem>>) attributes {dimension_semantics = [#tpu.dimension_semantics<parallel>], iteration_bounds = array<i64: 2>, scalar_prefetch = 0 : i64, scratch_operands = 0 : i64, tpu.core_type = #tpu.core_type<tc>, window_params = [{transform_indices = @transform_0, window_bounds = array<i64: 1, 8, 32>}, {pipeline_mode = #tpu.pipeline_mode<synchronous>, transform_indices = @transform_1, window_bounds = array<i64: 32, 96>}, {pipeline_mode = #tpu.pipeline_mode<synchronous>, transform_indices = @transform_2, window_bounds = array<i64: 1, 96>}, {pipeline_mode = #tpu.pipeline_mode<synchronous>, transform_indices = @transform_3, window_bounds = array<i64: 32, 32>}, {pipeline_mode = #tpu.pipeline_mode<synchronous>, transform_indices = @transform_4, window_bounds = array<i64: 1, 32>}, {pipeline_mode = #tpu.pipeline_mode<synchronous>, transform_indices = @transform_5, window_bounds = array<i64: 1, 32>}, {pipeline_mode = #tpu.pipeline_mode<synchronous>, transform_indices = @transform_6, window_bounds = array<i64: 1, 32>}, {pipeline_mode = #tpu.pipeline_mode<synchronous>, transform_indices = @transform_7, window_bounds = array<i64: 8, 8>}, {transform_indices = @transform_8, window_bounds = array<i64: 1, 8, 32>}]} {
    %c0 = arith.constant 0 : index
    %c0_0 = arith.constant 0 : index
    %0 = vector.load %arg8[%c0, %c0_0] : memref<8x8xf32, #tpu.memory_space<vmem>>, vector<8x8xf32>
    %c0_1 = arith.constant 0 : index
    %c0_2 = arith.constant 0 : index
    %c0_3 = arith.constant 0 : index
    %1 = vector.load %arg1[%c0_1, %c0_2, %c0_3] : memref<1x8x32xbf16, #tpu.memory_space<vmem>>, vector<1x8x32xbf16>
    %2 = vector.shape_cast %1 : vector<1x8x32xbf16> to vector<8x32xbf16>
    %c0_4 = arith.constant 0 : index
    %c0_5 = arith.constant 0 : index
    %3 = vector.load %arg2[%c0_4, %c0_5] : memref<32x96xbf16, #tpu.memory_space<vmem>>, vector<32x96xbf16>
    %cst = arith.constant dense<0.000000e+00> : vector<8x96xf32>
    %4 = tpu.matmul %2, %3, %cst {dimension_numbers = #tpu.dot_dimension_numbers<[1], [0], [0], [1], [0, 0, 1, 1], [], []>} : vector<8x32xbf16>, vector<32x96xbf16>, vector<8x96xf32> -> vector<8x96xf32>
    %c0_6 = arith.constant 0 : index
    %c0_7 = arith.constant 0 : index
    %5 = vector.load %arg3[%c0_6, %c0_7] : memref<1x96xf32, #tpu.memory_space<vmem>>, vector<1x96xf32>
    %6 = vector.broadcast %5 : vector<1x96xf32> to vector<8x96xf32>
    %7 = arith.addf %4, %6 : vector<8x96xf32>
    %8 = vector.extract_strided_slice %7 {offsets = [0, 0], sizes = [8, 32], strides = [1, 1]} : vector<8x96xf32> to vector<8x32xf32>
    %cst_8 = arith.constant 0.353553385 : f32
    %9 = vector.broadcast %cst_8 : f32 to vector<8x32xf32>
    %10 = arith.mulf %8, %9 : vector<8x32xf32>
    %11 = arith.truncf %10 : vector<8x32xf32> to vector<8x32xbf16>
    %12 = vector.extract_strided_slice %7 {offsets = [0, 32], sizes = [8, 32], strides = [1, 1]} : vector<8x96xf32> to vector<8x32xf32>
    %13 = arith.truncf %12 : vector<8x32xf32> to vector<8x32xbf16>
    %14 = vector.extract_strided_slice %7 {offsets = [0, 64], sizes = [8, 32], strides = [1, 1]} : vector<8x96xf32> to vector<8x32xf32>
    %15 = arith.truncf %14 : vector<8x32xf32> to vector<8x32xbf16>
    %cst_9 = arith.constant 0.000000e+00 : f32
    %16 = vector.broadcast %cst_9 : f32 to vector<8x32xf32>
    %17 = vector.extract_strided_slice %11 {offsets = [0, 0], sizes = [8, 8], strides = [1, 1]} : vector<8x32xbf16> to vector<8x8xbf16>
    %18 = vector.extract_strided_slice %13 {offsets = [0, 0], sizes = [8, 8], strides = [1, 1]} : vector<8x32xbf16> to vector<8x8xbf16>
    %cst_10 = arith.constant dense<0.000000e+00> : vector<8x8xf32>
    %19 = tpu.matmul %17, %18, %cst_10 {dimension_numbers = #tpu.dot_dimension_numbers<[1], [1], [0], [0], [0, 0, 1, 0], [], []>} : vector<8x8xbf16>, vector<8x8xbf16>, vector<8x8xf32> -> vector<8x8xf32>
    %20 = arith.addf %19, %0 : vector<8x8xf32>
    %cst_11 = arith.constant dense<0xFF800000> : vector<8xf32>
    %21 = vector.multi_reduction <maximumf>, %20, %cst_11 [1] : vector<8x8xf32> to vector<8xf32>
    %22 = vector.shape_cast %21 : vector<8xf32> to vector<8x1xf32>
    %23 = vector.broadcast %22 : vector<8x1xf32> to vector<8x8xf32>
    %24 = arith.subf %20, %23 : vector<8x8xf32>
    %25 = math.exp %24 : vector<8x8xf32>
    %cst_12 = arith.constant dense<0.000000e+00> : vector<8xf32>
    %26 = vector.multi_reduction <add>, %25, %cst_12 [1] : vector<8x8xf32> to vector<8xf32>
    %27 = vector.shape_cast %26 : vector<8xf32> to vector<8x1xf32>
    %28 = tpu.reciprocal %27 {approx = true} : vector<8x1xf32> -> vector<8x1xf32>
    %29 = vector.broadcast %28 : vector<8x1xf32> to vector<8x8xf32>
    %30 = arith.mulf %25, %29 : vector<8x8xf32>
    %31 = arith.truncf %30 : vector<8x8xf32> to vector<8x8xbf16>
    %32 = vector.extract_strided_slice %15 {offsets = [0, 0], sizes = [8, 8], strides = [1, 1]} : vector<8x32xbf16> to vector<8x8xbf16>
    %cst_13 = arith.constant dense<0.000000e+00> : vector<8x8xf32>
    %33 = tpu.matmul %31, %32, %cst_13 {dimension_numbers = #tpu.dot_dimension_numbers<[1], [0], [0], [1], [0, 0, 1, 1], [], []>} : vector<8x8xbf16>, vector<8x8xbf16>, vector<8x8xf32> -> vector<8x8xf32>
    %34 = arith.truncf %33 : vector<8x8xf32> to vector<8x8xbf16>
    %c0_14 = arith.constant 0 : index
    %c0_15 = arith.constant 0 : index
    %35 = vector.load %arg4[%c0_14, %c0_15] : memref<32x32xbf16, #tpu.memory_space<vmem>>, vector<8x32xbf16>
    %cst_16 = arith.constant dense<0.000000e+00> : vector<8x32xf32>
    %36 = tpu.matmul %34, %35, %cst_16 {dimension_numbers = #tpu.dot_dimension_numbers<[1], [0], [0], [1], [0, 0, 1, 1], [], []>} : vector<8x8xbf16>, vector<8x32xbf16>, vector<8x32xf32> -> vector<8x32xf32>
    %37 = arith.addf %16, %36 : vector<8x32xf32>
    %38 = vector.extract_strided_slice %11 {offsets = [0, 8], sizes = [8, 8], strides = [1, 1]} : vector<8x32xbf16> to vector<8x8xbf16>
    %39 = vector.extract_strided_slice %13 {offsets = [0, 8], sizes = [8, 8], strides = [1, 1]} : vector<8x32xbf16> to vector<8x8xbf16>
    %cst_17 = arith.constant dense<0.000000e+00> : vector<8x8xf32>
    %40 = tpu.matmul %38, %39, %cst_17 {dimension_numbers = #tpu.dot_dimension_numbers<[1], [1], [0], [0], [0, 0, 1, 0], [], []>} : vector<8x8xbf16>, vector<8x8xbf16>, vector<8x8xf32> -> vector<8x8xf32>
    %41 = arith.addf %40, %0 : vector<8x8xf32>
    %cst_18 = arith.constant dense<0xFF800000> : vector<8xf32>
    %42 = vector.multi_reduction <maximumf>, %41, %cst_18 [1] : vector<8x8xf32> to vector<8xf32>
    %43 = vector.shape_cast %42 : vector<8xf32> to vector<8x1xf32>
    %44 = vector.broadcast %43 : vector<8x1xf32> to vector<8x8xf32>
    %45 = arith.subf %41, %44 : vector<8x8xf32>
    %46 = math.exp %45 : vector<8x8xf32>
    %cst_19 = arith.constant dense<0.000000e+00> : vector<8xf32>
    %47 = vector.multi_reduction <add>, %46, %cst_19 [1] : vector<8x8xf32> to vector<8xf32>
    %48 = vector.shape_cast %47 : vector<8xf32> to vector<8x1xf32>
    %49 = tpu.reciprocal %48 {approx = true} : vector<8x1xf32> -> vector<8x1xf32>
    %50 = vector.broadcast %49 : vector<8x1xf32> to vector<8x8xf32>
    %51 = arith.mulf %46, %50 : vector<8x8xf32>
    %52 = arith.truncf %51 : vector<8x8xf32> to vector<8x8xbf16>
    %53 = vector.extract_strided_slice %15 {offsets = [0, 8], sizes = [8, 8], strides = [1, 1]} : vector<8x32xbf16> to vector<8x8xbf16>
    %cst_20 = arith.constant dense<0.000000e+00> : vector<8x8xf32>
    %54 = tpu.matmul %52, %53, %cst_20 {dimension_numbers = #tpu.dot_dimension_numbers<[1], [0], [0], [1], [0, 0, 1, 1], [], []>} : vector<8x8xbf16>, vector<8x8xbf16>, vector<8x8xf32> -> vector<8x8xf32>
    %55 = arith.truncf %54 : vector<8x8xf32> to vector<8x8xbf16>
    %c8 = arith.constant 8 : index
    %c0_21 = arith.constant 0 : index
    %56 = vector.load %arg4[%c8, %c0_21] : memref<32x32xbf16, #tpu.memory_space<vmem>>, vector<8x32xbf16>
    %cst_22 = arith.constant dense<0.000000e+00> : vector<8x32xf32>
    %57 = tpu.matmul %55, %56, %cst_22 {dimension_numbers = #tpu.dot_dimension_numbers<[1], [0], [0], [1], [0, 0, 1, 1], [], []>} : vector<8x8xbf16>, vector<8x32xbf16>, vector<8x32xf32> -> vector<8x32xf32>
    %58 = arith.addf %37, %57 : vector<8x32xf32>
    %59 = vector.extract_strided_slice %11 {offsets = [0, 16], sizes = [8, 8], strides = [1, 1]} : vector<8x32xbf16> to vector<8x8xbf16>
    %60 = vector.extract_strided_slice %13 {offsets = [0, 16], sizes = [8, 8], strides = [1, 1]} : vector<8x32xbf16> to vector<8x8xbf16>
    %cst_23 = arith.constant dense<0.000000e+00> : vector<8x8xf32>
    %61 = tpu.matmul %59, %60, %cst_23 {dimension_numbers = #tpu.dot_dimension_numbers<[1], [1], [0], [0], [0, 0, 1, 0], [], []>} : vector<8x8xbf16>, vector<8x8xbf16>, vector<8x8xf32> -> vector<8x8xf32>
    %62 = arith.addf %61, %0 : vector<8x8xf32>
    %cst_24 = arith.constant dense<0xFF800000> : vector<8xf32>
    %63 = vector.multi_reduction <maximumf>, %62, %cst_24 [1] : vector<8x8xf32> to vector<8xf32>
    %64 = vector.shape_cast %63 : vector<8xf32> to vector<8x1xf32>
    %65 = vector.broadcast %64 : vector<8x1xf32> to vector<8x8xf32>
    %66 = arith.subf %62, %65 : vector<8x8xf32>
    %67 = math.exp %66 : vector<8x8xf32>
    %cst_25 = arith.constant dense<0.000000e+00> : vector<8xf32>
    %68 = vector.multi_reduction <add>, %67, %cst_25 [1] : vector<8x8xf32> to vector<8xf32>
    %69 = vector.shape_cast %68 : vector<8xf32> to vector<8x1xf32>
    %70 = tpu.reciprocal %69 {approx = true} : vector<8x1xf32> -> vector<8x1xf32>
    %71 = vector.broadcast %70 : vector<8x1xf32> to vector<8x8xf32>
    %72 = arith.mulf %67, %71 : vector<8x8xf32>
    %73 = arith.truncf %72 : vector<8x8xf32> to vector<8x8xbf16>
    %74 = vector.extract_strided_slice %15 {offsets = [0, 16], sizes = [8, 8], strides = [1, 1]} : vector<8x32xbf16> to vector<8x8xbf16>
    %cst_26 = arith.constant dense<0.000000e+00> : vector<8x8xf32>
    %75 = tpu.matmul %73, %74, %cst_26 {dimension_numbers = #tpu.dot_dimension_numbers<[1], [0], [0], [1], [0, 0, 1, 1], [], []>} : vector<8x8xbf16>, vector<8x8xbf16>, vector<8x8xf32> -> vector<8x8xf32>
    %76 = arith.truncf %75 : vector<8x8xf32> to vector<8x8xbf16>
    %c16 = arith.constant 16 : index
    %c0_27 = arith.constant 0 : index
    %77 = vector.load %arg4[%c16, %c0_27] : memref<32x32xbf16, #tpu.memory_space<vmem>>, vector<8x32xbf16>
    %cst_28 = arith.constant dense<0.000000e+00> : vector<8x32xf32>
    %78 = tpu.matmul %76, %77, %cst_28 {dimension_numbers = #tpu.dot_dimension_numbers<[1], [0], [0], [1], [0, 0, 1, 1], [], []>} : vector<8x8xbf16>, vector<8x32xbf16>, vector<8x32xf32> -> vector<8x32xf32>
    %79 = arith.addf %58, %78 : vector<8x32xf32>
    %80 = vector.extract_strided_slice %11 {offsets = [0, 24], sizes = [8, 8], strides = [1, 1]} : vector<8x32xbf16> to vector<8x8xbf16>
    %81 = vector.extract_strided_slice %13 {offsets = [0, 24], sizes = [8, 8], strides = [1, 1]} : vector<8x32xbf16> to vector<8x8xbf16>
    %cst_29 = arith.constant dense<0.000000e+00> : vector<8x8xf32>
    %82 = tpu.matmul %80, %81, %cst_29 {dimension_numbers = #tpu.dot_dimension_numbers<[1], [1], [0], [0], [0, 0, 1, 0], [], []>} : vector<8x8xbf16>, vector<8x8xbf16>, vector<8x8xf32> -> vector<8x8xf32>
    %83 = arith.addf %82, %0 : vector<8x8xf32>
    %cst_30 = arith.constant dense<0xFF800000> : vector<8xf32>
    %84 = vector.multi_reduction <maximumf>, %83, %cst_30 [1] : vector<8x8xf32> to vector<8xf32>
    %85 = vector.shape_cast %84 : vector<8xf32> to vector<8x1xf32>
    %86 = vector.broadcast %85 : vector<8x1xf32> to vector<8x8xf32>
    %87 = arith.subf %83, %86 : vector<8x8xf32>
    %88 = math.exp %87 : vector<8x8xf32>
    %cst_31 = arith.constant dense<0.000000e+00> : vector<8xf32>
    %89 = vector.multi_reduction <add>, %88, %cst_31 [1] : vector<8x8xf32> to vector<8xf32>
    %90 = vector.shape_cast %89 : vector<8xf32> to vector<8x1xf32>
    %91 = tpu.reciprocal %90 {approx = true} : vector<8x1xf32> -> vector<8x1xf32>
    %92 = vector.broadcast %91 : vector<8x1xf32> to vector<8x8xf32>
    %93 = arith.mulf %88, %92 : vector<8x8xf32>
    %94 = arith.truncf %93 : vector<8x8xf32> to vector<8x8xbf16>
    %95 = vector.extract_strided_slice %15 {offsets = [0, 24], sizes = [8, 8], strides = [1, 1]} : vector<8x32xbf16> to vector<8x8xbf16>
    %cst_32 = arith.constant dense<0.000000e+00> : vector<8x8xf32>
    %96 = tpu.matmul %94, %95, %cst_32 {dimension_numbers = #tpu.dot_dimension_numbers<[1], [0], [0], [1], [0, 0, 1, 1], [], []>} : vector<8x8xbf16>, vector<8x8xbf16>, vector<8x8xf32> -> vector<8x8xf32>
    %97 = arith.truncf %96 : vector<8x8xf32> to vector<8x8xbf16>
    %c24 = arith.constant 24 : index
    %c0_33 = arith.constant 0 : index
    %98 = vector.load %arg4[%c24, %c0_33] : memref<32x32xbf16, #tpu.memory_space<vmem>>, vector<8x32xbf16>
    %cst_34 = arith.constant dense<0.000000e+00> : vector<8x32xf32>
    %99 = tpu.matmul %97, %98, %cst_34 {dimension_numbers = #tpu.dot_dimension_numbers<[1], [0], [0], [1], [0, 0, 1, 1], [], []>} : vector<8x8xbf16>, vector<8x32xbf16>, vector<8x32xf32> -> vector<8x32xf32>
    %100 = arith.addf %79, %99 : vector<8x32xf32>
    %c0_35 = arith.constant 0 : index
    %c0_36 = arith.constant 0 : index
    %101 = vector.load %arg5[%c0_35, %c0_36] : memref<1x32xf32, #tpu.memory_space<vmem>>, vector<1x32xf32>
    %102 = vector.broadcast %101 : vector<1x32xf32> to vector<8x32xf32>
    %103 = arith.addf %100, %102 : vector<8x32xf32>
    %104 = arith.extf %2 : vector<8x32xbf16> to vector<8x32xf32>
    %105 = arith.addf %103, %104 : vector<8x32xf32>
    %cst_37 = arith.constant dense<0.000000e+00> : vector<8xf32>
    %106 = vector.multi_reduction <add>, %105, %cst_37 [1] : vector<8x32xf32> to vector<8xf32>
    %107 = vector.shape_cast %106 : vector<8xf32> to vector<8x1xf32>
    %cst_38 = arith.constant 3.200000e+01 : f32
    %108 = vector.broadcast %cst_38 : f32 to vector<8x1xf32>
    %109 = arith.divf %107, %108 : vector<8x1xf32>
    %110 = vector.broadcast %109 : vector<8x1xf32> to vector<8x32xf32>
    %111 = arith.subf %105, %110 : vector<8x32xf32>
    %112 = arith.mulf %111, %111 : vector<8x32xf32>
    %cst_39 = arith.constant dense<0.000000e+00> : vector<8xf32>
    %113 = vector.multi_reduction <add>, %112, %cst_39 [1] : vector<8x32xf32> to vector<8xf32>
    %114 = vector.shape_cast %113 : vector<8xf32> to vector<8x1xf32>
    %cst_40 = arith.constant 3.200000e+01 : f32
    %115 = vector.broadcast %cst_40 : f32 to vector<8x1xf32>
    %116 = arith.divf %114, %115 : vector<8x1xf32>
    %cst_41 = arith.constant 9.99999974E-6 : f32
    %117 = vector.broadcast %cst_41 : f32 to vector<8x1xf32>
    %118 = arith.addf %116, %117 : vector<8x1xf32>
    %119 = math.rsqrt %118 : vector<8x1xf32>
    %120 = vector.broadcast %109 : vector<8x1xf32> to vector<8x32xf32>
    %121 = arith.subf %105, %120 : vector<8x32xf32>
    %122 = vector.broadcast %119 : vector<8x1xf32> to vector<8x32xf32>
    %123 = arith.mulf %121, %122 : vector<8x32xf32>
    %c0_42 = arith.constant 0 : index
    %c0_43 = arith.constant 0 : index
    %124 = vector.load %arg6[%c0_42, %c0_43] : memref<1x32xf32, #tpu.memory_space<vmem>>, vector<1x32xf32>
    %125 = vector.broadcast %124 : vector<1x32xf32> to vector<8x32xf32>
    %126 = arith.mulf %123, %125 : vector<8x32xf32>
    %c0_44 = arith.constant 0 : index
    %c0_45 = arith.constant 0 : index
    %127 = vector.load %arg7[%c0_44, %c0_45] : memref<1x32xf32, #tpu.memory_space<vmem>>, vector<1x32xf32>
    %128 = vector.broadcast %127 : vector<1x32xf32> to vector<8x32xf32>
    %129 = arith.addf %126, %128 : vector<8x32xf32>
    %130 = arith.truncf %129 : vector<8x32xf32> to vector<8x32xbf16>
    %c0_46 = arith.constant 0 : index
    %c0_47 = arith.constant 0 : index
    %c0_48 = arith.constant 0 : index
    %131 = vector.load %arg9[%c0_46, %c0_47, %c0_48] : memref<1x8x32xbf16, #tpu.memory_space<vmem>>, vector<1x8x32xbf16>
    %132 = vector.shape_cast %131 : vector<1x8x32xbf16> to vector<8x32xbf16>
    %133 = vector.shape_cast %130 : vector<8x32xbf16> to vector<1x8x32xbf16>
    tpu.vector_store %arg9[%c0_46, %c0_47, %c0_48], %133 {strides = array<i32>} : memref<1x8x32xbf16, #tpu.memory_space<vmem>>, vector<1x8x32xbf16>,
    return
  }
  func.func @transform_0(%arg0: i32) -> (i32, i32, i32) {
    %c0_i32 = arith.constant 0 : i32
    %c0_i32_0 = arith.constant 0 : i32
    %c0_i32_1 = arith.constant 0 : i32
    return %arg0, %c0_i32, %c0_i32_0 : i32, i32, i32
  }
  func.func @transform_1(%arg0: i32) -> (i32, i32) {
    %c0_i32 = arith.constant 0 : i32
    %c0_i32_0 = arith.constant 0 : i32
    %c0_i32_1 = arith.constant 0 : i32
    return %c0_i32, %c0_i32_0 : i32, i32
  }
  func.func @transform_2(%arg0: i32) -> (i32, i32) {
    %c0_i32 = arith.constant 0 : i32
    %c0_i32_0 = arith.constant 0 : i32
    %c0_i32_1 = arith.constant 0 : i32
    return %c0_i32, %c0_i32_0 : i32, i32
  }
  func.func @transform_3(%arg0: i32) -> (i32, i32) {
    %c0_i32 = arith.constant 0 : i32
    %c0_i32_0 = arith.constant 0 : i32
    %c0_i32_1 = arith.constant 0 : i32
    return %c0_i32, %c0_i32_0 : i32, i32
  }
  func.func @transform_4(%arg0: i32) -> (i32, i32) {
    %c0_i32 = arith.constant 0 : i32
    %c0_i32_0 = arith.constant 0 : i32
    %c0_i32_1 = arith.constant 0 : i32
    return %c0_i32, %c0_i32_0 : i32, i32
  }
  func.func @transform_5(%arg0: i32) -> (i32, i32) {
    %c0_i32 = arith.constant 0 : i32
    %c0_i32_0 = arith.constant 0 : i32
    %c0_i32_1 = arith.constant 0 : i32
    return %c0_i32, %c0_i32_0 : i32, i32
  }
  func.func @transform_6(%arg0: i32) -> (i32, i32) {
    %c0_i32 = arith.constant 0 : i32
    %c0_i32_0 = arith.constant 0 : i32
    %c0_i32_1 = arith.constant 0 : i32
    return %c0_i32, %c0_i32_0 : i32, i32
  }
  func.func @transform_7(%arg0: i32) -> (i32, i32) {
    %c0_i32 = arith.constant 0 : i32
    %c0_i32_0 = arith.constant 0 : i32
    %c0_i32_1 = arith.constant 0 : i32
    return %c0_i32, %c0_i32_0 : i32, i32
  }
  func.func @transform_8(%arg0: i32) -> (i32, i32, i32) {
    %c0_i32 = arith.constant 0 : i32
    %c0_i32_0 = arith.constant 0 : i32
    %c0_i32_1 = arith.constant 0 : i32
    return %arg0, %c0_i32, %c0_i32_0 : i32, i32, i32
  }
}

module attributes {stable_mosaic.version = 11 : i64} {
  func.func @_cross_attn_kernel(%arg0: i32, %arg1: memref<1x8x32xbf16, #tpu.memory_space<vmem>>, %arg2: memref<1x8x32xbf16, #tpu.memory_space<vmem>>, %arg3: memref<32x32xbf16, #tpu.memory_space<vmem>>, %arg4: memref<1x32xf32, #tpu.memory_space<vmem>>, %arg5: memref<32x64xbf16, #tpu.memory_space<vmem>>, %arg6: memref<1x64xf32, #tpu.memory_space<vmem>>, %arg7: memref<32x32xbf16, #tpu.memory_space<vmem>>, %arg8: memref<1x32xf32, #tpu.memory_space<vmem>>, %arg9: memref<1x32xf32, #tpu.memory_space<vmem>>, %arg10: memref<1x32xf32, #tpu.memory_space<vmem>>, %arg11: memref<1x8x32xbf16, #tpu.memory_space<vmem>>) attributes {dimension_semantics = [#tpu.dimension_semantics<parallel>], iteration_bounds = array<i64: 2>, scalar_prefetch = 0 : i64, scratch_operands = 0 : i64, tpu.core_type = #tpu.core_type<tc>, window_params = [{transform_indices = @transform_0, window_bounds = array<i64: 1, 8, 32>}, {transform_indices = @transform_1, window_bounds = array<i64: 1, 8, 32>}, {pipeline_mode = #tpu.pipeline_mode<synchronous>, transform_indices = @transform_2, window_bounds = array<i64: 32, 32>}, {pipeline_mode = #tpu.pipeline_mode<synchronous>, transform_indices = @transform_3, window_bounds = array<i64: 1, 32>}, {pipeline_mode = #tpu.pipeline_mode<synchronous>, transform_indices = @transform_4, window_bounds = array<i64: 32, 64>}, {pipeline_mode = #tpu.pipeline_mode<synchronous>, transform_indices = @transform_5, window_bounds = array<i64: 1, 64>}, {pipeline_mode = #tpu.pipeline_mode<synchronous>, transform_indices = @transform_6, window_bounds = array<i64: 32, 32>}, {pipeline_mode = #tpu.pipeline_mode<synchronous>, transform_indices = @transform_7, window_bounds = array<i64: 1, 32>}, {pipeline_mode = #tpu.pipeline_mode<synchronous>, transform_indices = @transform_8, window_bounds = array<i64: 1, 32>}, {pipeline_mode = #tpu.pipeline_mode<synchronous>, transform_indices = @transform_9, window_bounds = array<i64: 1, 32>}, {transform_indices = @transform_10, window_bounds = array<i64: 1, 8, 32>}]} {
    %c0 = arith.constant 0 : index
    %c0_0 = arith.constant 0 : index
    %c0_1 = arith.constant 0 : index
    %0 = vector.load %arg1[%c0, %c0_0, %c0_1] : memref<1x8x32xbf16, #tpu.memory_space<vmem>>, vector<1x8x32xbf16>
    %1 = vector.shape_cast %0 : vector<1x8x32xbf16> to vector<8x32xbf16>
    %c0_2 = arith.constant 0 : index
    %c0_3 = arith.constant 0 : index
    %c0_4 = arith.constant 0 : index
    %2 = vector.load %arg2[%c0_2, %c0_3, %c0_4] : memref<1x8x32xbf16, #tpu.memory_space<vmem>>, vector<1x8x32xbf16>
    %3 = vector.shape_cast %2 : vector<1x8x32xbf16> to vector<8x32xbf16>
    %c0_5 = arith.constant 0 : index
    %c0_6 = arith.constant 0 : index
    %4 = vector.load %arg3[%c0_5, %c0_6] : memref<32x32xbf16, #tpu.memory_space<vmem>>, vector<32x32xbf16>
    %cst = arith.constant dense<0.000000e+00> : vector<8x32xf32>
    %5 = tpu.matmul %1, %4, %cst {dimension_numbers = #tpu.dot_dimension_numbers<[1], [0], [0], [1], [0, 0, 1, 1], [], []>} : vector<8x32xbf16>, vector<32x32xbf16>, vector<8x32xf32> -> vector<8x32xf32>
    %c0_7 = arith.constant 0 : index
    %c0_8 = arith.constant 0 : index
    %6 = vector.load %arg4[%c0_7, %c0_8] : memref<1x32xf32, #tpu.memory_space<vmem>>, vector<1x32xf32>
    %7 = vector.broadcast %6 : vector<1x32xf32> to vector<8x32xf32>
    %8 = arith.addf %5, %7 : vector<8x32xf32>
    %cst_9 = arith.constant 0.353553385 : f32
    %9 = vector.broadcast %cst_9 : f32 to vector<8x32xf32>
    %10 = arith.mulf %8, %9 : vector<8x32xf32>
    %11 = arith.truncf %10 : vector<8x32xf32> to vector<8x32xbf16>
    %c0_10 = arith.constant 0 : index
    %c0_11 = arith.constant 0 : index
    %12 = vector.load %arg5[%c0_10, %c0_11] : memref<32x64xbf16, #tpu.memory_space<vmem>>, vector<32x64xbf16>
    %cst_12 = arith.constant dense<0.000000e+00> : vector<8x64xf32>
    %13 = tpu.matmul %3, %12, %cst_12 {dimension_numbers = #tpu.dot_dimension_numbers<[1], [0], [0], [1], [0, 0, 1, 1], [], []>} : vector<8x32xbf16>, vector<32x64xbf16>, vector<8x64xf32> -> vector<8x64xf32>
    %c0_13 = arith.constant 0 : index
    %c0_14 = arith.constant 0 : index
    %14 = vector.load %arg6[%c0_13, %c0_14] : memref<1x64xf32, #tpu.memory_space<vmem>>, vector<1x64xf32>
    %15 = vector.broadcast %14 : vector<1x64xf32> to vector<8x64xf32>
    %16 = arith.addf %13, %15 : vector<8x64xf32>
    %17 = vector.extract_strided_slice %16 {offsets = [0, 0], sizes = [8, 32], strides = [1, 1]} : vector<8x64xf32> to vector<8x32xf32>
    %18 = arith.truncf %17 : vector<8x32xf32> to vector<8x32xbf16>
    %19 = vector.extract_strided_slice %16 {offsets = [0, 32], sizes = [8, 32], strides = [1, 1]} : vector<8x64xf32> to vector<8x32xf32>
    %20 = arith.truncf %19 : vector<8x32xf32> to vector<8x32xbf16>
    %cst_15 = arith.constant 0.000000e+00 : f32
    %21 = vector.broadcast %cst_15 : f32 to vector<8x32xf32>
    %22 = vector.extract_strided_slice %11 {offsets = [0, 0], sizes = [8, 8], strides = [1, 1]} : vector<8x32xbf16> to vector<8x8xbf16>
    %23 = vector.extract_strided_slice %18 {offsets = [0, 0], sizes = [8, 8], strides = [1, 1]} : vector<8x32xbf16> to vector<8x8xbf16>
    %cst_16 = arith.constant dense<0.000000e+00> : vector<8x8xf32>
    %24 = tpu.matmul %22, %23, %cst_16 {dimension_numbers = #tpu.dot_dimension_numbers<[1], [1], [0], [0], [0, 0, 1, 0], [], []>} : vector<8x8xbf16>, vector<8x8xbf16>, vector<8x8xf32> -> vector<8x8xf32>
    %cst_17 = arith.constant dense<0xFF800000> : vector<8xf32>
    %25 = vector.multi_reduction <maximumf>, %24, %cst_17 [1] : vector<8x8xf32> to vector<8xf32>
    %26 = vector.shape_cast %25 : vector<8xf32> to vector<8x1xf32>
    %27 = vector.broadcast %26 : vector<8x1xf32> to vector<8x8xf32>
    %28 = arith.subf %24, %27 : vector<8x8xf32>
    %29 = math.exp %28 : vector<8x8xf32>
    %cst_18 = arith.constant dense<0.000000e+00> : vector<8xf32>
    %30 = vector.multi_reduction <add>, %29, %cst_18 [1] : vector<8x8xf32> to vector<8xf32>
    %31 = vector.shape_cast %30 : vector<8xf32> to vector<8x1xf32>
    %32 = tpu.reciprocal %31 {approx = true} : vector<8x1xf32> -> vector<8x1xf32>
    %33 = vector.broadcast %32 : vector<8x1xf32> to vector<8x8xf32>
    %34 = arith.mulf %29, %33 : vector<8x8xf32>
    %35 = arith.truncf %34 : vector<8x8xf32> to vector<8x8xbf16>
    %36 = vector.extract_strided_slice %20 {offsets = [0, 0], sizes = [8, 8], strides = [1, 1]} : vector<8x32xbf16> to vector<8x8xbf16>
    %cst_19 = arith.constant dense<0.000000e+00> : vector<8x8xf32>
    %37 = tpu.matmul %35, %36, %cst_19 {dimension_numbers = #tpu.dot_dimension_numbers<[1], [0], [0], [1], [0, 0, 1, 1], [], []>} : vector<8x8xbf16>, vector<8x8xbf16>, vector<8x8xf32> -> vector<8x8xf32>
    %38 = arith.truncf %37 : vector<8x8xf32> to vector<8x8xbf16>
    %c0_20 = arith.constant 0 : index
    %c0_21 = arith.constant 0 : index
    %39 = vector.load %arg7[%c0_20, %c0_21] : memref<32x32xbf16, #tpu.memory_space<vmem>>, vector<8x32xbf16>
    %cst_22 = arith.constant dense<0.000000e+00> : vector<8x32xf32>
    %40 = tpu.matmul %38, %39, %cst_22 {dimension_numbers = #tpu.dot_dimension_numbers<[1], [0], [0], [1], [0, 0, 1, 1], [], []>} : vector<8x8xbf16>, vector<8x32xbf16>, vector<8x32xf32> -> vector<8x32xf32>
    %41 = arith.addf %21, %40 : vector<8x32xf32>
    %42 = vector.extract_strided_slice %11 {offsets = [0, 8], sizes = [8, 8], strides = [1, 1]} : vector<8x32xbf16> to vector<8x8xbf16>
    %43 = vector.extract_strided_slice %18 {offsets = [0, 8], sizes = [8, 8], strides = [1, 1]} : vector<8x32xbf16> to vector<8x8xbf16>
    %cst_23 = arith.constant dense<0.000000e+00> : vector<8x8xf32>
    %44 = tpu.matmul %42, %43, %cst_23 {dimension_numbers = #tpu.dot_dimension_numbers<[1], [1], [0], [0], [0, 0, 1, 0], [], []>} : vector<8x8xbf16>, vector<8x8xbf16>, vector<8x8xf32> -> vector<8x8xf32>
    %cst_24 = arith.constant dense<0xFF800000> : vector<8xf32>
    %45 = vector.multi_reduction <maximumf>, %44, %cst_24 [1] : vector<8x8xf32> to vector<8xf32>
    %46 = vector.shape_cast %45 : vector<8xf32> to vector<8x1xf32>
    %47 = vector.broadcast %46 : vector<8x1xf32> to vector<8x8xf32>
    %48 = arith.subf %44, %47 : vector<8x8xf32>
    %49 = math.exp %48 : vector<8x8xf32>
    %cst_25 = arith.constant dense<0.000000e+00> : vector<8xf32>
    %50 = vector.multi_reduction <add>, %49, %cst_25 [1] : vector<8x8xf32> to vector<8xf32>
    %51 = vector.shape_cast %50 : vector<8xf32> to vector<8x1xf32>
    %52 = tpu.reciprocal %51 {approx = true} : vector<8x1xf32> -> vector<8x1xf32>
    %53 = vector.broadcast %52 : vector<8x1xf32> to vector<8x8xf32>
    %54 = arith.mulf %49, %53 : vector<8x8xf32>
    %55 = arith.truncf %54 : vector<8x8xf32> to vector<8x8xbf16>
    %56 = vector.extract_strided_slice %20 {offsets = [0, 8], sizes = [8, 8], strides = [1, 1]} : vector<8x32xbf16> to vector<8x8xbf16>
    %cst_26 = arith.constant dense<0.000000e+00> : vector<8x8xf32>
    %57 = tpu.matmul %55, %56, %cst_26 {dimension_numbers = #tpu.dot_dimension_numbers<[1], [0], [0], [1], [0, 0, 1, 1], [], []>} : vector<8x8xbf16>, vector<8x8xbf16>, vector<8x8xf32> -> vector<8x8xf32>
    %58 = arith.truncf %57 : vector<8x8xf32> to vector<8x8xbf16>
    %c8 = arith.constant 8 : index
    %c0_27 = arith.constant 0 : index
    %59 = vector.load %arg7[%c8, %c0_27] : memref<32x32xbf16, #tpu.memory_space<vmem>>, vector<8x32xbf16>
    %cst_28 = arith.constant dense<0.000000e+00> : vector<8x32xf32>
    %60 = tpu.matmul %58, %59, %cst_28 {dimension_numbers = #tpu.dot_dimension_numbers<[1], [0], [0], [1], [0, 0, 1, 1], [], []>} : vector<8x8xbf16>, vector<8x32xbf16>, vector<8x32xf32> -> vector<8x32xf32>
    %61 = arith.addf %41, %60 : vector<8x32xf32>
    %62 = vector.extract_strided_slice %11 {offsets = [0, 16], sizes = [8, 8], strides = [1, 1]} : vector<8x32xbf16> to vector<8x8xbf16>
    %63 = vector.extract_strided_slice %18 {offsets = [0, 16], sizes = [8, 8], strides = [1, 1]} : vector<8x32xbf16> to vector<8x8xbf16>
    %cst_29 = arith.constant dense<0.000000e+00> : vector<8x8xf32>
    %64 = tpu.matmul %62, %63, %cst_29 {dimension_numbers = #tpu.dot_dimension_numbers<[1], [1], [0], [0], [0, 0, 1, 0], [], []>} : vector<8x8xbf16>, vector<8x8xbf16>, vector<8x8xf32> -> vector<8x8xf32>
    %cst_30 = arith.constant dense<0xFF800000> : vector<8xf32>
    %65 = vector.multi_reduction <maximumf>, %64, %cst_30 [1] : vector<8x8xf32> to vector<8xf32>
    %66 = vector.shape_cast %65 : vector<8xf32> to vector<8x1xf32>
    %67 = vector.broadcast %66 : vector<8x1xf32> to vector<8x8xf32>
    %68 = arith.subf %64, %67 : vector<8x8xf32>
    %69 = math.exp %68 : vector<8x8xf32>
    %cst_31 = arith.constant dense<0.000000e+00> : vector<8xf32>
    %70 = vector.multi_reduction <add>, %69, %cst_31 [1] : vector<8x8xf32> to vector<8xf32>
    %71 = vector.shape_cast %70 : vector<8xf32> to vector<8x1xf32>
    %72 = tpu.reciprocal %71 {approx = true} : vector<8x1xf32> -> vector<8x1xf32>
    %73 = vector.broadcast %72 : vector<8x1xf32> to vector<8x8xf32>
    %74 = arith.mulf %69, %73 : vector<8x8xf32>
    %75 = arith.truncf %74 : vector<8x8xf32> to vector<8x8xbf16>
    %76 = vector.extract_strided_slice %20 {offsets = [0, 16], sizes = [8, 8], strides = [1, 1]} : vector<8x32xbf16> to vector<8x8xbf16>
    %cst_32 = arith.constant dense<0.000000e+00> : vector<8x8xf32>
    %77 = tpu.matmul %75, %76, %cst_32 {dimension_numbers = #tpu.dot_dimension_numbers<[1], [0], [0], [1], [0, 0, 1, 1], [], []>} : vector<8x8xbf16>, vector<8x8xbf16>, vector<8x8xf32> -> vector<8x8xf32>
    %78 = arith.truncf %77 : vector<8x8xf32> to vector<8x8xbf16>
    %c16 = arith.constant 16 : index
    %c0_33 = arith.constant 0 : index
    %79 = vector.load %arg7[%c16, %c0_33] : memref<32x32xbf16, #tpu.memory_space<vmem>>, vector<8x32xbf16>
    %cst_34 = arith.constant dense<0.000000e+00> : vector<8x32xf32>
    %80 = tpu.matmul %78, %79, %cst_34 {dimension_numbers = #tpu.dot_dimension_numbers<[1], [0], [0], [1], [0, 0, 1, 1], [], []>} : vector<8x8xbf16>, vector<8x32xbf16>, vector<8x32xf32> -> vector<8x32xf32>
    %81 = arith.addf %61, %80 : vector<8x32xf32>
    %82 = vector.extract_strided_slice %11 {offsets = [0, 24], sizes = [8, 8], strides = [1, 1]} : vector<8x32xbf16> to vector<8x8xbf16>
    %83 = vector.extract_strided_slice %18 {offsets = [0, 24], sizes = [8, 8], strides = [1, 1]} : vector<8x32xbf16> to vector<8x8xbf16>
    %cst_35 = arith.constant dense<0.000000e+00> : vector<8x8xf32>
    %84 = tpu.matmul %82, %83, %cst_35 {dimension_numbers = #tpu.dot_dimension_numbers<[1], [1], [0], [0], [0, 0, 1, 0], [], []>} : vector<8x8xbf16>, vector<8x8xbf16>, vector<8x8xf32> -> vector<8x8xf32>
    %cst_36 = arith.constant dense<0xFF800000> : vector<8xf32>
    %85 = vector.multi_reduction <maximumf>, %84, %cst_36 [1] : vector<8x8xf32> to vector<8xf32>
    %86 = vector.shape_cast %85 : vector<8xf32> to vector<8x1xf32>
    %87 = vector.broadcast %86 : vector<8x1xf32> to vector<8x8xf32>
    %88 = arith.subf %84, %87 : vector<8x8xf32>
    %89 = math.exp %88 : vector<8x8xf32>
    %cst_37 = arith.constant dense<0.000000e+00> : vector<8xf32>
    %90 = vector.multi_reduction <add>, %89, %cst_37 [1] : vector<8x8xf32> to vector<8xf32>
    %91 = vector.shape_cast %90 : vector<8xf32> to vector<8x1xf32>
    %92 = tpu.reciprocal %91 {approx = true} : vector<8x1xf32> -> vector<8x1xf32>
    %93 = vector.broadcast %92 : vector<8x1xf32> to vector<8x8xf32>
    %94 = arith.mulf %89, %93 : vector<8x8xf32>
    %95 = arith.truncf %94 : vector<8x8xf32> to vector<8x8xbf16>
    %96 = vector.extract_strided_slice %20 {offsets = [0, 24], sizes = [8, 8], strides = [1, 1]} : vector<8x32xbf16> to vector<8x8xbf16>
    %cst_38 = arith.constant dense<0.000000e+00> : vector<8x8xf32>
    %97 = tpu.matmul %95, %96, %cst_38 {dimension_numbers = #tpu.dot_dimension_numbers<[1], [0], [0], [1], [0, 0, 1, 1], [], []>} : vector<8x8xbf16>, vector<8x8xbf16>, vector<8x8xf32> -> vector<8x8xf32>
    %98 = arith.truncf %97 : vector<8x8xf32> to vector<8x8xbf16>
    %c24 = arith.constant 24 : index
    %c0_39 = arith.constant 0 : index
    %99 = vector.load %arg7[%c24, %c0_39] : memref<32x32xbf16, #tpu.memory_space<vmem>>, vector<8x32xbf16>
    %cst_40 = arith.constant dense<0.000000e+00> : vector<8x32xf32>
    %100 = tpu.matmul %98, %99, %cst_40 {dimension_numbers = #tpu.dot_dimension_numbers<[1], [0], [0], [1], [0, 0, 1, 1], [], []>} : vector<8x8xbf16>, vector<8x32xbf16>, vector<8x32xf32> -> vector<8x32xf32>
    %101 = arith.addf %81, %100 : vector<8x32xf32>
    %c0_41 = arith.constant 0 : index
    %c0_42 = arith.constant 0 : index
    %102 = vector.load %arg8[%c0_41, %c0_42] : memref<1x32xf32, #tpu.memory_space<vmem>>, vector<1x32xf32>
    %103 = vector.broadcast %102 : vector<1x32xf32> to vector<8x32xf32>
    %104 = arith.addf %101, %103 : vector<8x32xf32>
    %105 = arith.extf %1 : vector<8x32xbf16> to vector<8x32xf32>
    %106 = arith.addf %104, %105 : vector<8x32xf32>
    %cst_43 = arith.constant dense<0.000000e+00> : vector<8xf32>
    %107 = vector.multi_reduction <add>, %106, %cst_43 [1] : vector<8x32xf32> to vector<8xf32>
    %108 = vector.shape_cast %107 : vector<8xf32> to vector<8x1xf32>
    %cst_44 = arith.constant 3.200000e+01 : f32
    %109 = vector.broadcast %cst_44 : f32 to vector<8x1xf32>
    %110 = arith.divf %108, %109 : vector<8x1xf32>
    %111 = vector.broadcast %110 : vector<8x1xf32> to vector<8x32xf32>
    %112 = arith.subf %106, %111 : vector<8x32xf32>
    %113 = arith.mulf %112, %112 : vector<8x32xf32>
    %cst_45 = arith.constant dense<0.000000e+00> : vector<8xf32>
    %114 = vector.multi_reduction <add>, %113, %cst_45 [1] : vector<8x32xf32> to vector<8xf32>
    %115 = vector.shape_cast %114 : vector<8xf32> to vector<8x1xf32>
    %cst_46 = arith.constant 3.200000e+01 : f32
    %116 = vector.broadcast %cst_46 : f32 to vector<8x1xf32>
    %117 = arith.divf %115, %116 : vector<8x1xf32>
    %cst_47 = arith.constant 9.99999974E-6 : f32
    %118 = vector.broadcast %cst_47 : f32 to vector<8x1xf32>
    %119 = arith.addf %117, %118 : vector<8x1xf32>
    %120 = math.rsqrt %119 : vector<8x1xf32>
    %121 = vector.broadcast %110 : vector<8x1xf32> to vector<8x32xf32>
    %122 = arith.subf %106, %121 : vector<8x32xf32>
    %123 = vector.broadcast %120 : vector<8x1xf32> to vector<8x32xf32>
    %124 = arith.mulf %122, %123 : vector<8x32xf32>
    %c0_48 = arith.constant 0 : index
    %c0_49 = arith.constant 0 : index
    %125 = vector.load %arg9[%c0_48, %c0_49] : memref<1x32xf32, #tpu.memory_space<vmem>>, vector<1x32xf32>
    %126 = vector.broadcast %125 : vector<1x32xf32> to vector<8x32xf32>
    %127 = arith.mulf %124, %126 : vector<8x32xf32>
    %c0_50 = arith.constant 0 : index
    %c0_51 = arith.constant 0 : index
    %128 = vector.load %arg10[%c0_50, %c0_51] : memref<1x32xf32, #tpu.memory_space<vmem>>, vector<1x32xf32>
    %129 = vector.broadcast %128 : vector<1x32xf32> to vector<8x32xf32>
    %130 = arith.addf %127, %129 : vector<8x32xf32>
    %131 = arith.truncf %130 : vector<8x32xf32> to vector<8x32xbf16>
    %c0_52 = arith.constant 0 : index
    %c0_53 = arith.constant 0 : index
    %c0_54 = arith.constant 0 : index
    %132 = vector.load %arg11[%c0_52, %c0_53, %c0_54] : memref<1x8x32xbf16, #tpu.memory_space<vmem>>, vector<1x8x32xbf16>
    %133 = vector.shape_cast %132 : vector<1x8x32xbf16> to vector<8x32xbf16>
    %134 = vector.shape_cast %131 : vector<8x32xbf16> to vector<1x8x32xbf16>
    tpu.vector_store %arg11[%c0_52, %c0_53, %c0_54], %134 {strides = array<i32>} : memref<1x8x32xbf16, #tpu.memory_space<vmem>>, vector<1x8x32xbf16>,
    return
  }
  func.func @transform_0(%arg0: i32) -> (i32, i32, i32) {
    %c0_i32 = arith.constant 0 : i32
    %c0_i32_0 = arith.constant 0 : i32
    %c0_i32_1 = arith.constant 0 : i32
    return %arg0, %c0_i32, %c0_i32_0 : i32, i32, i32
  }
  func.func @transform_1(%arg0: i32) -> (i32, i32, i32) {
    %c0_i32 = arith.constant 0 : i32
    %c0_i32_0 = arith.constant 0 : i32
    %c0_i32_1 = arith.constant 0 : i32
    return %arg0, %c0_i32, %c0_i32_0 : i32, i32, i32
  }
  func.func @transform_2(%arg0: i32) -> (i32, i32) {
    %c0_i32 = arith.constant 0 : i32
    %c0_i32_0 = arith.constant 0 : i32
    %c0_i32_1 = arith.constant 0 : i32
    return %c0_i32, %c0_i32_0 : i32, i32
  }
  func.func @transform_3(%arg0: i32) -> (i32, i32) {
    %c0_i32 = arith.constant 0 : i32
    %c0_i32_0 = arith.constant 0 : i32
    %c0_i32_1 = arith.constant 0 : i32
    return %c0_i32, %c0_i32_0 : i32, i32
  }
  func.func @transform_4(%arg0: i32) -> (i32, i32) {
    %c0_i32 = arith.constant 0 : i32
    %c0_i32_0 = arith.constant 0 : i32
    %c0_i32_1 = arith.constant 0 : i32
    return %c0_i32, %c0_i32_0 : i32, i32
  }
  func.func @transform_5(%arg0: i32) -> (i32, i32) {
    %c0_i32 = arith.constant 0 : i32
    %c0_i32_0 = arith.constant 0 : i32
    %c0_i32_1 = arith.constant 0 : i32
    return %c0_i32, %c0_i32_0 : i32, i32
  }
  func.func @transform_6(%arg0: i32) -> (i32, i32) {
    %c0_i32 = arith.constant 0 : i32
    %c0_i32_0 = arith.constant 0 : i32
    %c0_i32_1 = arith.constant 0 : i32
    return %c0_i32, %c0_i32_0 : i32, i32
  }
  func.func @transform_7(%arg0: i32) -> (i32, i32) {
    %c0_i32 = arith.constant 0 : i32
    %c0_i32_0 = arith.constant 0 : i32
    %c0_i32_1 = arith.constant 0 : i32
    return %c0_i32, %c0_i32_0 : i32, i32
  }
  func.func @transform_8(%arg0: i32) -> (i32, i32) {
    %c0_i32 = arith.constant 0 : i32
    %c0_i32_0 = arith.constant 0 : i32
    %c0_i32_1 = arith.constant 0 : i32
    return %c0_i32, %c0_i32_0 : i32, i32
  }
  func.func @transform_9(%arg0: i32) -> (i32, i32) {
    %c0_i32 = arith.constant 0 : i32
    %c0_i32_0 = arith.constant 0 : i32
    %c0_i32_1 = arith.constant 0 : i32
    return %c0_i32, %c0_i32_0 : i32, i32
  }
  func.func @transform_10(%arg0: i32) -> (i32, i32, i32) {
    %c0_i32 = arith.constant 0 : i32
    %c0_i32_0 = arith.constant 0 : i32
    %c0_i32_1 = arith.constant 0 : i32
    return %arg0, %c0_i32, %c0_i32_0 : i32, i32, i32
  }
}

module attributes {stable_mosaic.version = 11 : i64} {
  func.func @_out_proj_kernel(%arg0: i32, %arg1: memref<8x32xbf16, #tpu.memory_space<vmem>>, %arg2: memref<32x60xbf16, #tpu.memory_space<vmem>>, %arg3: memref<1x60xf32, #tpu.memory_space<vmem>>, %arg4: memref<8x60xf32, #tpu.memory_space<vmem>>) attributes {dimension_semantics = [#tpu.dimension_semantics<parallel>], iteration_bounds = array<i64: 2>, scalar_prefetch = 0 : i64, scratch_operands = 0 : i64, tpu.core_type = #tpu.core_type<tc>, window_params = [{transform_indices = @transform_0, window_bounds = array<i64: 8, 32>}, {pipeline_mode = #tpu.pipeline_mode<synchronous>, transform_indices = @transform_1, window_bounds = array<i64: 32, 60>}, {pipeline_mode = #tpu.pipeline_mode<synchronous>, transform_indices = @transform_2, window_bounds = array<i64: 1, 60>}, {transform_indices = @transform_3, window_bounds = array<i64: 8, 60>}]} {
    %c0 = arith.constant 0 : index
    %c0_0 = arith.constant 0 : index
    %0 = vector.load %arg1[%c0, %c0_0] : memref<8x32xbf16, #tpu.memory_space<vmem>>, vector<8x32xbf16>
    %c0_1 = arith.constant 0 : index
    %c0_2 = arith.constant 0 : index
    %1 = vector.load %arg2[%c0_1, %c0_2] : memref<32x60xbf16, #tpu.memory_space<vmem>>, vector<32x60xbf16>
    %cst = arith.constant dense<0.000000e+00> : vector<8x60xf32>
    %2 = tpu.matmul %0, %1, %cst {dimension_numbers = #tpu.dot_dimension_numbers<[1], [0], [0], [1], [0, 0, 1, 1], [], []>} : vector<8x32xbf16>, vector<32x60xbf16>, vector<8x60xf32> -> vector<8x60xf32>
    %c0_3 = arith.constant 0 : index
    %c0_4 = arith.constant 0 : index
    %3 = vector.load %arg3[%c0_3, %c0_4] : memref<1x60xf32, #tpu.memory_space<vmem>>, vector<1x60xf32>
    %4 = vector.broadcast %3 : vector<1x60xf32> to vector<8x60xf32>
    %5 = arith.addf %2, %4 : vector<8x60xf32>
    %c0_5 = arith.constant 0 : index
    %c0_6 = arith.constant 0 : index
    %6 = vector.load %arg4[%c0_5, %c0_6] : memref<8x60xf32, #tpu.memory_space<vmem>>, vector<8x60xf32>
    tpu.vector_store %arg4[%c0_5, %c0_6], %5 {strides = array<i32>} : memref<8x60xf32, #tpu.memory_space<vmem>>, vector<8x60xf32>,
    return
  }
  func.func @transform_0(%arg0: i32) -> (i32, i32) {
    %c0_i32 = arith.constant 0 : i32
    %c0_i32_0 = arith.constant 0 : i32
    return %arg0, %c0_i32 : i32, i32
  }
  func.func @transform_1(%arg0: i32) -> (i32, i32) {
    %c0_i32 = arith.constant 0 : i32
    %c0_i32_0 = arith.constant 0 : i32
    %c0_i32_1 = arith.constant 0 : i32
    return %c0_i32, %c0_i32_0 : i32, i32
  }
  func.func @transform_2(%arg0: i32) -> (i32, i32) {
    %c0_i32 = arith.constant 0 : i32
    %c0_i32_0 = arith.constant 0 : i32
    %c0_i32_1 = arith.constant 0 : i32
    return %c0_i32, %c0_i32_0 : i32, i32
  }
  func.func @transform_3(%arg0: i32) -> (i32, i32) {
    %c0_i32 = arith.constant 0 : i32
    %c0_i32_0 = arith.constant 0 : i32
    return %arg0, %c0_i32 : i32, i32
  }
}

</mosaic_0001>

<llo_original>
// kernel: transformer_forward.12
$region0: #{transformer_forward.12}
  #allocation0 [shape = 'u32[]', space=smem, size = 0x4, offset = 0x4, fixed_abs, tag = 'smem constant byte address 0x4 - core index']
  #allocation1 [shape = 'u32[144,128]{1,0:T(1,128)}', space=vmem, size = 0x12000, scoped, tag = 'internal scratch']
  %s0 = inlined_call_operand.vmem [shape: bf16[16,32], index: 0, kind: input, shape index: {}]
  %s1 = inlined_call_operand.vmem [shape: bf16[32,64], index: 1, kind: input, shape index: {}]
  %s2 = inlined_call_operand.vmem [shape: f32[1,64], index: 2, kind: input, shape index: {}]
  %s3 = inlined_call_operand.vmem [shape: bf16[64,32], index: 3, kind: input, shape index: {}]
  %s4 = inlined_call_operand.vmem [shape: f32[1,32], index: 4, kind: input, shape index: {}]
  %s5 = inlined_call_operand.vmem [shape: f32[1,32], index: 5, kind: input, shape index: {}]
  %s6 = inlined_call_operand.vmem [shape: f32[1,32], index: 6, kind: input, shape index: {}]
  %s7 = inlined_call_operand.vmem [shape: bf16[16,32], index: 7, kind: output, shape index: {}]
  %s8 = sld [smem:[#allocation0]]
  $region61: #{transformer_forward.12} parent=0
    _
  %s10 = ssub.s32 1, %s8
  %s11 = scalar_select 0, %s10, %s8
  loop: start=0, step=1, limit=4
  $region2: #{transformer_forward.12} parent=0 // loop_pre_header
    _
  $region3: #{transformer_forward.12} parent=0 // loop_header
    %s13 = sphi 0, %s17
    %p14 = scmp.ge.s32.totalorder %s13, 4
    %s23 = sphi 0, %s25
    %s26 = sphi 0, %s23
    %s27 = sphi 0, %s26
    %s43 = sphi 0, %s27
    %s47 = sphi 0, %s47
    %s49 = sphi 0, %s47
    %s50 = sphi 0, %s49
    %s64 = sphi 0, %s50
    %s68 = sphi 0, %s68
    %s70 = sphi 0, %s68
    %s71 = sphi 0, %s70
    %s85 = sphi 0, %s71
    %s89 = sphi 0, %s89
    %s91 = sphi 0, %s89
    %s92 = sphi 0, %s91
    %s106 = sphi 0, %s92
    %s110 = sphi 0, %s110
    %s112 = sphi 0, %s110
    %s113 = sphi 0, %s112
    %s127 = sphi 0, %s113
    %s131 = sphi 0, %s131
    %s133 = sphi 0, %s131
    %s134 = sphi 0, %s133
    %s148 = sphi 0, %s134
    %s152 = sphi 0, %s152
    %s154 = sphi 0, %s152
    %s155 = sphi 0, %s154
    %s169 = sphi 0, %s155
    %s175 = sphi 0, %s177
    %s178 = sphi 0, %s175
    %s179 = sphi 0, %s178
    %s195 = sphi 0, %s179
  $region4: #{transformer_forward.12} parent=0 // loop_header_branch
    %16 = sbr.rel (%p14) target = $region8
  $region5: #{transformer_forward.12} parent=0 // loop_body
    %s18 = ssub.s32 %s13, 1
    %s19 = ssub.s32 %s13, 2
    %s20 = sadd.s32 %s13, 1
    %s21 = ssub.s32 %s13, %s20
    %p22 = scmp.eq.s32.totalorder %s21, 0
    %s24 = sadd.s32 %s23, 1
    %s25 = scalar_select %p22, %s23, %s24
    %p28 = pneg %p22
    %p29 = scmp.eq.s32.totalorder %s13, 1
    %p30 = por %p28, %p29
    %p31 = scmp.ne.s32.totalorder %s23, %s26
    %p32 = scmp.eq.s32.totalorder %s13, 0
    %p33 = por %p31, %p32
    %p34 = scmp.ne.s32.totalorder %s23, %s26
    %p35 = scmp.eq.s32.totalorder %s18, 1
    %p36 = por %p34, %p35
    %p37 = scmp.ne.s32.totalorder %s26, %s27
    %p38 = scmp.eq.s32.totalorder %s18, 0
    %p39 = por %p37, %p38
    %p40 = scmp.ne.s32.totalorder %s26, %s27
    %p41 = scmp.eq.s32.totalorder %s19, 1
    %p42 = por %p40, %p41
    %p44 = scmp.ne.s32.totalorder %s27, %s43
    %p45 = scmp.eq.s32.totalorder %s19, 0
    %p46 = por %p44, %p45
    %s48 = sadd.s32 %s47, 1
    %p51 = scmp.eq.s32.totalorder %s13, 1
    %p52 = scmp.ne.s32.totalorder %s47, %s49
    %p53 = scmp.eq.s32.totalorder %s13, 0
    %p54 = por %p52, %p53
    %p55 = scmp.ne.s32.totalorder %s47, %s49
    %p56 = scmp.eq.s32.totalorder %s18, 1
    %p57 = por %p55, %p56
    %p58 = scmp.ne.s32.totalorder %s49, %s50
    %p59 = scmp.eq.s32.totalorder %s18, 0
    %p60 = por %p58, %p59
    %p61 = scmp.ne.s32.totalorder %s49, %s50
    %p62 = scmp.eq.s32.totalorder %s19, 1
    %p63 = por %p61, %p62
    %p65 = scmp.ne.s32.totalorder %s50, %s64
    %p66 = scmp.eq.s32.totalorder %s19, 0
    %p67 = por %p65, %p66
    %s69 = sadd.s32 %s68, 1
    %p72 = scmp.eq.s32.totalorder %s13, 1
    %p73 = scmp.ne.s32.totalorder %s68, %s70
    %p74 = scmp.eq.s32.totalorder %s13, 0
    %p75 = por %p73, %p74
    %p76 = scmp.ne.s32.totalorder %s68, %s70
    %p77 = scmp.eq.s32.totalorder %s18, 1
    %p78 = por %p76, %p77
    %p79 = scmp.ne.s32.totalorder %s70, %s71
    %p80 = scmp.eq.s32.totalorder %s18, 0
    %p81 = por %p79, %p80
    %p82 = scmp.ne.s32.totalorder %s70, %s71
    %p83 = scmp.eq.s32.totalorder %s19, 1
    %p84 = por %p82, %p83
    %p86 = scmp.ne.s32.totalorder %s71, %s85
    %p87 = scmp.eq.s32.totalorder %s19, 0
    %p88 = por %p86, %p87
    %s90 = sadd.s32 %s89, 1
    %p93 = scmp.eq.s32.totalorder %s13, 1
    %p94 = scmp.ne.s32.totalorder %s89, %s91
    %p95 = scmp.eq.s32.totalorder %s13, 0
    %p96 = por %p94, %p95
    %p97 = scmp.ne.s32.totalorder %s89, %s91
    %p98 = scmp.eq.s32.totalorder %s18, 1
    %p99 = por %p97, %p98
    %p100 = scmp.ne.s32.totalorder %s91, %s92
    %p101 = scmp.eq.s32.totalorder %s18, 0
    %p102 = por %p100, %p101
    %p103 = scmp.ne.s32.totalorder %s91, %s92
    %p104 = scmp.eq.s32.totalorder %s19, 1
    %p105 = por %p103, %p104
    %p107 = scmp.ne.s32.totalorder %s92, %s106
    %p108 = scmp.eq.s32.totalorder %s19, 0
    %p109 = por %p107, %p108
    %s111 = sadd.s32 %s110, 1
    %p114 = scmp.eq.s32.totalorder %s13, 1
    %p115 = scmp.ne.s32.totalorder %s110, %s112
    %p116 = scmp.eq.s32.totalorder %s13, 0
    %p117 = por %p115, %p116
    %p118 = scmp.ne.s32.totalorder %s110, %s112
    %p119 = scmp.eq.s32.totalorder %s18, 1
    %p120 = por %p118, %p119
    %p121 = scmp.ne.s32.totalorder %s112, %s113
    %p122 = scmp.eq.s32.totalorder %s18, 0
    %p123 = por %p121, %p122
    %p124 = scmp.ne.s32.totalorder %s112, %s113
    %p125 = scmp.eq.s32.totalorder %s19, 1
    %p126 = por %p124, %p125
    %p128 = scmp.ne.s32.totalorder %s113, %s127
    %p129 = scmp.eq.s32.totalorder %s19, 0
    %p130 = por %p128, %p129
    %s132 = sadd.s32 %s131, 1
    %p135 = scmp.eq.s32.totalorder %s13, 1
    %p136 = scmp.ne.s32.totalorder %s131, %s133
    %p137 = scmp.eq.s32.totalorder %s13, 0
    %p138 = por %p136, %p137
    %p139 = scmp.ne.s32.totalorder %s131, %s133
    %p140 = scmp.eq.s32.totalorder %s18, 1
    %p141 = por %p139, %p140
    %p142 = scmp.ne.s32.totalorder %s133, %s134
    %p143 = scmp.eq.s32.totalorder %s18, 0
    %p144 = por %p142, %p143
    %p145 = scmp.ne.s32.totalorder %s133, %s134
    %p146 = scmp.eq.s32.totalorder %s19, 1
    %p147 = por %p145, %p146
    %p149 = scmp.ne.s32.totalorder %s134, %s148
    %p150 = scmp.eq.s32.totalorder %s19, 0
    %p151 = por %p149, %p150
    %s153 = sadd.s32 %s152, 1
    %p156 = scmp.eq.s32.totalorder %s13, 1
    %p157 = scmp.ne.s32.totalorder %s152, %s154
    %p158 = scmp.eq.s32.totalorder %s13, 0
    %p159 = por %p157, %p158
    %p160 = scmp.ne.s32.totalorder %s152, %s154
    %p161 = scmp.eq.s32.totalorder %s18, 1
    %p162 = por %p160, %p161
    %p163 = scmp.ne.s32.totalorder %s154, %s155
    %p164 = scmp.eq.s32.totalorder %s18, 0
    %p165 = por %p163, %p164
    %p166 = scmp.ne.s32.totalorder %s154, %s155
    %p167 = scmp.eq.s32.totalorder %s19, 1
    %p168 = por %p166, %p167
    %p170 = scmp.ne.s32.totalorder %s155, %s169
    %p171 = scmp.eq.s32.totalorder %s19, 0
    %p172 = por %p170, %p171
    %s173 = ssub.s32 %s13, %s20
    %p174 = scmp.eq.s32.totalorder %s173, 0
    %s176 = sadd.s32 %s175, 1
    %s177 = scalar_select %p174, %s175, %s176
    %p180 = pneg %p174
    %p181 = scmp.eq.s32.totalorder %s13, 1
    %p182 = por %p180, %p181
    %p183 = scmp.ne.s32.totalorder %s175, %s178
    %p184 = scmp.eq.s32.totalorder %s13, 0
    %p185 = por %p183, %p184
    %p186 = scmp.ne.s32.totalorder %s175, %s178
    %p187 = scmp.eq.s32.totalorder %s18, 1
    %p188 = por %p186, %p187
    %p189 = scmp.ne.s32.totalorder %s178, %s179
    %p190 = scmp.eq.s32.totalorder %s18, 0
    %p191 = por %p189, %p190
    %p192 = scmp.ne.s32.totalorder %s178, %s179
    %p193 = scmp.eq.s32.totalorder %s19, 1
    %p194 = por %p192, %p193
    %p196 = scmp.ne.s32.totalorder %s179, %s195
    %p197 = scmp.eq.s32.totalorder %s19, 0
    %p198 = por %p196, %p197
    %p199 = scmp.le.s32.totalorder 1, %s13
    %p200 = scmp.lt.s32.totalorder %s13, 3
    %p201 = pnand %p199, %p200
    %p202 = pneg %p201
    // Predicated region
    $region9: #{transformer_forward.12} parent=5 // pred_check
      _
    $region10: #{transformer_forward.12} parent=5 // pred_check_branch
      %204 = sbr.rel (%p201) target = $region12
    $region11: #{transformer_forward.12} parent=5 // pred_region
      %s205 = ssub.s32 %s13, 1
      // Predicated region
      $region13: #{transformer_forward.12} parent=11 // pred_check
        %p206 = pneg %p60
      $region14: #{transformer_forward.12} parent=11 // pred_check_branch
        %208 = sbr.rel (%p206) target = $region16
      $region15: #{transformer_forward.12} parent=11 // pred_region
        _
      $region16: #{transformer_forward.12} parent=11 // pred_fallthru
        _
      // Predicated region
      $region17: #{transformer_forward.12} parent=11 // pred_check
        %p209 = pneg %p81
      $region18: #{transformer_forward.12} parent=11 // pred_check_branch
        %211 = sbr.rel (%p209) target = $region20
      $region19: #{transformer_forward.12} parent=11 // pred_region
        _
      $region20: #{transformer_forward.12} parent=11 // pred_fallthru
        _
      // Predicated region
      $region21: #{transformer_forward.12} parent=11 // pred_check
        %p212 = pneg %p102
      $region22: #{transformer_forward.12} parent=11 // pred_check_branch
        %214 = sbr.rel (%p212) target = $region24
      $region23: #{transformer_forward.12} parent=11 // pred_region
        _
      $region24: #{transformer_forward.12} parent=11 // pred_fallthru
        _
      // Predicated region
      $region25: #{transformer_forward.12} parent=11 // pred_check
        %p215 = pneg %p123
      $region26: #{transformer_forward.12} parent=11 // pred_check_branch
        %217 = sbr.rel (%p215) target = $region28
      $region27: #{transformer_forward.12} parent=11 // pred_region
        _
      $region28: #{transformer_forward.12} parent=11 // pred_fallthru
        _
      // Predicated region
      $region29: #{transformer_forward.12} parent=11 // pred_check
        %p218 = pneg %p144
      $region30: #{transformer_forward.12} parent=11 // pred_check_branch
        %220 = sbr.rel (%p218) target = $region32
      $region31: #{transformer_forward.12} parent=11 // pred_region
        _
      $region32: #{transformer_forward.12} parent=11 // pred_fallthru
        _
      // Predicated region
      $region33: #{transformer_forward.12} parent=11 // pred_check
        %p221 = pneg %p165
      $region34: #{transformer_forward.12} parent=11 // pred_check_branch
        %223 = sbr.rel (%p221) target = $region36
      $region35: #{transformer_forward.12} parent=11 // pred_region
        _
      $region36: #{transformer_forward.12} parent=11 // pred_fallthru
        _
    $region12: #{transformer_forward.12} parent=5 // pred_fallthru
      _
    %p224 = scmp.lt.s32.totalorder %s13, 2
    // Predicated region
    $region37: #{transformer_forward.12} parent=5 // pred_check
      %p225 = pneg %p224
    $region38: #{transformer_forward.12} parent=5 // pred_check_branch
      %227 = sbr.rel (%p225) target = $region40
    $region39: #{transformer_forward.12} parent=5 // pred_region
      // Predicated region
      $region41: #{transformer_forward.12} parent=39 // pred_check
        %p228 = pneg %p33
      $region42: #{transformer_forward.12} parent=39 // pred_check_branch
        %230 = sbr.rel (%p228) target = $region44
      $region43: #{transformer_forward.12} parent=39 // pred_region
        %p231 = scmp.lt.s32.totalorder %s13, 1
        %s232 = scalar_select %p231, %s13, 1
        %s233 = smul.addr %s232, 4
        %s234 = scalar_lea.vmem %s0, %s233
      $region44: #{transformer_forward.12} parent=39 // pred_fallthru
        _
    $region40: #{transformer_forward.12} parent=5 // pred_fallthru
      _
    %p235 = scmp.le.s32.totalorder 1, %s13
    %p236 = scmp.lt.s32.totalorder %s13, 3
    %p237 = pnand %p235, %p236
    %p238 = pneg %p237
    // Predicated region
    $region45: #{transformer_forward.12} parent=5 // pred_check
      _
    $region46: #{transformer_forward.12} parent=5 // pred_check_branch
      %240 = sbr.rel (%p237) target = $region48
    $region47: #{transformer_forward.12} parent=5 // pred_region
      %s241 = ssub.s32 %s13, 1
      %p242 = scmp.lt.s32.totalorder %s18, 1
      %s243 = scalar_select %p242, %s18, 1
      %s244 = smul.addr %s243, 4
      %s245 = scalar_lea.vmem %s0, %s244
      %p246 = pneg %p39
      %p247 = pneg %p36
      %p248 = pneg %p60
      %p249 = pneg %p57
      %p250 = pneg %p81
      %p251 = pneg %p78
      %p252 = pneg %p102
      %p253 = pneg %p99
      %p254 = pneg %p123
      %p255 = pneg %p120
      %p256 = pneg %p144
      %p257 = pneg %p141
      %p258 = pneg %p165
      %p259 = pneg %p162
      %p260 = pneg %p191
      %p261 = pneg %p188
      %p262 = scmp.lt.s32.totalorder %s18, 1
      %s263 = scalar_select %p262, %s18, 1
      %s264 = smul.addr %s263, 4
      %s265 = scalar_lea.vmem %s7, %s264
      %p266 = scmp.lt.s32.totalorder %s18, 1
      %s267 = scalar_select %p266, %s18, 1
      %s268 = smul.addr %s267, 4
      %s269 = scalar_lea.vmem %s0, %s268
      %p270 = scmp.lt.s32.totalorder %s18, 1
      %s271 = scalar_select %p270, %s18, 1
      %s272 = smul.addr %s271, 4
      %s273 = scalar_lea.vmem %s7, %s272
      %v275 = vld [vmem:[%s269] sm:$0xf]
      %v276 = vld [vmem:[%s1] sm:$0xf]
      %v277 = vld [vmem:[%s1 + $0x4] sm:$0xf]
      %v278 = vld [vmem:[%s1 + $0x8] sm:$0xf]
      %v279 = vld [vmem:[%s1 + $0xc] sm:$0xf]
      %v280 = vld [vmem:[%s2] sm:$0x1]
      %v282 = vlaneseq
      %v283 = vshrl.u32 %v282, 7
      %v284 = vsub.s32 0, %v283
      %v285 = vrot.slane %v280, %v284
      %v291 = vunpack.c.l.b16 %v276
      %v292 = vunpack.c.l.b16 %v277
      %v293 = vunpack.c.l.b16 %v278
      %v294 = vunpack.c.l.b16 %v279
      %v295 = vpack.c.b16 %v292, %v291
      %v296 = vpack.c.b16 %v294, %v293
      %vm299 = vcmask 261120
      %v301 = vsel %vm299, %v275, 0
      %303 = vmatprep.subr.bf16.mxu0 0
      %304 = vmatpush1.bf16.msra.mxu0 %v295
      %305 = vmatprep.subr.bf16.mxu0 0
      %306 = vmatpush1.bf16.msra.mxu0 %v296
      %307 = vmatprep.subr.bf16.mxu0 0
      %308 = vmatpush1.bf16.msra.mxu0 0
      %309 = vmatprep.subr.bf16.mxu0 0
      %310 = vmatpush1.bf16.msra.mxu0 0
      %311 = vmatprep.subr.bf16.mxu0 0
      %312 = vmatpush1.bf16.msra.mxu0 0
      %313 = vmatprep.subr.bf16.mxu0 0
      %314 = vmatpush1.bf16.msra.mxu0 0
      %315 = vmatprep.subr.bf16.mxu0 0
      %316 = vmatpush1.bf16.msra.mxu0 0
      %317 = vmatprep.subr.bf16.mxu0 0
      %318 = vmatpush1.bf16.msra.mxu0 0
      %319 = vmatprep.subr.bf16.mxu0 0
      %320 = vmatpush1.bf16.msra.mxu0 0
      %321 = vmatprep.subr.bf16.mxu0 0
      %322 = vmatpush1.bf16.msra.mxu0 0
      %323 = vmatprep.subr.bf16.mxu0 0
      %324 = vmatpush1.bf16.msra.mxu0 0
      %325 = vmatprep.subr.bf16.mxu0 0
      %326 = vmatpush1.bf16.msra.mxu0 0
      %327 = vmatprep.subr.bf16.mxu0 0
      %328 = vmatpush1.bf16.msra.mxu0 0
      %329 = vmatprep.subr.bf16.mxu0 0
      %330 = vmatpush1.bf16.msra.mxu0 0
      %331 = vmatprep.subr.bf16.mxu0 0
      %332 = vmatpush1.bf16.msra.mxu0 0
      %333 = vmatprep.subr.bf16.mxu0 0
      %334 = vmatpush1.bf16.msra.mxu0 0
      %335 = vmatprep.mubr.bf16.mxu0 0
      %336 = vmatmul.mubr.bf16.gmra.mrb[0].mxu0 %v301
      %v337 = vpop.f32.mrb[0].mxu0
      %v338 = vadd.f32 %v285, %v337
      %v339 = vpop.f32.mrb[0].mxu0
      %v340 = vpop.f32.mrb[0].mxu0
      %v341 = vpop.f32.mrb[0].mxu0
      %342 = vdwg.mxu0
      %v343 = vmax.f32 %v338, 0.0
      %v344 = vpack.c.bf16 %v343, %v343
      %v345 = vld [vmem:[%s3] sm:$0xf]
      %v346 = vld [vmem:[%s3 + $0x4] sm:$0xf]
      %v347 = vld [vmem:[%s3 + $0x8] sm:$0xf]
      %v348 = vld [vmem:[%s3 + $0xc] sm:$0xf]
      %v349 = vld [vmem:[%s3 + $0x10] sm:$0xf]
      %v350 = vld [vmem:[%s3 + $0x14] sm:$0xf]
      %v351 = vld [vmem:[%s3 + $0x18] sm:$0xf]
      %v352 = vld [vmem:[%s3 + $0x1c] sm:$0xf]
      %v353 = vld [vmem:[%s4] sm:$0x1]
      %v355 = vlaneseq
      %v356 = vshrl.u32 %v355, 7
      %v357 = vsub.s32 0, %v356
      %v358 = vrot.slane %v353, %v357
      %v368 = vunpack.c.l.b16 %v345
      %v369 = vunpack.c.l.b16 %v346
      %v370 = vunpack.c.l.b16 %v347
      %v371 = vunpack.c.l.b16 %v348
      %v372 = vunpack.c.l.b16 %v349
      %v373 = vunpack.c.l.b16 %v350
      %v374 = vunpack.c.l.b16 %v351
      %v375 = vunpack.c.l.b16 %v352
      %v376 = vpack.c.b16 %v369, %v368
      %v377 = vpack.c.b16 %v371, %v370
      %v378 = vpack.c.b16 %v373, %v372
      %v379 = vpack.c.b16 %v375, %v374
      %vm384 = vcmask 523264
      %v386 = vsel %vm384, %v344, 0
      %388 = vmatprep.subr.bf16.mxu0 0
      %389 = vmatpush1.bf16.msra.mxu0 %v376
      %390 = vmatprep.subr.bf16.mxu0 0
      %391 = vmatpush1.bf16.msra.mxu0 %v377
      %392 = vmatprep.subr.bf16.mxu0 0
      %393 = vmatpush1.bf16.msra.mxu0 %v378
      %394 = vmatprep.subr.bf16.mxu0 0
      %395 = vmatpush1.bf16.msra.mxu0 %v379
      %396 = vmatprep.subr.bf16.mxu0 0
      %397 = vmatpush1.bf16.msra.mxu0 0
      %398 = vmatprep.subr.bf16.mxu0 0
      %399 = vmatpush1.bf16.msra.mxu0 0
      %400 = vmatprep.subr.bf16.mxu0 0
      %401 = vmatpush1.bf16.msra.mxu0 0
      %402 = vmatprep.subr.bf16.mxu0 0
      %403 = vmatpush1.bf16.msra.mxu0 0
      %404 = vmatprep.subr.bf16.mxu0 0
      %405 = vmatpush1.bf16.msra.mxu0 0
      %406 = vmatprep.subr.bf16.mxu0 0
      %407 = vmatpush1.bf16.msra.mxu0 0
      %408 = vmatprep.subr.bf16.mxu0 0
      %409 = vmatpush1.bf16.msra.mxu0 0
      %410 = vmatprep.subr.bf16.mxu0 0
      %411 = vmatpush1.bf16.msra.mxu0 0
      %412 = vmatprep.subr.bf16.mxu0 0
      %413 = vmatpush1.bf16.msra.mxu0 0
      %414 = vmatprep.subr.bf16.mxu0 0
      %415 = vmatpush1.bf16.msra.mxu0 0
      %416 = vmatprep.subr.bf16.mxu0 0
      %417 = vmatpush1.bf16.msra.mxu0 0
      %418 = vmatprep.subr.bf16.mxu0 0
      %419 = vmatpush1.bf16.msra.mxu0 0
      %420 = vmatprep.mubr.bf16.mxu0 0
      %421 = vmatmul.mubr.bf16.gmra.mrb[0].mxu0 %v386
      %v422 = vpop.f32.mrb[0].mxu0
      %v423 = vadd.f32 %v358, %v422
      %v424 = vpop.f32.mrb[0].mxu0
      %v425 = vpop.f32.mrb[0].mxu0
      %v426 = vpop.f32.mrb[0].mxu0
      %427 = vdwg.mxu0
      %v428 = vunpack.c.l.bf16 %v275
      %v429 = vadd.f32 %v423, %v428
      %v430 = vsel %vm299, %v429, 0.0
      %431 = vadd.xlane.f32.xlu0 %v430
      %v432 = vpop.xlane.xlu0 %431
      %v433 = vrcp.pop 32.0
      %v434 = vmul.f32 %v432, %v433
      %v435 = vsub.f32 %v429, %v434
      %v436 = vmul.f32 %v435, %v435
      %v437 = vsel %vm299, %v436, 0.0
      %438 = vadd.xlane.f32.xlu0 %v437
      %v439 = vpop.xlane.xlu0 %438
      %v440 = vmul.f32 %v439, %v433
      %v441 = vadd.f32 %v440, 1e-05
      %v442 = vrsqrt.pop %v441
      %v443 = vmul.f32 %v435, %v442
      %v444 = vld [vmem:[%s5] sm:$0x1]
      %v446 = vlaneseq
      %v447 = vshrl.u32 %v446, 7
      %v448 = vsub.s32 0, %v447
      %v449 = vrot.slane %v444, %v448
      %v451 = vmul.f32 %v443, %v449
      %v452 = vld [vmem:[%s6] sm:$0x1]
      %v454 = vlaneseq
      %v455 = vshrl.u32 %v454, 7
      %v456 = vsub.s32 0, %v455
      %v457 = vrot.slane %v452, %v456
      %v459 = vadd.f32 %v451, %v457
      %v460 = vpack.c.bf16 %v459, %v459
      %vm461 = vcmask 257024
      %462 = vst.msk [vmem:[%s273] sm:$0xf] %vm461, %v460
      %p463 = scmp.lt.s32.totalorder %s18, 1
      %s464 = scalar_select %p463, %s18, 1
      %s465 = smul.addr %s464, 4
      %s466 = scalar_lea.vmem %s7, %s465
      // Predicated region
      $region49: #{transformer_forward.12} parent=47 // pred_check
        %p467 = pneg %p188
      $region50: #{transformer_forward.12} parent=47 // pred_check_branch
        %469 = sbr.rel (%p467) target = $region52
      $region51: #{transformer_forward.12} parent=47 // pred_region
        _
      $region52: #{transformer_forward.12} parent=47 // pred_fallthru
        _
    $region48: #{transformer_forward.12} parent=5 // pred_fallthru
      _
    %p470 = scmp.le.s32.totalorder 2, %s13
    // Predicated region
    $region53: #{transformer_forward.12} parent=5 // pred_check
      %p471 = pneg %p470
    $region54: #{transformer_forward.12} parent=5 // pred_check_branch
      %473 = sbr.rel (%p471) target = $region56
    $region55: #{transformer_forward.12} parent=5 // pred_region
      %s474 = ssub.s32 %s13, 2
      // Predicated region
      $region57: #{transformer_forward.12} parent=55 // pred_check
        %p475 = pneg %p194
      $region58: #{transformer_forward.12} parent=55 // pred_check_branch
        %477 = sbr.rel (%p475) target = $region60
      $region59: #{transformer_forward.12} parent=55 // pred_region
        %p478 = scmp.lt.s32.totalorder %s19, 1
        %s479 = scalar_select %p478, %s19, 1
        %s480 = smul.addr %s479, 4
        %s481 = scalar_lea.vmem %s7, %s480
      $region60: #{transformer_forward.12} parent=55 // pred_fallthru
        _
    $region56: #{transformer_forward.12} parent=5 // pred_fallthru
      _
  $region6: #{transformer_forward.12} parent=0 // loop_footer
    %s17 = sadd.s32 1, %s13
  $region7: #{transformer_forward.12} parent=0 // loop_footer_branch
    %12 = sbr.rel target = $region3
  $region8: #{transformer_forward.12} parent=0 // loop_exit
    _

// kernel: transformer_forward.11
$region0: #{transformer_forward.11}
  #allocation0 [shape = 'u32[]', space=smem, size = 0x4, offset = 0x4, fixed_abs, tag = 'smem constant byte address 0x4 - core index']
  #allocation1 [shape = 'u32[144,128]{1,0:T(1,128)}', space=vmem, size = 0x12000, scoped, tag = 'internal scratch']
  %s0 = inlined_call_operand.vmem [shape: bf16[2,8,32], index: 0, kind: input, shape index: {}]
  %s1 = inlined_call_operand.vmem [shape: bf16[32,96], index: 1, kind: input, shape index: {}]
  %s2 = inlined_call_operand.vmem [shape: f32[1,96], index: 2, kind: input, shape index: {}]
  %s3 = inlined_call_operand.vmem [shape: bf16[32,32], index: 3, kind: input, shape index: {}]
  %s4 = inlined_call_operand.vmem [shape: f32[1,32], index: 4, kind: input, shape index: {}]
  %s5 = inlined_call_operand.vmem [shape: f32[1,32], index: 5, kind: input, shape index: {}]
  %s6 = inlined_call_operand.vmem [shape: f32[1,32], index: 6, kind: input, shape index: {}]
  %s7 = inlined_call_operand.vmem [shape: bf16[2,8,32], index: 7, kind: output, shape index: {}]
  %s8 = sld [smem:[#allocation0]]
  $region61: #{transformer_forward.11} parent=0
    _
  %s10 = ssub.s32 1, %s8
  %s11 = scalar_select 0, %s10, %s8
  loop: start=0, step=1, limit=4
  $region2: #{transformer_forward.11} parent=0 // loop_pre_header
    _
  $region3: #{transformer_forward.11} parent=0 // loop_header
    %s13 = sphi 0, %s17
    %p14 = scmp.ge.s32.totalorder %s13, 4
    %s23 = sphi 0, %s25
    %s26 = sphi 0, %s23
    %s27 = sphi 0, %s26
    %s43 = sphi 0, %s27
    %s47 = sphi 0, %s47
    %s49 = sphi 0, %s47
    %s50 = sphi 0, %s49
    %s64 = sphi 0, %s50
    %s68 = sphi 0, %s68
    %s70 = sphi 0, %s68
    %s71 = sphi 0, %s70
    %s85 = sphi 0, %s71
    %s89 = sphi 0, %s89
    %s91 = sphi 0, %s89
    %s92 = sphi 0, %s91
    %s106 = sphi 0, %s92
    %s110 = sphi 0, %s110
    %s112 = sphi 0, %s110
    %s113 = sphi 0, %s112
    %s127 = sphi 0, %s113
    %s131 = sphi 0, %s131
    %s133 = sphi 0, %s131
    %s134 = sphi 0, %s133
    %s148 = sphi 0, %s134
    %s152 = sphi 0, %s152
    %s154 = sphi 0, %s152
    %s155 = sphi 0, %s154
    %s169 = sphi 0, %s155
    %s175 = sphi 0, %s177
    %s178 = sphi 0, %s175
    %s179 = sphi 0, %s178
    %s195 = sphi 0, %s179
  $region4: #{transformer_forward.11} parent=0 // loop_header_branch
    %16 = sbr.rel (%p14) target = $region8
  $region5: #{transformer_forward.11} parent=0 // loop_body
    %s18 = ssub.s32 %s13, 1
    %s19 = ssub.s32 %s13, 2
    %s20 = sadd.s32 %s13, 1
    %s21 = ssub.s32 %s13, %s20
    %p22 = scmp.eq.s32.totalorder %s21, 0
    %s24 = sadd.s32 %s23, 1
    %s25 = scalar_select %p22, %s23, %s24
    %p28 = pneg %p22
    %p29 = scmp.eq.s32.totalorder %s13, 1
    %p30 = por %p28, %p29
    %p31 = scmp.ne.s32.totalorder %s23, %s26
    %p32 = scmp.eq.s32.totalorder %s13, 0
    %p33 = por %p31, %p32
    %p34 = scmp.ne.s32.totalorder %s23, %s26
    %p35 = scmp.eq.s32.totalorder %s18, 1
    %p36 = por %p34, %p35
    %p37 = scmp.ne.s32.totalorder %s26, %s27
    %p38 = scmp.eq.s32.totalorder %s18, 0
    %p39 = por %p37, %p38
    %p40 = scmp.ne.s32.totalorder %s26, %s27
    %p41 = scmp.eq.s32.totalorder %s19, 1
    %p42 = por %p40, %p41
    %p44 = scmp.ne.s32.totalorder %s27, %s43
    %p45 = scmp.eq.s32.totalorder %s19, 0
    %p46 = por %p44, %p45
    %s48 = sadd.s32 %s47, 1
    %p51 = scmp.eq.s32.totalorder %s13, 1
    %p52 = scmp.ne.s32.totalorder %s47, %s49
    %p53 = scmp.eq.s32.totalorder %s13, 0
    %p54 = por %p52, %p53
    %p55 = scmp.ne.s32.totalorder %s47, %s49
    %p56 = scmp.eq.s32.totalorder %s18, 1
    %p57 = por %p55, %p56
    %p58 = scmp.ne.s32.totalorder %s49, %s50
    %p59 = scmp.eq.s32.totalorder %s18, 0
    %p60 = por %p58, %p59
    %p61 = scmp.ne.s32.totalorder %s49, %s50
    %p62 = scmp.eq.s32.totalorder %s19, 1
    %p63 = por %p61, %p62
    %p65 = scmp.ne.s32.totalorder %s50, %s64
    %p66 = scmp.eq.s32.totalorder %s19, 0
    %p67 = por %p65, %p66
    %s69 = sadd.s32 %s68, 1
    %p72 = scmp.eq.s32.totalorder %s13, 1
    %p73 = scmp.ne.s32.totalorder %s68, %s70
    %p74 = scmp.eq.s32.totalorder %s13, 0
    %p75 = por %p73, %p74
    %p76 = scmp.ne.s32.totalorder %s68, %s70
    %p77 = scmp.eq.s32.totalorder %s18, 1
    %p78 = por %p76, %p77
    %p79 = scmp.ne.s32.totalorder %s70, %s71
    %p80 = scmp.eq.s32.totalorder %s18, 0
    %p81 = por %p79, %p80
    %p82 = scmp.ne.s32.totalorder %s70, %s71
    %p83 = scmp.eq.s32.totalorder %s19, 1
    %p84 = por %p82, %p83
    %p86 = scmp.ne.s32.totalorder %s71, %s85
    %p87 = scmp.eq.s32.totalorder %s19, 0
    %p88 = por %p86, %p87
    %s90 = sadd.s32 %s89, 1
    %p93 = scmp.eq.s32.totalorder %s13, 1
    %p94 = scmp.ne.s32.totalorder %s89, %s91
    %p95 = scmp.eq.s32.totalorder %s13, 0
    %p96 = por %p94, %p95
    %p97 = scmp.ne.s32.totalorder %s89, %s91
    %p98 = scmp.eq.s32.totalorder %s18, 1
    %p99 = por %p97, %p98
    %p100 = scmp.ne.s32.totalorder %s91, %s92
    %p101 = scmp.eq.s32.totalorder %s18, 0
    %p102 = por %p100, %p101
    %p103 = scmp.ne.s32.totalorder %s91, %s92
    %p104 = scmp.eq.s32.totalorder %s19, 1
    %p105 = por %p103, %p104
    %p107 = scmp.ne.s32.totalorder %s92, %s106
    %p108 = scmp.eq.s32.totalorder %s19, 0
    %p109 = por %p107, %p108
    %s111 = sadd.s32 %s110, 1
    %p114 = scmp.eq.s32.totalorder %s13, 1
    %p115 = scmp.ne.s32.totalorder %s110, %s112
    %p116 = scmp.eq.s32.totalorder %s13, 0
    %p117 = por %p115, %p116
    %p118 = scmp.ne.s32.totalorder %s110, %s112
    %p119 = scmp.eq.s32.totalorder %s18, 1
    %p120 = por %p118, %p119
    %p121 = scmp.ne.s32.totalorder %s112, %s113
    %p122 = scmp.eq.s32.totalorder %s18, 0
    %p123 = por %p121, %p122
    %p124 = scmp.ne.s32.totalorder %s112, %s113
    %p125 = scmp.eq.s32.totalorder %s19, 1
    %p126 = por %p124, %p125
    %p128 = scmp.ne.s32.totalorder %s113, %s127
    %p129 = scmp.eq.s32.totalorder %s19, 0
    %p130 = por %p128, %p129
    %s132 = sadd.s32 %s131, 1
    %p135 = scmp.eq.s32.totalorder %s13, 1
    %p136 = scmp.ne.s32.totalorder %s131, %s133
    %p137 = scmp.eq.s32.totalorder %s13, 0
    %p138 = por %p136, %p137
    %p139 = scmp.ne.s32.totalorder %s131, %s133
    %p140 = scmp.eq.s32.totalorder %s18, 1
    %p141 = por %p139, %p140
    %p142 = scmp.ne.s32.totalorder %s133, %s134
    %p143 = scmp.eq.s32.totalorder %s18, 0
    %p144 = por %p142, %p143
    %p145 = scmp.ne.s32.totalorder %s133, %s134
    %p146 = scmp.eq.s32.totalorder %s19, 1
    %p147 = por %p145, %p146
    %p149 = scmp.ne.s32.totalorder %s134, %s148
    %p150 = scmp.eq.s32.totalorder %s19, 0
    %p151 = por %p149, %p150
    %s153 = sadd.s32 %s152, 1
    %p156 = scmp.eq.s32.totalorder %s13, 1
    %p157 = scmp.ne.s32.totalorder %s152, %s154
    %p158 = scmp.eq.s32.totalorder %s13, 0
    %p159 = por %p157, %p158
    %p160 = scmp.ne.s32.totalorder %s152, %s154
    %p161 = scmp.eq.s32.totalorder %s18, 1
    %p162 = por %p160, %p161
    %p163 = scmp.ne.s32.totalorder %s154, %s155
    %p164 = scmp.eq.s32.totalorder %s18, 0
    %p165 = por %p163, %p164
    %p166 = scmp.ne.s32.totalorder %s154, %s155
    %p167 = scmp.eq.s32.totalorder %s19, 1
    %p168 = por %p166, %p167
    %p170 = scmp.ne.s32.totalorder %s155, %s169
    %p171 = scmp.eq.s32.totalorder %s19, 0
    %p172 = por %p170, %p171
    %s173 = ssub.s32 %s13, %s20
    %p174 = scmp.eq.s32.totalorder %s173, 0
    %s176 = sadd.s32 %s175, 1
    %s177 = scalar_select %p174, %s175, %s176
    %p180 = pneg %p174
    %p181 = scmp.eq.s32.totalorder %s13, 1
    %p182 = por %p180, %p181
    %p183 = scmp.ne.s32.totalorder %s175, %s178
    %p184 = scmp.eq.s32.totalorder %s13, 0
    %p185 = por %p183, %p184
    %p186 = scmp.ne.s32.totalorder %s175, %s178
    %p187 = scmp.eq.s32.totalorder %s18, 1
    %p188 = por %p186, %p187
    %p189 = scmp.ne.s32.totalorder %s178, %s179
    %p190 = scmp.eq.s32.totalorder %s18, 0
    %p191 = por %p189, %p190
    %p192 = scmp.ne.s32.totalorder %s178, %s179
    %p193 = scmp.eq.s32.totalorder %s19, 1
    %p194 = por %p192, %p193
    %p196 = scmp.ne.s32.totalorder %s179, %s195
    %p197 = scmp.eq.s32.totalorder %s19, 0
    %p198 = por %p196, %p197
    %p199 = scmp.le.s32.totalorder 1, %s13
    %p200 = scmp.lt.s32.totalorder %s13, 3
    %p201 = pnand %p199, %p200
    %p202 = pneg %p201
    // Predicated region
    $region9: #{transformer_forward.11} parent=5 // pred_check
      _
    $region10: #{transformer_forward.11} parent=5 // pred_check_branch
      %204 = sbr.rel (%p201) target = $region12
    $region11: #{transformer_forward.11} parent=5 // pred_region
      %s205 = ssub.s32 %s13, 1
      // Predicated region
      $region13: #{transformer_forward.11} parent=11 // pred_check
        %p206 = pneg %p60
      $region14: #{transformer_forward.11} parent=11 // pred_check_branch
        %208 = sbr.rel (%p206) target = $region16
      $region15: #{transformer_forward.11} parent=11 // pred_region
        _
      $region16: #{transformer_forward.11} parent=11 // pred_fallthru
        _
      // Predicated region
      $region17: #{transformer_forward.11} parent=11 // pred_check
        %p209 = pneg %p81
      $region18: #{transformer_forward.11} parent=11 // pred_check_branch
        %211 = sbr.rel (%p209) target = $region20
      $region19: #{transformer_forward.11} parent=11 // pred_region
        _
      $region20: #{transformer_forward.11} parent=11 // pred_fallthru
        _
      // Predicated region
      $region21: #{transformer_forward.11} parent=11 // pred_check
        %p212 = pneg %p102
      $region22: #{transformer_forward.11} parent=11 // pred_check_branch
        %214 = sbr.rel (%p212) target = $region24
      $region23: #{transformer_forward.11} parent=11 // pred_region
        _
      $region24: #{transformer_forward.11} parent=11 // pred_fallthru
        _
      // Predicated region
      $region25: #{transformer_forward.11} parent=11 // pred_check
        %p215 = pneg %p123
      $region26: #{transformer_forward.11} parent=11 // pred_check_branch
        %217 = sbr.rel (%p215) target = $region28
      $region27: #{transformer_forward.11} parent=11 // pred_region
        _
      $region28: #{transformer_forward.11} parent=11 // pred_fallthru
        _
      // Predicated region
      $region29: #{transformer_forward.11} parent=11 // pred_check
        %p218 = pneg %p144
      $region30: #{transformer_forward.11} parent=11 // pred_check_branch
        %220 = sbr.rel (%p218) target = $region32
      $region31: #{transformer_forward.11} parent=11 // pred_region
        _
      $region32: #{transformer_forward.11} parent=11 // pred_fallthru
        _
      // Predicated region
      $region33: #{transformer_forward.11} parent=11 // pred_check
        %p221 = pneg %p165
      $region34: #{transformer_forward.11} parent=11 // pred_check_branch
        %223 = sbr.rel (%p221) target = $region36
      $region35: #{transformer_forward.11} parent=11 // pred_region
        _
      $region36: #{transformer_forward.11} parent=11 // pred_fallthru
        _
    $region12: #{transformer_forward.11} parent=5 // pred_fallthru
      _
    %p224 = scmp.lt.s32.totalorder %s13, 2
    // Predicated region
    $region37: #{transformer_forward.11} parent=5 // pred_check
      %p225 = pneg %p224
    $region38: #{transformer_forward.11} parent=5 // pred_check_branch
      %227 = sbr.rel (%p225) target = $region40
    $region39: #{transformer_forward.11} parent=5 // pred_region
      // Predicated region
      $region41: #{transformer_forward.11} parent=39 // pred_check
        %p228 = pneg %p33
      $region42: #{transformer_forward.11} parent=39 // pred_check_branch
        %230 = sbr.rel (%p228) target = $region44
      $region43: #{transformer_forward.11} parent=39 // pred_region
        %p231 = scmp.lt.s32.totalorder %s13, 1
        %s232 = scalar_select %p231, %s13, 1
        %s233 = smul.addr %s232, 4
        %s234 = scalar_lea.vmem %s0, %s233
      $region44: #{transformer_forward.11} parent=39 // pred_fallthru
        _
    $region40: #{transformer_forward.11} parent=5 // pred_fallthru
      _
    %p235 = scmp.le.s32.totalorder 1, %s13
    %p236 = scmp.lt.s32.totalorder %s13, 3
    %p237 = pnand %p235, %p236
    %p238 = pneg %p237
    // Predicated region
    $region45: #{transformer_forward.11} parent=5 // pred_check
      _
    $region46: #{transformer_forward.11} parent=5 // pred_check_branch
      %240 = sbr.rel (%p237) target = $region48
    $region47: #{transformer_forward.11} parent=5 // pred_region
      %s241 = ssub.s32 %s13, 1
      %p242 = scmp.lt.s32.totalorder %s18, 1
      %s243 = scalar_select %p242, %s18, 1
      %s244 = smul.addr %s243, 4
      %s245 = scalar_lea.vmem %s0, %s244
      %p246 = pneg %p39
      %p247 = pneg %p36
      %p248 = pneg %p60
      %p249 = pneg %p57
      %p250 = pneg %p81
      %p251 = pneg %p78
      %p252 = pneg %p102
      %p253 = pneg %p99
      %p254 = pneg %p123
      %p255 = pneg %p120
      %p256 = pneg %p144
      %p257 = pneg %p141
      %p258 = pneg %p165
      %p259 = pneg %p162
      %p260 = pneg %p191
      %p261 = pneg %p188
      %p262 = scmp.lt.s32.totalorder %s18, 1
      %s263 = scalar_select %p262, %s18, 1
      %s264 = smul.addr %s263, 4
      %s265 = scalar_lea.vmem %s7, %s264
      %p266 = scmp.lt.s32.totalorder %s18, 1
      %s267 = scalar_select %p266, %s18, 1
      %s268 = smul.addr %s267, 4
      %s269 = scalar_lea.vmem %s0, %s268
      %p270 = scmp.lt.s32.totalorder %s18, 1
      %s271 = scalar_select %p270, %s18, 1
      %s272 = smul.addr %s271, 4
      %s273 = scalar_lea.vmem %s7, %s272
      %v275 = vld [vmem:[%s269] sm:$0xf]
      %v276 = vld [vmem:[%s1] sm:$0xf]
      %v277 = vld [vmem:[%s1 + $0x4] sm:$0xf]
      %v278 = vld [vmem:[%s1 + $0x8] sm:$0xf]
      %v279 = vld [vmem:[%s1 + $0xc] sm:$0xf]
      %v280 = vld [vmem:[%s2] sm:$0x1]
      %v282 = vlaneseq
      %v283 = vshrl.u32 %v282, 7
      %v284 = vsub.s32 0, %v283
      %v285 = vrot.slane %v280, %v284
      %v291 = vunpack.c.l.b16 %v276
      %v292 = vunpack.c.l.b16 %v277
      %v293 = vunpack.c.l.b16 %v278
      %v294 = vunpack.c.l.b16 %v279
      %v295 = vpack.c.b16 %v292, %v291
      %v296 = vpack.c.b16 %v294, %v293
      %vm299 = vcmask 261120
      %v301 = vsel %vm299, %v275, 0
      %303 = vmatprep.subr.bf16.mxu0 0
      %304 = vmatpush1.bf16.msra.mxu0 %v295
      %305 = vmatprep.subr.bf16.mxu0 0
      %306 = vmatpush1.bf16.msra.mxu0 %v296
      %307 = vmatprep.subr.bf16.mxu0 0
      %308 = vmatpush1.bf16.msra.mxu0 0
      %309 = vmatprep.subr.bf16.mxu0 0
      %310 = vmatpush1.bf16.msra.mxu0 0
      %311 = vmatprep.subr.bf16.mxu0 0
      %312 = vmatpush1.bf16.msra.mxu0 0
      %313 = vmatprep.subr.bf16.mxu0 0
      %314 = vmatpush1.bf16.msra.mxu0 0
      %315 = vmatprep.subr.bf16.mxu0 0
      %316 = vmatpush1.bf16.msra.mxu0 0
      %317 = vmatprep.subr.bf16.mxu0 0
      %318 = vmatpush1.bf16.msra.mxu0 0
      %319 = vmatprep.subr.bf16.mxu0 0
      %320 = vmatpush1.bf16.msra.mxu0 0
      %321 = vmatprep.subr.bf16.mxu0 0
      %322 = vmatpush1.bf16.msra.mxu0 0
      %323 = vmatprep.subr.bf16.mxu0 0
      %324 = vmatpush1.bf16.msra.mxu0 0
      %325 = vmatprep.subr.bf16.mxu0 0
      %326 = vmatpush1.bf16.msra.mxu0 0
      %327 = vmatprep.subr.bf16.mxu0 0
      %328 = vmatpush1.bf16.msra.mxu0 0
      %329 = vmatprep.subr.bf16.mxu0 0
      %330 = vmatpush1.bf16.msra.mxu0 0
      %331 = vmatprep.subr.bf16.mxu0 0
      %332 = vmatpush1.bf16.msra.mxu0 0
      %333 = vmatprep.subr.bf16.mxu0 0
      %334 = vmatpush1.bf16.msra.mxu0 0
      %335 = vmatprep.mubr.bf16.mxu0 0
      %336 = vmatmul.mubr.bf16.gmra.mrb[0].mxu0 %v301
      %v337 = vpop.f32.mrb[0].mxu0
      %v338 = vadd.f32 %v285, %v337
      %v339 = vpop.f32.mrb[0].mxu0
      %v340 = vpop.f32.mrb[0].mxu0
      %v341 = vpop.f32.mrb[0].mxu0
      %342 = vdwg.mxu0
      %v343 = vmul.f32 %v338, 0.35355338
      %v344 = vpack.c.bf16 %v343, %v343
      %v345 = vpack.c.bf16 %v338, %v338
      %347 = vrot.lane.b32.xlu0 %v345, 96
      %v348 = vpop.permute.xlu0 %347
      %vm349 = vcmask 64512
      %v351 = vsel %vm349, %v344, 0
      %v354 = vsel %vm349, %v348, 0
      %356 = vmatprep.subr.bf16.mxu0 0
      %357 = vmatpush1.bf16.xpose.msra.mxu0 %v354
      %358 = vmatprep.subr.bf16.mxu0 0
      %359 = vmatpush1.bf16.xpose.msra.mxu0 0
      %360 = vmatprep.subr.bf16.mxu0 0
      %361 = vmatpush1.bf16.xpose.msra.mxu0 0
      %362 = vmatprep.subr.bf16.mxu0 0
      %363 = vmatpush1.bf16.xpose.msra.mxu0 0
      %364 = vmatprep.subr.bf16.mxu0 0
      %365 = vmatpush1.bf16.xpose.msra.mxu0 0
      %366 = vmatprep.subr.bf16.mxu0 0
      %367 = vmatpush1.bf16.xpose.msra.mxu0 0
      %368 = vmatprep.subr.bf16.mxu0 0
      %369 = vmatpush1.bf16.xpose.msra.mxu0 0
      %370 = vmatprep.subr.bf16.mxu0 0
      %371 = vmatpush1.bf16.xpose.msra.mxu0 0
      %372 = vmatprep.subr.bf16.mxu0 0
      %373 = vmatpush1.bf16.xpose.msra.mxu0 0
      %374 = vmatprep.subr.bf16.mxu0 0
      %375 = vmatpush1.bf16.xpose.msra.mxu0 0
      %376 = vmatprep.subr.bf16.mxu0 0
      %377 = vmatpush1.bf16.xpose.msra.mxu0 0
      %378 = vmatprep.subr.bf16.mxu0 0
      %379 = vmatpush1.bf16.xpose.msra.mxu0 0
      %380 = vmatprep.subr.bf16.mxu0 0
      %381 = vmatpush1.bf16.xpose.msra.mxu0 0
      %382 = vmatprep.subr.bf16.mxu0 0
      %383 = vmatpush1.bf16.xpose.msra.mxu0 0
      %384 = vmatprep.subr.bf16.mxu0 0
      %385 = vmatpush1.bf16.xpose.msra.mxu0 0
      %386 = vmatprep.subr.bf16.mxu0 0
      %387 = vmatpush1.bf16.xpose.msra.mxu0 0
      %388 = vmatprep.mubr.bf16.mxu0 0
      %389 = vmatmul.mubr.bf16.gmra.mrb[0].mxu0 %v351
      %v390 = vpop.f32.mrb[0].mxu0
      %v391 = vadd.f32 0.0, %v390
      %v392 = vpop.f32.mrb[0].mxu0
      %v393 = vpop.f32.mrb[0].mxu0
      %v394 = vpop.f32.mrb[0].mxu0
      %395 = vdwg.mxu0
      %v396 = vsel %vm349, %v391, -inf
      %397 = vmax.xlane.f32.xlu0 %v396
      %v398 = vpop.xlane.xlu0 %397
      %v399 = vsub.f32 %v391, %v398
      %v400 = vmul.f32 %v399, 1.442695
      %v401 = vpow.pop %v400
      %v402 = vsel %vm349, %v401, 0.0
      %403 = vadd.xlane.f32.xlu0 %v402
      %v404 = vpop.xlane.xlu0 %403
      %v405 = vrcp.pop %v404
      %v406 = vmul.f32 %v401, %v405
      %v407 = vpack.c.bf16 %v406, %v406
      %408 = vrot.lane.b32.xlu0 %v345, 64
      %v409 = vpop.permute.xlu0 %408
      %v411 = vsel %vm349, %v407, 0
      %vm413 = vcmask 1043456
      %v415 = vsel %vm413, %v409, 0
      %417 = vmatprep.subr.bf16.mxu0 0
      %418 = vmatpush1.bf16.msra.mxu0 %v415
      %419 = vmatprep.subr.bf16.mxu0 0
      %420 = vmatpush1.bf16.msra.mxu0 0
      %421 = vmatprep.subr.bf16.mxu0 0
      %422 = vmatpush1.bf16.msra.mxu0 0
      %423 = vmatprep.subr.bf16.mxu0 0
      %424 = vmatpush1.bf16.msra.mxu0 0
      %425 = vmatprep.subr.bf16.mxu0 0
      %426 = vmatpush1.bf16.msra.mxu0 0
      %427 = vmatprep.subr.bf16.mxu0 0
      %428 = vmatpush1.bf16.msra.mxu0 0
      %429 = vmatprep.subr.bf16.mxu0 0
      %430 = vmatpush1.bf16.msra.mxu0 0
      %431 = vmatprep.subr.bf16.mxu0 0
      %432 = vmatpush1.bf16.msra.mxu0 0
      %433 = vmatprep.subr.bf16.mxu0 0
      %434 = vmatpush1.bf16.msra.mxu0 0
      %435 = vmatprep.subr.bf16.mxu0 0
      %436 = vmatpush1.bf16.msra.mxu0 0
      %437 = vmatprep.subr.bf16.mxu0 0
      %438 = vmatpush1.bf16.msra.mxu0 0
      %439 = vmatprep.subr.bf16.mxu0 0
      %440 = vmatpush1.bf16.msra.mxu0 0
      %441 = vmatprep.subr.bf16.mxu0 0
      %442 = vmatpush1.bf16.msra.mxu0 0
      %443 = vmatprep.subr.bf16.mxu0 0
      %444 = vmatpush1.bf16.msra.mxu0 0
      %445 = vmatprep.subr.bf16.mxu0 0
      %446 = vmatpush1.bf16.msra.mxu0 0
      %447 = vmatprep.subr.bf16.mxu0 0
      %448 = vmatpush1.bf16.msra.mxu0 0
      %449 = vmatprep.mubr.bf16.mxu0 0
      %450 = vmatmul.mubr.bf16.gmra.mrb[0].mxu0 %v411
      %v451 = vpop.f32.mrb[0].mxu0
      %v452 = vadd.f32 0.0, %v451
      %v453 = vpop.f32.mrb[0].mxu0
      %v454 = vpop.f32.mrb[0].mxu0
      %v455 = vpop.f32.mrb[0].mxu0
      %456 = vdwg.mxu0
      %v457 = vpack.c.bf16 %v452, %v452
      %v458 = vld [vmem:[%s3] sm:$0xf]
      %460 = vrot.lane.b32.xlu0 %v344, 120
      %v461 = vpop.permute.xlu0 %460
      %462 = vrot.lane.b32.xlu0 %v345, 88
      %v463 = vpop.permute.xlu0 %462
      %v465 = vsel %vm349, %v461, 0
      %v468 = vsel %vm349, %v463, 0
      %470 = vmatprep.subr.bf16.mxu0 0
      %471 = vmatpush1.bf16.xpose.msra.mxu0 %v468
      %472 = vmatprep.subr.bf16.mxu0 0
      %473 = vmatpush1.bf16.xpose.msra.mxu0 0
      %474 = vmatprep.subr.bf16.mxu0 0
      %475 = vmatpush1.bf16.xpose.msra.mxu0 0
      %476 = vmatprep.subr.bf16.mxu0 0
      %477 = vmatpush1.bf16.xpose.msra.mxu0 0
      %478 = vmatprep.subr.bf16.mxu0 0
      %479 = vmatpush1.bf16.xpose.msra.mxu0 0
      %480 = vmatprep.subr.bf16.mxu0 0
      %481 = vmatpush1.bf16.xpose.msra.mxu0 0
      %482 = vmatprep.subr.bf16.mxu0 0
      %483 = vmatpush1.bf16.xpose.msra.mxu0 0
      %484 = vmatprep.subr.bf16.mxu0 0
      %485 = vmatpush1.bf16.xpose.msra.mxu0 0
      %486 = vmatprep.subr.bf16.mxu0 0
      %487 = vmatpush1.bf16.xpose.msra.mxu0 0
      %488 = vmatprep.subr.bf16.mxu0 0
      %489 = vmatpush1.bf16.xpose.msra.mxu0 0
      %490 = vmatprep.subr.bf16.mxu0 0
      %491 = vmatpush1.bf16.xpose.msra.mxu0 0
      %492 = vmatprep.subr.bf16.mxu0 0
      %493 = vmatpush1.bf16.xpose.msra.mxu0 0
      %494 = vmatprep.subr.bf16.mxu0 0
      %495 = vmatpush1.bf16.xpose.msra.mxu0 0
      %496 = vmatprep.subr.bf16.mxu0 0
      %497 = vmatpush1.bf16.xpose.msra.mxu0 0
      %498 = vmatprep.subr.bf16.mxu0 0
      %499 = vmatpush1.bf16.xpose.msra.mxu0 0
      %500 = vmatprep.subr.bf16.mxu0 0
      %501 = vmatpush1.bf16.xpose.msra.mxu0 0
      %502 = vmatprep.mubr.bf16.mxu0 0
      %503 = vmatmul.mubr.bf16.gmra.mrb[0].mxu0 %v465
      %v504 = vpop.f32.mrb[0].mxu0
      %v505 = vadd.f32 0.0, %v504
      %v506 = vpop.f32.mrb[0].mxu0
      %v507 = vpop.f32.mrb[0].mxu0
      %v508 = vpop.f32.mrb[0].mxu0
      %509 = vdwg.mxu0
      %v510 = vsel %vm349, %v505, -inf
      %511 = vmax.xlane.f32.xlu0 %v510
      %v512 = vpop.xlane.xlu0 %511
      %v513 = vsub.f32 %v505, %v512
      %v514 = vmul.f32 %v513, 1.442695
      %v515 = vpow.pop %v514
      %v516 = vsel %vm349, %v515, 0.0
      %517 = vadd.xlane.f32.xlu0 %v516
      %v518 = vpop.xlane.xlu0 %517
      %v519 = vrcp.pop %v518
      %v520 = vmul.f32 %v515, %v519
      %v521 = vpack.c.bf16 %v520, %v520
      %522 = vrot.lane.b32.xlu0 %v345, 56
      %v523 = vpop.permute.xlu0 %522
      %v525 = vsel %vm349, %v521, 0
      %v528 = vsel %vm413, %v523, 0
      %530 = vmatprep.subr.bf16.mxu0 0
      %531 = vmatpush1.bf16.msra.mxu0 %v528
      %532 = vmatprep.subr.bf16.mxu0 0
      %533 = vmatpush1.bf16.msra.mxu0 0
      %534 = vmatprep.subr.bf16.mxu0 0
      %535 = vmatpush1.bf16.msra.mxu0 0
      %536 = vmatprep.subr.bf16.mxu0 0
      %537 = vmatpush1.bf16.msra.mxu0 0
      %538 = vmatprep.subr.bf16.mxu0 0
      %539 = vmatpush1.bf16.msra.mxu0 0
      %540 = vmatprep.subr.bf16.mxu0 0
      %541 = vmatpush1.bf16.msra.mxu0 0
      %542 = vmatprep.subr.bf16.mxu0 0
      %543 = vmatpush1.bf16.msra.mxu0 0
      %544 = vmatprep.subr.bf16.mxu0 0
      %545 = vmatpush1.bf16.msra.mxu0 0
      %546 = vmatprep.subr.bf16.mxu0 0
      %547 = vmatpush1.bf16.msra.mxu0 0
      %548 = vmatprep.subr.bf16.mxu0 0
      %549 = vmatpush1.bf16.msra.mxu0 0
      %550 = vmatprep.subr.bf16.mxu0 0
      %551 = vmatpush1.bf16.msra.mxu0 0
      %552 = vmatprep.subr.bf16.mxu0 0
      %553 = vmatpush1.bf16.msra.mxu0 0
      %554 = vmatprep.subr.bf16.mxu0 0
      %555 = vmatpush1.bf16.msra.mxu0 0
      %556 = vmatprep.subr.bf16.mxu0 0
      %557 = vmatpush1.bf16.msra.mxu0 0
      %558 = vmatprep.subr.bf16.mxu0 0
      %559 = vmatpush1.bf16.msra.mxu0 0
      %560 = vmatprep.subr.bf16.mxu0 0
      %561 = vmatpush1.bf16.msra.mxu0 0
      %562 = vmatprep.mubr.bf16.mxu0 0
      %563 = vmatmul.mubr.bf16.gmra.mrb[0].mxu0 %v525
      %v564 = vpop.f32.mrb[0].mxu0
      %v565 = vadd.f32 0.0, %v564
      %v566 = vpop.f32.mrb[0].mxu0
      %v567 = vpop.f32.mrb[0].mxu0
      %v568 = vpop.f32.mrb[0].mxu0
      %569 = vdwg.mxu0
      %v570 = vpack.c.bf16 %v565, %v565
      %v571 = vld [vmem:[%s3 + $0x4] sm:$0xf]
      %v573 = vsel %vm349, %v570, 0
      %v576 = vsel %vm413, %v571, 0
      %578 = vmatprep.subr.bf16.mxu0 0
      %579 = vmatpush1.bf16.msra.mxu0 %v576
      %580 = vmatprep.subr.bf16.mxu0 0
      %581 = vmatpush1.bf16.msra.mxu0 0
      %582 = vmatprep.subr.bf16.mxu0 0
      %583 = vmatpush1.bf16.msra.mxu0 0
      %584 = vmatprep.subr.bf16.mxu0 0
      %585 = vmatpush1.bf16.msra.mxu0 0
      %586 = vmatprep.subr.bf16.mxu0 0
      %587 = vmatpush1.bf16.msra.mxu0 0
      %588 = vmatprep.subr.bf16.mxu0 0
      %589 = vmatpush1.bf16.msra.mxu0 0
      %590 = vmatprep.subr.bf16.mxu0 0
      %591 = vmatpush1.bf16.msra.mxu0 0
      %592 = vmatprep.subr.bf16.mxu0 0
      %593 = vmatpush1.bf16.msra.mxu0 0
      %594 = vmatprep.subr.bf16.mxu0 0
      %595 = vmatpush1.bf16.msra.mxu0 0
      %596 = vmatprep.subr.bf16.mxu0 0
      %597 = vmatpush1.bf16.msra.mxu0 0
      %598 = vmatprep.subr.bf16.mxu0 0
      %599 = vmatpush1.bf16.msra.mxu0 0
      %600 = vmatprep.subr.bf16.mxu0 0
      %601 = vmatpush1.bf16.msra.mxu0 0
      %602 = vmatprep.subr.bf16.mxu0 0
      %603 = vmatpush1.bf16.msra.mxu0 0
      %604 = vmatprep.subr.bf16.mxu0 0
      %605 = vmatpush1.bf16.msra.mxu0 0
      %606 = vmatprep.subr.bf16.mxu0 0
      %607 = vmatpush1.bf16.msra.mxu0 0
      %608 = vmatprep.subr.bf16.mxu0 0
      %609 = vmatpush1.bf16.msra.mxu0 0
      %610 = vmatprep.mubr.bf16.mxu0 0
      %611 = vmatmul.mubr.bf16.gmra.mrb[0].mxu0 %v573
      %v612 = vpop.f32.mrb[0].mxu0
      %v613 = vadd.f32 0.0, %v612
      %v614 = vpop.f32.mrb[0].mxu0
      %v615 = vpop.f32.mrb[0].mxu0
      %v616 = vpop.f32.mrb[0].mxu0
      %617 = vdwg.mxu0
      %v619 = vsel %vm349, %v457, 0
      %v622 = vsel %vm413, %v458, 0
      %624 = vmatprep.subr.bf16.mxu0 0
      %625 = vmatpush1.bf16.msra.mxu0 %v622
      %626 = vmatprep.subr.bf16.mxu0 0
      %627 = vmatpush1.bf16.msra.mxu0 0
      %628 = vmatprep.subr.bf16.mxu0 0
      %629 = vmatpush1.bf16.msra.mxu0 0
      %630 = vmatprep.subr.bf16.mxu0 0
      %631 = vmatpush1.bf16.msra.mxu0 0
      %632 = vmatprep.subr.bf16.mxu0 0
      %633 = vmatpush1.bf16.msra.mxu0 0
      %634 = vmatprep.subr.bf16.mxu0 0
      %635 = vmatpush1.bf16.msra.mxu0 0
      %636 = vmatprep.subr.bf16.mxu0 0
      %637 = vmatpush1.bf16.msra.mxu0 0
      %638 = vmatprep.subr.bf16.mxu0 0
      %639 = vmatpush1.bf16.msra.mxu0 0
      %640 = vmatprep.subr.bf16.mxu0 0
      %641 = vmatpush1.bf16.msra.mxu0 0
      %642 = vmatprep.subr.bf16.mxu0 0
      %643 = vmatpush1.bf16.msra.mxu0 0
      %644 = vmatprep.subr.bf16.mxu0 0
      %645 = vmatpush1.bf16.msra.mxu0 0
      %646 = vmatprep.subr.bf16.mxu0 0
      %647 = vmatpush1.bf16.msra.mxu0 0
      %648 = vmatprep.subr.bf16.mxu0 0
      %649 = vmatpush1.bf16.msra.mxu0 0
      %650 = vmatprep.subr.bf16.mxu0 0
      %651 = vmatpush1.bf16.msra.mxu0 0
      %652 = vmatprep.subr.bf16.mxu0 0
      %653 = vmatpush1.bf16.msra.mxu0 0
      %654 = vmatprep.subr.bf16.mxu0 0
      %655 = vmatpush1.bf16.msra.mxu0 0
      %656 = vmatprep.mubr.bf16.mxu0 0
      %657 = vmatmul.mubr.bf16.gmra.mrb[0].mxu0 %v619
      %v658 = vpop.f32.mrb[0].mxu0
      %v659 = vadd.f32 %v613, %v658
      %v660 = vpop.f32.mrb[0].mxu0
      %v661 = vpop.f32.mrb[0].mxu0
      %v662 = vpop.f32.mrb[0].mxu0
      %663 = vdwg.mxu0
      %664 = vrot.lane.b32.xlu0 %v344, 112
      %v665 = vpop.permute.xlu0 %664
      %666 = vrot.lane.b32.xlu0 %v345, 80
      %v667 = vpop.permute.xlu0 %666
      %v669 = vsel %vm349, %v665, 0
      %v672 = vsel %vm349, %v667, 0
      %674 = vmatprep.subr.bf16.mxu0 0
      %675 = vmatpush1.bf16.xpose.msra.mxu0 %v672
      %676 = vmatprep.subr.bf16.mxu0 0
      %677 = vmatpush1.bf16.xpose.msra.mxu0 0
      %678 = vmatprep.subr.bf16.mxu0 0
      %679 = vmatpush1.bf16.xpose.msra.mxu0 0
      %680 = vmatprep.subr.bf16.mxu0 0
      %681 = vmatpush1.bf16.xpose.msra.mxu0 0
      %682 = vmatprep.subr.bf16.mxu0 0
      %683 = vmatpush1.bf16.xpose.msra.mxu0 0
      %684 = vmatprep.subr.bf16.mxu0 0
      %685 = vmatpush1.bf16.xpose.msra.mxu0 0
      %686 = vmatprep.subr.bf16.mxu0 0
      %687 = vmatpush1.bf16.xpose.msra.mxu0 0
      %688 = vmatprep.subr.bf16.mxu0 0
      %689 = vmatpush1.bf16.xpose.msra.mxu0 0
      %690 = vmatprep.subr.bf16.mxu0 0
      %691 = vmatpush1.bf16.xpose.msra.mxu0 0
      %692 = vmatprep.subr.bf16.mxu0 0
      %693 = vmatpush1.bf16.xpose.msra.mxu0 0
      %694 = vmatprep.subr.bf16.mxu0 0
      %695 = vmatpush1.bf16.xpose.msra.mxu0 0
      %696 = vmatprep.subr.bf16.mxu0 0
      %697 = vmatpush1.bf16.xpose.msra.mxu0 0
      %698 = vmatprep.subr.bf16.mxu0 0
      %699 = vmatpush1.bf16.xpose.msra.mxu0 0
      %700 = vmatprep.subr.bf16.mxu0 0
      %701 = vmatpush1.bf16.xpose.msra.mxu0 0
      %702 = vmatprep.subr.bf16.mxu0 0
      %703 = vmatpush1.bf16.xpose.msra.mxu0 0
      %704 = vmatprep.subr.bf16.mxu0 0
      %705 = vmatpush1.bf16.xpose.msra.mxu0 0
      %706 = vmatprep.mubr.bf16.mxu0 0
      %707 = vmatmul.mubr.bf16.gmra.mrb[0].mxu0 %v669
      %v708 = vpop.f32.mrb[0].mxu0
      %v709 = vadd.f32 0.0, %v708
      %v710 = vpop.f32.mrb[0].mxu0
      %v711 = vpop.f32.mrb[0].mxu0
      %v712 = vpop.f32.mrb[0].mxu0
      %713 = vdwg.mxu0
      %v714 = vsel %vm349, %v709, -inf
      %715 = vmax.xlane.f32.xlu0 %v714
      %v716 = vpop.xlane.xlu0 %715
      %v717 = vsub.f32 %v709, %v716
      %v718 = vmul.f32 %v717, 1.442695
      %v719 = vpow.pop %v718
      %v720 = vsel %vm349, %v719, 0.0
      %721 = vadd.xlane.f32.xlu0 %v720
      %v722 = vpop.xlane.xlu0 %721
      %v723 = vrcp.pop %v722
      %v724 = vmul.f32 %v719, %v723
      %v725 = vpack.c.bf16 %v724, %v724
      %726 = vrot.lane.b32.xlu0 %v345, 48
      %v727 = vpop.permute.xlu0 %726
      %v729 = vsel %vm349, %v725, 0
      %v732 = vsel %vm413, %v727, 0
      %734 = vmatprep.subr.bf16.mxu0 0
      %735 = vmatpush1.bf16.msra.mxu0 %v732
      %736 = vmatprep.subr.bf16.mxu0 0
      %737 = vmatpush1.bf16.msra.mxu0 0
      %738 = vmatprep.subr.bf16.mxu0 0
      %739 = vmatpush1.bf16.msra.mxu0 0
      %740 = vmatprep.subr.bf16.mxu0 0
      %741 = vmatpush1.bf16.msra.mxu0 0
      %742 = vmatprep.subr.bf16.mxu0 0
      %743 = vmatpush1.bf16.msra.mxu0 0
      %744 = vmatprep.subr.bf16.mxu0 0
      %745 = vmatpush1.bf16.msra.mxu0 0
      %746 = vmatprep.subr.bf16.mxu0 0
      %747 = vmatpush1.bf16.msra.mxu0 0
      %748 = vmatprep.subr.bf16.mxu0 0
      %749 = vmatpush1.bf16.msra.mxu0 0
      %750 = vmatprep.subr.bf16.mxu0 0
      %751 = vmatpush1.bf16.msra.mxu0 0
      %752 = vmatprep.subr.bf16.mxu0 0
      %753 = vmatpush1.bf16.msra.mxu0 0
      %754 = vmatprep.subr.bf16.mxu0 0
      %755 = vmatpush1.bf16.msra.mxu0 0
      %756 = vmatprep.subr.bf16.mxu0 0
      %757 = vmatpush1.bf16.msra.mxu0 0
      %758 = vmatprep.subr.bf16.mxu0 0
      %759 = vmatpush1.bf16.msra.mxu0 0
      %760 = vmatprep.subr.bf16.mxu0 0
      %761 = vmatpush1.bf16.msra.mxu0 0
      %762 = vmatprep.subr.bf16.mxu0 0
      %763 = vmatpush1.bf16.msra.mxu0 0
      %764 = vmatprep.subr.bf16.mxu0 0
      %765 = vmatpush1.bf16.msra.mxu0 0
      %766 = vmatprep.mubr.bf16.mxu0 0
      %767 = vmatmul.mubr.bf16.gmra.mrb[0].mxu0 %v729
      %v768 = vpop.f32.mrb[0].mxu0
      %v769 = vadd.f32 0.0, %v768
      %v770 = vpop.f32.mrb[0].mxu0
      %v771 = vpop.f32.mrb[0].mxu0
      %v772 = vpop.f32.mrb[0].mxu0
      %773 = vdwg.mxu0
      %v774 = vpack.c.bf16 %v769, %v769
      %v775 = vld [vmem:[%s3 + $0x8] sm:$0xf]
      %v777 = vsel %vm349, %v774, 0
      %v780 = vsel %vm413, %v775, 0
      %782 = vmatprep.subr.bf16.mxu0 0
      %783 = vmatpush1.bf16.msra.mxu0 %v780
      %784 = vmatprep.subr.bf16.mxu0 0
      %785 = vmatpush1.bf16.msra.mxu0 0
      %786 = vmatprep.subr.bf16.mxu0 0
      %787 = vmatpush1.bf16.msra.mxu0 0
      %788 = vmatprep.subr.bf16.mxu0 0
      %789 = vmatpush1.bf16.msra.mxu0 0
      %790 = vmatprep.subr.bf16.mxu0 0
      %791 = vmatpush1.bf16.msra.mxu0 0
      %792 = vmatprep.subr.bf16.mxu0 0
      %793 = vmatpush1.bf16.msra.mxu0 0
      %794 = vmatprep.subr.bf16.mxu0 0
      %795 = vmatpush1.bf16.msra.mxu0 0
      %796 = vmatprep.subr.bf16.mxu0 0
      %797 = vmatpush1.bf16.msra.mxu0 0
      %798 = vmatprep.subr.bf16.mxu0 0
      %799 = vmatpush1.bf16.msra.mxu0 0
      %800 = vmatprep.subr.bf16.mxu0 0
      %801 = vmatpush1.bf16.msra.mxu0 0
      %802 = vmatprep.subr.bf16.mxu0 0
      %803 = vmatpush1.bf16.msra.mxu0 0
      %804 = vmatprep.subr.bf16.mxu0 0
      %805 = vmatpush1.bf16.msra.mxu0 0
      %806 = vmatprep.subr.bf16.mxu0 0
      %807 = vmatpush1.bf16.msra.mxu0 0
      %808 = vmatprep.subr.bf16.mxu0 0
      %809 = vmatpush1.bf16.msra.mxu0 0
      %810 = vmatprep.subr.bf16.mxu0 0
      %811 = vmatpush1.bf16.msra.mxu0 0
      %812 = vmatprep.subr.bf16.mxu0 0
      %813 = vmatpush1.bf16.msra.mxu0 0
      %814 = vmatprep.mubr.bf16.mxu0 0
      %815 = vmatmul.mubr.bf16.gmra.mrb[0].mxu0 %v777
      %v816 = vpop.f32.mrb[0].mxu0
      %v817 = vadd.f32 0.0, %v816
      %v818 = vpop.f32.mrb[0].mxu0
      %v819 = vpop.f32.mrb[0].mxu0
      %v820 = vpop.f32.mrb[0].mxu0
      %821 = vdwg.mxu0
      %v822 = vadd.f32 %v659, %v817
      %823 = vrot.lane.b32.xlu0 %v344, 104
      %v824 = vpop.permute.xlu0 %823
      %825 = vrot.lane.b32.xlu0 %v345, 72
      %v826 = vpop.permute.xlu0 %825
      %v828 = vsel %vm349, %v824, 0
      %v831 = vsel %vm349, %v826, 0
      %833 = vmatprep.subr.bf16.mxu0 0
      %834 = vmatpush1.bf16.xpose.msra.mxu0 %v831
      %835 = vmatprep.subr.bf16.mxu0 0
      %836 = vmatpush1.bf16.xpose.msra.mxu0 0
      %837 = vmatprep.subr.bf16.mxu0 0
      %838 = vmatpush1.bf16.xpose.msra.mxu0 0
      %839 = vmatprep.subr.bf16.mxu0 0
      %840 = vmatpush1.bf16.xpose.msra.mxu0 0
      %841 = vmatprep.subr.bf16.mxu0 0
      %842 = vmatpush1.bf16.xpose.msra.mxu0 0
      %843 = vmatprep.subr.bf16.mxu0 0
      %844 = vmatpush1.bf16.xpose.msra.mxu0 0
      %845 = vmatprep.subr.bf16.mxu0 0
      %846 = vmatpush1.bf16.xpose.msra.mxu0 0
      %847 = vmatprep.subr.bf16.mxu0 0
      %848 = vmatpush1.bf16.xpose.msra.mxu0 0
      %849 = vmatprep.subr.bf16.mxu0 0
      %850 = vmatpush1.bf16.xpose.msra.mxu0 0
      %851 = vmatprep.subr.bf16.mxu0 0
      %852 = vmatpush1.bf16.xpose.msra.mxu0 0
      %853 = vmatprep.subr.bf16.mxu0 0
      %854 = vmatpush1.bf16.xpose.msra.mxu0 0
      %855 = vmatprep.subr.bf16.mxu0 0
      %856 = vmatpush1.bf16.xpose.msra.mxu0 0
      %857 = vmatprep.subr.bf16.mxu0 0
      %858 = vmatpush1.bf16.xpose.msra.mxu0 0
      %859 = vmatprep.subr.bf16.mxu0 0
      %860 = vmatpush1.bf16.xpose.msra.mxu0 0
      %861 = vmatprep.subr.bf16.mxu0 0
      %862 = vmatpush1.bf16.xpose.msra.mxu0 0
      %863 = vmatprep.subr.bf16.mxu0 0
      %864 = vmatpush1.bf16.xpose.msra.mxu0 0
      %865 = vmatprep.mubr.bf16.mxu0 0
      %866 = vmatmul.mubr.bf16.gmra.mrb[0].mxu0 %v828
      %v867 = vpop.f32.mrb[0].mxu0
      %v868 = vadd.f32 0.0, %v867
      %v869 = vpop.f32.mrb[0].mxu0
      %v870 = vpop.f32.mrb[0].mxu0
      %v871 = vpop.f32.mrb[0].mxu0
      %872 = vdwg.mxu0
      %v873 = vsel %vm349, %v868, -inf
      %874 = vmax.xlane.f32.xlu0 %v873
      %v875 = vpop.xlane.xlu0 %874
      %v876 = vsub.f32 %v868, %v875
      %v877 = vmul.f32 %v876, 1.442695
      %v878 = vpow.pop %v877
      %v879 = vsel %vm349, %v878, 0.0
      %880 = vadd.xlane.f32.xlu0 %v879
      %v881 = vpop.xlane.xlu0 %880
      %v882 = vrcp.pop %v881
      %v883 = vmul.f32 %v878, %v882
      %v884 = vpack.c.bf16 %v883, %v883
      %885 = vrot.lane.b32.xlu0 %v345, 40
      %v886 = vpop.permute.xlu0 %885
      %v888 = vsel %vm349, %v884, 0
      %v891 = vsel %vm413, %v886, 0
      %893 = vmatprep.subr.bf16.mxu0 0
      %894 = vmatpush1.bf16.msra.mxu0 %v891
      %895 = vmatprep.subr.bf16.mxu0 0
      %896 = vmatpush1.bf16.msra.mxu0 0
      %897 = vmatprep.subr.bf16.mxu0 0
      %898 = vmatpush1.bf16.msra.mxu0 0
      %899 = vmatprep.subr.bf16.mxu0 0
      %900 = vmatpush1.bf16.msra.mxu0 0
      %901 = vmatprep.subr.bf16.mxu0 0
      %902 = vmatpush1.bf16.msra.mxu0 0
      %903 = vmatprep.subr.bf16.mxu0 0
      %904 = vmatpush1.bf16.msra.mxu0 0
      %905 = vmatprep.subr.bf16.mxu0 0
      %906 = vmatpush1.bf16.msra.mxu0 0
      %907 = vmatprep.subr.bf16.mxu0 0
      %908 = vmatpush1.bf16.msra.mxu0 0
      %909 = vmatprep.subr.bf16.mxu0 0
      %910 = vmatpush1.bf16.msra.mxu0 0
      %911 = vmatprep.subr.bf16.mxu0 0
      %912 = vmatpush1.bf16.msra.mxu0 0
      %913 = vmatprep.subr.bf16.mxu0 0
      %914 = vmatpush1.bf16.msra.mxu0 0
      %915 = vmatprep.subr.bf16.mxu0 0
      %916 = vmatpush1.bf16.msra.mxu0 0
      %917 = vmatprep.subr.bf16.mxu0 0
      %918 = vmatpush1.bf16.msra.mxu0 0
      %919 = vmatprep.subr.bf16.mxu0 0
      %920 = vmatpush1.bf16.msra.mxu0 0
      %921 = vmatprep.subr.bf16.mxu0 0
      %922 = vmatpush1.bf16.msra.mxu0 0
      %923 = vmatprep.subr.bf16.mxu0 0
      %924 = vmatpush1.bf16.msra.mxu0 0
      %925 = vmatprep.mubr.bf16.mxu0 0
      %926 = vmatmul.mubr.bf16.gmra.mrb[0].mxu0 %v888
      %v927 = vpop.f32.mrb[0].mxu0
      %v928 = vadd.f32 0.0, %v927
      %v929 = vpop.f32.mrb[0].mxu0
      %v930 = vpop.f32.mrb[0].mxu0
      %v931 = vpop.f32.mrb[0].mxu0
      %932 = vdwg.mxu0
      %v933 = vpack.c.bf16 %v928, %v928
      %v934 = vld [vmem:[%s3 + $0xc] sm:$0xf]
      %v936 = vsel %vm349, %v933, 0
      %v939 = vsel %vm413, %v934, 0
      %941 = vmatprep.subr.bf16.mxu0 0
      %942 = vmatpush1.bf16.msra.mxu0 %v939
      %943 = vmatprep.subr.bf16.mxu0 0
      %944 = vmatpush1.bf16.msra.mxu0 0
      %945 = vmatprep.subr.bf16.mxu0 0
      %946 = vmatpush1.bf16.msra.mxu0 0
      %947 = vmatprep.subr.bf16.mxu0 0
      %948 = vmatpush1.bf16.msra.mxu0 0
      %949 = vmatprep.subr.bf16.mxu0 0
      %950 = vmatpush1.bf16.msra.mxu0 0
      %951 = vmatprep.subr.bf16.mxu0 0
      %952 = vmatpush1.bf16.msra.mxu0 0
      %953 = vmatprep.subr.bf16.mxu0 0
      %954 = vmatpush1.bf16.msra.mxu0 0
      %955 = vmatprep.subr.bf16.mxu0 0
      %956 = vmatpush1.bf16.msra.mxu0 0
      %957 = vmatprep.subr.bf16.mxu0 0
      %958 = vmatpush1.bf16.msra.mxu0 0
      %959 = vmatprep.subr.bf16.mxu0 0
      %960 = vmatpush1.bf16.msra.mxu0 0
      %961 = vmatprep.subr.bf16.mxu0 0
      %962 = vmatpush1.bf16.msra.mxu0 0
      %963 = vmatprep.subr.bf16.mxu0 0
      %964 = vmatpush1.bf16.msra.mxu0 0
      %965 = vmatprep.subr.bf16.mxu0 0
      %966 = vmatpush1.bf16.msra.mxu0 0
      %967 = vmatprep.subr.bf16.mxu0 0
      %968 = vmatpush1.bf16.msra.mxu0 0
      %969 = vmatprep.subr.bf16.mxu0 0
      %970 = vmatpush1.bf16.msra.mxu0 0
      %971 = vmatprep.subr.bf16.mxu0 0
      %972 = vmatpush1.bf16.msra.mxu0 0
      %973 = vmatprep.mubr.bf16.mxu0 0
      %974 = vmatmul.mubr.bf16.gmra.mrb[0].mxu0 %v936
      %v975 = vpop.f32.mrb[0].mxu0
      %v976 = vadd.f32 0.0, %v975
      %v977 = vpop.f32.mrb[0].mxu0
      %v978 = vpop.f32.mrb[0].mxu0
      %v979 = vpop.f32.mrb[0].mxu0
      %980 = vdwg.mxu0
      %v981 = vadd.f32 %v822, %v976
      %v982 = vld [vmem:[%s4] sm:$0x1]
      %v984 = vlaneseq
      %v985 = vshrl.u32 %v984, 7
      %v986 = vsub.s32 0, %v985
      %v987 = vrot.slane %v982, %v986
      %v989 = vadd.f32 %v981, %v987
      %v990 = vunpack.c.l.bf16 %v275
      %v991 = vadd.f32 %v989, %v990
      %v992 = vsel %vm299, %v991, 0.0
      %993 = vadd.xlane.f32.xlu0 %v992
      %v994 = vpop.xlane.xlu0 %993
      %v995 = vrcp.pop 32.0
      %v996 = vmul.f32 %v994, %v995
      %v997 = vsub.f32 %v991, %v996
      %v998 = vmul.f32 %v997, %v997
      %v999 = vsel %vm299, %v998, 0.0
      %1000 = vadd.xlane.f32.xlu0 %v999
      %v1001 = vpop.xlane.xlu0 %1000
      %v1002 = vmul.f32 %v1001, %v995
      %v1003 = vadd.f32 %v1002, 1e-05
      %v1004 = vrsqrt.pop %v1003
      %v1005 = vmul.f32 %v997, %v1004
      %v1006 = vld [vmem:[%s5] sm:$0x1]
      %v1008 = vlaneseq
      %v1009 = vshrl.u32 %v1008, 7
      %v1010 = vsub.s32 0, %v1009
      %v1011 = vrot.slane %v1006, %v1010
      %v1013 = vmul.f32 %v1005, %v1011
      %v1014 = vld [vmem:[%s6] sm:$0x1]
      %v1016 = vlaneseq
      %v1017 = vshrl.u32 %v1016, 7
      %v1018 = vsub.s32 0, %v1017
      %v1019 = vrot.slane %v1014, %v1018
      %v1021 = vadd.f32 %v1013, %v1019
      %v1022 = vpack.c.bf16 %v1021, %v1021
      %vm1023 = vcmask 257024
      %1024 = vst.msk [vmem:[%s273] sm:$0xf] %vm1023, %v1022
      %p1025 = scmp.lt.s32.totalorder %s18, 1
      %s1026 = scalar_select %p1025, %s18, 1
      %s1027 = smul.addr %s1026, 4
      %s1028 = scalar_lea.vmem %s7, %s1027
      // Predicated region
      $region49: #{transformer_forward.11} parent=47 // pred_check
        %p1029 = pneg %p188
      $region50: #{transformer_forward.11} parent=47 // pred_check_branch
        %1031 = sbr.rel (%p1029) target = $region52
      $region51: #{transformer_forward.11} parent=47 // pred_region
        _
      $region52: #{transformer_forward.11} parent=47 // pred_fallthru
        _
    $region48: #{transformer_forward.11} parent=5 // pred_fallthru
      _
    %p1032 = scmp.le.s32.totalorder 2, %s13
    // Predicated region
    $region53: #{transformer_forward.11} parent=5 // pred_check
      %p1033 = pneg %p1032
    $region54: #{transformer_forward.11} parent=5 // pred_check_branch
      %1035 = sbr.rel (%p1033) target = $region56
    $region55: #{transformer_forward.11} parent=5 // pred_region
      %s1036 = ssub.s32 %s13, 2
      // Predicated region
      $region57: #{transformer_forward.11} parent=55 // pred_check
        %p1037 = pneg %p194
      $region58: #{transformer_forward.11} parent=55 // pred_check_branch
        %1039 = sbr.rel (%p1037) target = $region60
      $region59: #{transformer_forward.11} parent=55 // pred_region
        %p1040 = scmp.lt.s32.totalorder %s19, 1
        %s1041 = scalar_select %p1040, %s19, 1
        %s1042 = smul.addr %s1041, 4
        %s1043 = scalar_lea.vmem %s7, %s1042
      $region60: #{transformer_forward.11} parent=55 // pred_fallthru
        _
    $region56: #{transformer_forward.11} parent=5 // pred_fallthru
      _
  $region6: #{transformer_forward.11} parent=0 // loop_footer
    %s17 = sadd.s32 1, %s13
  $region7: #{transformer_forward.11} parent=0 // loop_footer_branch
    %12 = sbr.rel target = $region3
  $region8: #{transformer_forward.11} parent=0 // loop_exit
    _

// kernel: transformer_forward.15
$region0: #{transformer_forward.15}
  #allocation0 [shape = 'u32[]', space=smem, size = 0x4, offset = 0x4, fixed_abs, tag = 'smem constant byte address 0x4 - core index']
  #allocation1 [shape = 'u32[144,128]{1,0:T(1,128)}', space=vmem, size = 0x12000, scoped, tag = 'internal scratch']
  %s0 = inlined_call_operand.vmem [shape: bf16[2,8,32], index: 0, kind: input, shape index: {}]
  %s1 = inlined_call_operand.vmem [shape: bf16[32,96], index: 1, kind: input, shape index: {}]
  %s2 = inlined_call_operand.vmem [shape: f32[1,96], index: 2, kind: input, shape index: {}]
  %s3 = inlined_call_operand.vmem [shape: bf16[32,32], index: 3, kind: input, shape index: {}]
  %s4 = inlined_call_operand.vmem [shape: f32[1,32], index: 4, kind: input, shape index: {}]
  %s5 = inlined_call_operand.vmem [shape: f32[1,32], index: 5, kind: input, shape index: {}]
  %s6 = inlined_call_operand.vmem [shape: f32[1,32], index: 6, kind: input, shape index: {}]
  %s7 = inlined_call_operand.vmem [shape: f32[8,8], index: 7, kind: input, shape index: {}]
  %s8 = inlined_call_operand.vmem [shape: bf16[2,8,32], index: 8, kind: output, shape index: {}]
  %s9 = sld [smem:[#allocation0]]
  $region65: #{transformer_forward.15} parent=0
    _
  %s11 = ssub.s32 1, %s9
  %s12 = scalar_select 0, %s11, %s9
  loop: start=0, step=1, limit=4
  $region2: #{transformer_forward.15} parent=0 // loop_pre_header
    _
  $region3: #{transformer_forward.15} parent=0 // loop_header
    %s14 = sphi 0, %s18
    %p15 = scmp.ge.s32.totalorder %s14, 4
    %s24 = sphi 0, %s26
    %s27 = sphi 0, %s24
    %s28 = sphi 0, %s27
    %s44 = sphi 0, %s28
    %s48 = sphi 0, %s48
    %s50 = sphi 0, %s48
    %s51 = sphi 0, %s50
    %s65 = sphi 0, %s51
    %s69 = sphi 0, %s69
    %s71 = sphi 0, %s69
    %s72 = sphi 0, %s71
    %s86 = sphi 0, %s72
    %s90 = sphi 0, %s90
    %s92 = sphi 0, %s90
    %s93 = sphi 0, %s92
    %s107 = sphi 0, %s93
    %s111 = sphi 0, %s111
    %s113 = sphi 0, %s111
    %s114 = sphi 0, %s113
    %s128 = sphi 0, %s114
    %s132 = sphi 0, %s132
    %s134 = sphi 0, %s132
    %s135 = sphi 0, %s134
    %s149 = sphi 0, %s135
    %s153 = sphi 0, %s153
    %s155 = sphi 0, %s153
    %s156 = sphi 0, %s155
    %s170 = sphi 0, %s156
    %s174 = sphi 0, %s174
    %s176 = sphi 0, %s174
    %s177 = sphi 0, %s176
    %s191 = sphi 0, %s177
    %s197 = sphi 0, %s199
    %s200 = sphi 0, %s197
    %s201 = sphi 0, %s200
    %s217 = sphi 0, %s201
  $region4: #{transformer_forward.15} parent=0 // loop_header_branch
    %17 = sbr.rel (%p15) target = $region8
  $region5: #{transformer_forward.15} parent=0 // loop_body
    %s19 = ssub.s32 %s14, 1
    %s20 = ssub.s32 %s14, 2
    %s21 = sadd.s32 %s14, 1
    %s22 = ssub.s32 %s14, %s21
    %p23 = scmp.eq.s32.totalorder %s22, 0
    %s25 = sadd.s32 %s24, 1
    %s26 = scalar_select %p23, %s24, %s25
    %p29 = pneg %p23
    %p30 = scmp.eq.s32.totalorder %s14, 1
    %p31 = por %p29, %p30
    %p32 = scmp.ne.s32.totalorder %s24, %s27
    %p33 = scmp.eq.s32.totalorder %s14, 0
    %p34 = por %p32, %p33
    %p35 = scmp.ne.s32.totalorder %s24, %s27
    %p36 = scmp.eq.s32.totalorder %s19, 1
    %p37 = por %p35, %p36
    %p38 = scmp.ne.s32.totalorder %s27, %s28
    %p39 = scmp.eq.s32.totalorder %s19, 0
    %p40 = por %p38, %p39
    %p41 = scmp.ne.s32.totalorder %s27, %s28
    %p42 = scmp.eq.s32.totalorder %s20, 1
    %p43 = por %p41, %p42
    %p45 = scmp.ne.s32.totalorder %s28, %s44
    %p46 = scmp.eq.s32.totalorder %s20, 0
    %p47 = por %p45, %p46
    %s49 = sadd.s32 %s48, 1
    %p52 = scmp.eq.s32.totalorder %s14, 1
    %p53 = scmp.ne.s32.totalorder %s48, %s50
    %p54 = scmp.eq.s32.totalorder %s14, 0
    %p55 = por %p53, %p54
    %p56 = scmp.ne.s32.totalorder %s48, %s50
    %p57 = scmp.eq.s32.totalorder %s19, 1
    %p58 = por %p56, %p57
    %p59 = scmp.ne.s32.totalorder %s50, %s51
    %p60 = scmp.eq.s32.totalorder %s19, 0
    %p61 = por %p59, %p60
    %p62 = scmp.ne.s32.totalorder %s50, %s51
    %p63 = scmp.eq.s32.totalorder %s20, 1
    %p64 = por %p62, %p63
    %p66 = scmp.ne.s32.totalorder %s51, %s65
    %p67 = scmp.eq.s32.totalorder %s20, 0
    %p68 = por %p66, %p67
    %s70 = sadd.s32 %s69, 1
    %p73 = scmp.eq.s32.totalorder %s14, 1
    %p74 = scmp.ne.s32.totalorder %s69, %s71
    %p75 = scmp.eq.s32.totalorder %s14, 0
    %p76 = por %p74, %p75
    %p77 = scmp.ne.s32.totalorder %s69, %s71
    %p78 = scmp.eq.s32.totalorder %s19, 1
    %p79 = por %p77, %p78
    %p80 = scmp.ne.s32.totalorder %s71, %s72
    %p81 = scmp.eq.s32.totalorder %s19, 0
    %p82 = por %p80, %p81
    %p83 = scmp.ne.s32.totalorder %s71, %s72
    %p84 = scmp.eq.s32.totalorder %s20, 1
    %p85 = por %p83, %p84
    %p87 = scmp.ne.s32.totalorder %s72, %s86
    %p88 = scmp.eq.s32.totalorder %s20, 0
    %p89 = por %p87, %p88
    %s91 = sadd.s32 %s90, 1
    %p94 = scmp.eq.s32.totalorder %s14, 1
    %p95 = scmp.ne.s32.totalorder %s90, %s92
    %p96 = scmp.eq.s32.totalorder %s14, 0
    %p97 = por %p95, %p96
    %p98 = scmp.ne.s32.totalorder %s90, %s92
    %p99 = scmp.eq.s32.totalorder %s19, 1
    %p100 = por %p98, %p99
    %p101 = scmp.ne.s32.totalorder %s92, %s93
    %p102 = scmp.eq.s32.totalorder %s19, 0
    %p103 = por %p101, %p102
    %p104 = scmp.ne.s32.totalorder %s92, %s93
    %p105 = scmp.eq.s32.totalorder %s20, 1
    %p106 = por %p104, %p105
    %p108 = scmp.ne.s32.totalorder %s93, %s107
    %p109 = scmp.eq.s32.totalorder %s20, 0
    %p110 = por %p108, %p109
    %s112 = sadd.s32 %s111, 1
    %p115 = scmp.eq.s32.totalorder %s14, 1
    %p116 = scmp.ne.s32.totalorder %s111, %s113
    %p117 = scmp.eq.s32.totalorder %s14, 0
    %p118 = por %p116, %p117
    %p119 = scmp.ne.s32.totalorder %s111, %s113
    %p120 = scmp.eq.s32.totalorder %s19, 1
    %p121 = por %p119, %p120
    %p122 = scmp.ne.s32.totalorder %s113, %s114
    %p123 = scmp.eq.s32.totalorder %s19, 0
    %p124 = por %p122, %p123
    %p125 = scmp.ne.s32.totalorder %s113, %s114
    %p126 = scmp.eq.s32.totalorder %s20, 1
    %p127 = por %p125, %p126
    %p129 = scmp.ne.s32.totalorder %s114, %s128
    %p130 = scmp.eq.s32.totalorder %s20, 0
    %p131 = por %p129, %p130
    %s133 = sadd.s32 %s132, 1
    %p136 = scmp.eq.s32.totalorder %s14, 1
    %p137 = scmp.ne.s32.totalorder %s132, %s134
    %p138 = scmp.eq.s32.totalorder %s14, 0
    %p139 = por %p137, %p138
    %p140 = scmp.ne.s32.totalorder %s132, %s134
    %p141 = scmp.eq.s32.totalorder %s19, 1
    %p142 = por %p140, %p141
    %p143 = scmp.ne.s32.totalorder %s134, %s135
    %p144 = scmp.eq.s32.totalorder %s19, 0
    %p145 = por %p143, %p144
    %p146 = scmp.ne.s32.totalorder %s134, %s135
    %p147 = scmp.eq.s32.totalorder %s20, 1
    %p148 = por %p146, %p147
    %p150 = scmp.ne.s32.totalorder %s135, %s149
    %p151 = scmp.eq.s32.totalorder %s20, 0
    %p152 = por %p150, %p151
    %s154 = sadd.s32 %s153, 1
    %p157 = scmp.eq.s32.totalorder %s14, 1
    %p158 = scmp.ne.s32.totalorder %s153, %s155
    %p159 = scmp.eq.s32.totalorder %s14, 0
    %p160 = por %p158, %p159
    %p161 = scmp.ne.s32.totalorder %s153, %s155
    %p162 = scmp.eq.s32.totalorder %s19, 1
    %p163 = por %p161, %p162
    %p164 = scmp.ne.s32.totalorder %s155, %s156
    %p165 = scmp.eq.s32.totalorder %s19, 0
    %p166 = por %p164, %p165
    %p167 = scmp.ne.s32.totalorder %s155, %s156
    %p168 = scmp.eq.s32.totalorder %s20, 1
    %p169 = por %p167, %p168
    %p171 = scmp.ne.s32.totalorder %s156, %s170
    %p172 = scmp.eq.s32.totalorder %s20, 0
    %p173 = por %p171, %p172
    %s175 = sadd.s32 %s174, 1
    %p178 = scmp.eq.s32.totalorder %s14, 1
    %p179 = scmp.ne.s32.totalorder %s174, %s176
    %p180 = scmp.eq.s32.totalorder %s14, 0
    %p181 = por %p179, %p180
    %p182 = scmp.ne.s32.totalorder %s174, %s176
    %p183 = scmp.eq.s32.totalorder %s19, 1
    %p184 = por %p182, %p183
    %p185 = scmp.ne.s32.totalorder %s176, %s177
    %p186 = scmp.eq.s32.totalorder %s19, 0
    %p187 = por %p185, %p186
    %p188 = scmp.ne.s32.totalorder %s176, %s177
    %p189 = scmp.eq.s32.totalorder %s20, 1
    %p190 = por %p188, %p189
    %p192 = scmp.ne.s32.totalorder %s177, %s191
    %p193 = scmp.eq.s32.totalorder %s20, 0
    %p194 = por %p192, %p193
    %s195 = ssub.s32 %s14, %s21
    %p196 = scmp.eq.s32.totalorder %s195, 0
    %s198 = sadd.s32 %s197, 1
    %s199 = scalar_select %p196, %s197, %s198
    %p202 = pneg %p196
    %p203 = scmp.eq.s32.totalorder %s14, 1
    %p204 = por %p202, %p203
    %p205 = scmp.ne.s32.totalorder %s197, %s200
    %p206 = scmp.eq.s32.totalorder %s14, 0
    %p207 = por %p205, %p206
    %p208 = scmp.ne.s32.totalorder %s197, %s200
    %p209 = scmp.eq.s32.totalorder %s19, 1
    %p210 = por %p208, %p209
    %p211 = scmp.ne.s32.totalorder %s200, %s201
    %p212 = scmp.eq.s32.totalorder %s19, 0
    %p213 = por %p211, %p212
    %p214 = scmp.ne.s32.totalorder %s200, %s201
    %p215 = scmp.eq.s32.totalorder %s20, 1
    %p216 = por %p214, %p215
    %p218 = scmp.ne.s32.totalorder %s201, %s217
    %p219 = scmp.eq.s32.totalorder %s20, 0
    %p220 = por %p218, %p219
    %p221 = scmp.le.s32.totalorder 1, %s14
    %p222 = scmp.lt.s32.totalorder %s14, 3
    %p223 = pnand %p221, %p222
    %p224 = pneg %p223
    // Predicated region
    $region9: #{transformer_forward.15} parent=5 // pred_check
      _
    $region10: #{transformer_forward.15} parent=5 // pred_check_branch
      %226 = sbr.rel (%p223) target = $region12
    $region11: #{transformer_forward.15} parent=5 // pred_region
      %s227 = ssub.s32 %s14, 1
      // Predicated region
      $region13: #{transformer_forward.15} parent=11 // pred_check
        %p228 = pneg %p61
      $region14: #{transformer_forward.15} parent=11 // pred_check_branch
        %230 = sbr.rel (%p228) target = $region16
      $region15: #{transformer_forward.15} parent=11 // pred_region
        _
      $region16: #{transformer_forward.15} parent=11 // pred_fallthru
        _
      // Predicated region
      $region17: #{transformer_forward.15} parent=11 // pred_check
        %p231 = pneg %p82
      $region18: #{transformer_forward.15} parent=11 // pred_check_branch
        %233 = sbr.rel (%p231) target = $region20
      $region19: #{transformer_forward.15} parent=11 // pred_region
        _
      $region20: #{transformer_forward.15} parent=11 // pred_fallthru
        _
      // Predicated region
      $region21: #{transformer_forward.15} parent=11 // pred_check
        %p234 = pneg %p103
      $region22: #{transformer_forward.15} parent=11 // pred_check_branch
        %236 = sbr.rel (%p234) target = $region24
      $region23: #{transformer_forward.15} parent=11 // pred_region
        _
      $region24: #{transformer_forward.15} parent=11 // pred_fallthru
        _
      // Predicated region
      $region25: #{transformer_forward.15} parent=11 // pred_check
        %p237 = pneg %p124
      $region26: #{transformer_forward.15} parent=11 // pred_check_branch
        %239 = sbr.rel (%p237) target = $region28
      $region27: #{transformer_forward.15} parent=11 // pred_region
        _
      $region28: #{transformer_forward.15} parent=11 // pred_fallthru
        _
      // Predicated region
      $region29: #{transformer_forward.15} parent=11 // pred_check
        %p240 = pneg %p145
      $region30: #{transformer_forward.15} parent=11 // pred_check_branch
        %242 = sbr.rel (%p240) target = $region32
      $region31: #{transformer_forward.15} parent=11 // pred_region
        _
      $region32: #{transformer_forward.15} parent=11 // pred_fallthru
        _
      // Predicated region
      $region33: #{transformer_forward.15} parent=11 // pred_check
        %p243 = pneg %p166
      $region34: #{transformer_forward.15} parent=11 // pred_check_branch
        %245 = sbr.rel (%p243) target = $region36
      $region35: #{transformer_forward.15} parent=11 // pred_region
        _
      $region36: #{transformer_forward.15} parent=11 // pred_fallthru
        _
      // Predicated region
      $region37: #{transformer_forward.15} parent=11 // pred_check
        %p246 = pneg %p187
      $region38: #{transformer_forward.15} parent=11 // pred_check_branch
        %248 = sbr.rel (%p246) target = $region40
      $region39: #{transformer_forward.15} parent=11 // pred_region
        _
      $region40: #{transformer_forward.15} parent=11 // pred_fallthru
        _
    $region12: #{transformer_forward.15} parent=5 // pred_fallthru
      _
    %p249 = scmp.lt.s32.totalorder %s14, 2
    // Predicated region
    $region41: #{transformer_forward.15} parent=5 // pred_check
      %p250 = pneg %p249
    $region42: #{transformer_forward.15} parent=5 // pred_check_branch
      %252 = sbr.rel (%p250) target = $region44
    $region43: #{transformer_forward.15} parent=5 // pred_region
      // Predicated region
      $region45: #{transformer_forward.15} parent=43 // pred_check
        %p253 = pneg %p34
      $region46: #{transformer_forward.15} parent=43 // pred_check_branch
        %255 = sbr.rel (%p253) target = $region48
      $region47: #{transformer_forward.15} parent=43 // pred_region
        %p256 = scmp.lt.s32.totalorder %s14, 1
        %s257 = scalar_select %p256, %s14, 1
        %s258 = smul.addr %s257, 4
        %s259 = scalar_lea.vmem %s0, %s258
      $region48: #{transformer_forward.15} parent=43 // pred_fallthru
        _
    $region44: #{transformer_forward.15} parent=5 // pred_fallthru
      _
    %p260 = scmp.le.s32.totalorder 1, %s14
    %p261 = scmp.lt.s32.totalorder %s14, 3
    %p262 = pnand %p260, %p261
    %p263 = pneg %p262
    // Predicated region
    $region49: #{transformer_forward.15} parent=5 // pred_check
      _
    $region50: #{transformer_forward.15} parent=5 // pred_check_branch
      %265 = sbr.rel (%p262) target = $region52
    $region51: #{transformer_forward.15} parent=5 // pred_region
      %s266 = ssub.s32 %s14, 1
      %p267 = scmp.lt.s32.totalorder %s19, 1
      %s268 = scalar_select %p267, %s19, 1
      %s269 = smul.addr %s268, 4
      %s270 = scalar_lea.vmem %s0, %s269
      %p271 = pneg %p40
      %p272 = pneg %p37
      %p273 = pneg %p61
      %p274 = pneg %p58
      %p275 = pneg %p82
      %p276 = pneg %p79
      %p277 = pneg %p103
      %p278 = pneg %p100
      %p279 = pneg %p124
      %p280 = pneg %p121
      %p281 = pneg %p145
      %p282 = pneg %p142
      %p283 = pneg %p166
      %p284 = pneg %p163
      %p285 = pneg %p187
      %p286 = pneg %p184
      %p287 = pneg %p213
      %p288 = pneg %p210
      %p289 = scmp.lt.s32.totalorder %s19, 1
      %s290 = scalar_select %p289, %s19, 1
      %s291 = smul.addr %s290, 4
      %s292 = scalar_lea.vmem %s8, %s291
      %p293 = scmp.lt.s32.totalorder %s19, 1
      %s294 = scalar_select %p293, %s19, 1
      %s295 = smul.addr %s294, 4
      %s296 = scalar_lea.vmem %s0, %s295
      %p297 = scmp.lt.s32.totalorder %s19, 1
      %s298 = scalar_select %p297, %s19, 1
      %s299 = smul.addr %s298, 4
      %s300 = scalar_lea.vmem %s8, %s299
      %v302 = vld [vmem:[%s7] sm:$0xff]
      %v303 = vld [vmem:[%s296] sm:$0xf]
      %v304 = vld [vmem:[%s1] sm:$0xf]
      %v305 = vld [vmem:[%s1 + $0x4] sm:$0xf]
      %v306 = vld [vmem:[%s1 + $0x8] sm:$0xf]
      %v307 = vld [vmem:[%s1 + $0xc] sm:$0xf]
      %v308 = vld [vmem:[%s2] sm:$0x1]
      %v310 = vlaneseq
      %v311 = vshrl.u32 %v310, 7
      %v312 = vsub.s32 0, %v311
      %v313 = vrot.slane %v308, %v312
      %v319 = vunpack.c.l.b16 %v304
      %v320 = vunpack.c.l.b16 %v305
      %v321 = vunpack.c.l.b16 %v306
      %v322 = vunpack.c.l.b16 %v307
      %v323 = vpack.c.b16 %v320, %v319
      %v324 = vpack.c.b16 %v322, %v321
      %vm327 = vcmask 261120
      %v329 = vsel %vm327, %v303, 0
      %331 = vmatprep.subr.bf16.mxu0 0
      %332 = vmatpush1.bf16.msra.mxu0 %v323
      %333 = vmatprep.subr.bf16.mxu0 0
      %334 = vmatpush1.bf16.msra.mxu0 %v324
      %335 = vmatprep.subr.bf16.mxu0 0
      %336 = vmatpush1.bf16.msra.mxu0 0
      %337 = vmatprep.subr.bf16.mxu0 0
      %338 = vmatpush1.bf16.msra.mxu0 0
      %339 = vmatprep.subr.bf16.mxu0 0
      %340 = vmatpush1.bf16.msra.mxu0 0
      %341 = vmatprep.subr.bf16.mxu0 0
      %342 = vmatpush1.bf16.msra.mxu0 0
      %343 = vmatprep.subr.bf16.mxu0 0
      %344 = vmatpush1.bf16.msra.mxu0 0
      %345 = vmatprep.subr.bf16.mxu0 0
      %346 = vmatpush1.bf16.msra.mxu0 0
      %347 = vmatprep.subr.bf16.mxu0 0
      %348 = vmatpush1.bf16.msra.mxu0 0
      %349 = vmatprep.subr.bf16.mxu0 0
      %350 = vmatpush1.bf16.msra.mxu0 0
      %351 = vmatprep.subr.bf16.mxu0 0
      %352 = vmatpush1.bf16.msra.mxu0 0
      %353 = vmatprep.subr.bf16.mxu0 0
      %354 = vmatpush1.bf16.msra.mxu0 0
      %355 = vmatprep.subr.bf16.mxu0 0
      %356 = vmatpush1.bf16.msra.mxu0 0
      %357 = vmatprep.subr.bf16.mxu0 0
      %358 = vmatpush1.bf16.msra.mxu0 0
      %359 = vmatprep.subr.bf16.mxu0 0
      %360 = vmatpush1.bf16.msra.mxu0 0
      %361 = vmatprep.subr.bf16.mxu0 0
      %362 = vmatpush1.bf16.msra.mxu0 0
      %363 = vmatprep.mubr.bf16.mxu0 0
      %364 = vmatmul.mubr.bf16.gmra.mrb[0].mxu0 %v329
      %v365 = vpop.f32.mrb[0].mxu0
      %v366 = vadd.f32 %v313, %v365
      %v367 = vpop.f32.mrb[0].mxu0
      %v368 = vpop.f32.mrb[0].mxu0
      %v369 = vpop.f32.mrb[0].mxu0
      %370 = vdwg.mxu0
      %v371 = vmul.f32 %v366, 0.35355338
      %v372 = vpack.c.bf16 %v371, %v371
      %v373 = vpack.c.bf16 %v366, %v366
      %375 = vrot.lane.b32.xlu0 %v373, 96
      %v376 = vpop.permute.xlu0 %375
      %vm377 = vcmask 64512
      %v379 = vsel %vm377, %v372, 0
      %v382 = vsel %vm377, %v376, 0
      %384 = vmatprep.subr.bf16.mxu0 0
      %385 = vmatpush1.bf16.xpose.msra.mxu0 %v382
      %386 = vmatprep.subr.bf16.mxu0 0
      %387 = vmatpush1.bf16.xpose.msra.mxu0 0
      %388 = vmatprep.subr.bf16.mxu0 0
      %389 = vmatpush1.bf16.xpose.msra.mxu0 0
      %390 = vmatprep.subr.bf16.mxu0 0
      %391 = vmatpush1.bf16.xpose.msra.mxu0 0
      %392 = vmatprep.subr.bf16.mxu0 0
      %393 = vmatpush1.bf16.xpose.msra.mxu0 0
      %394 = vmatprep.subr.bf16.mxu0 0
      %395 = vmatpush1.bf16.xpose.msra.mxu0 0
      %396 = vmatprep.subr.bf16.mxu0 0
      %397 = vmatpush1.bf16.xpose.msra.mxu0 0
      %398 = vmatprep.subr.bf16.mxu0 0
      %399 = vmatpush1.bf16.xpose.msra.mxu0 0
      %400 = vmatprep.subr.bf16.mxu0 0
      %401 = vmatpush1.bf16.xpose.msra.mxu0 0
      %402 = vmatprep.subr.bf16.mxu0 0
      %403 = vmatpush1.bf16.xpose.msra.mxu0 0
      %404 = vmatprep.subr.bf16.mxu0 0
      %405 = vmatpush1.bf16.xpose.msra.mxu0 0
      %406 = vmatprep.subr.bf16.mxu0 0
      %407 = vmatpush1.bf16.xpose.msra.mxu0 0
      %408 = vmatprep.subr.bf16.mxu0 0
      %409 = vmatpush1.bf16.xpose.msra.mxu0 0
      %410 = vmatprep.subr.bf16.mxu0 0
      %411 = vmatpush1.bf16.xpose.msra.mxu0 0
      %412 = vmatprep.subr.bf16.mxu0 0
      %413 = vmatpush1.bf16.xpose.msra.mxu0 0
      %414 = vmatprep.subr.bf16.mxu0 0
      %415 = vmatpush1.bf16.xpose.msra.mxu0 0
      %416 = vmatprep.mubr.bf16.mxu0 0
      %417 = vmatmul.mubr.bf16.gmra.mrb[0].mxu0 %v379
      %v418 = vpop.f32.mrb[0].mxu0
      %v419 = vadd.f32 %v302, %v418
      %v420 = vpop.f32.mrb[0].mxu0
      %v421 = vpop.f32.mrb[0].mxu0
      %v422 = vpop.f32.mrb[0].mxu0
      %423 = vdwg.mxu0
      %v424 = vsel %vm377, %v419, -inf
      %425 = vmax.xlane.f32.xlu0 %v424
      %v426 = vpop.xlane.xlu0 %425
      %v427 = vsub.f32 %v419, %v426
      %v428 = vmul.f32 %v427, 1.442695
      %v429 = vpow.pop %v428
      %v430 = vsel %vm377, %v429, 0.0
      %431 = vadd.xlane.f32.xlu0 %v430
      %v432 = vpop.xlane.xlu0 %431
      %v433 = vrcp.pop %v432
      %v434 = vmul.f32 %v429, %v433
      %v435 = vpack.c.bf16 %v434, %v434
      %436 = vrot.lane.b32.xlu0 %v373, 64
      %v437 = vpop.permute.xlu0 %436
      %v439 = vsel %vm377, %v435, 0
      %vm441 = vcmask 1043456
      %v443 = vsel %vm441, %v437, 0
      %445 = vmatprep.subr.bf16.mxu0 0
      %446 = vmatpush1.bf16.msra.mxu0 %v443
      %447 = vmatprep.subr.bf16.mxu0 0
      %448 = vmatpush1.bf16.msra.mxu0 0
      %449 = vmatprep.subr.bf16.mxu0 0
      %450 = vmatpush1.bf16.msra.mxu0 0
      %451 = vmatprep.subr.bf16.mxu0 0
      %452 = vmatpush1.bf16.msra.mxu0 0
      %453 = vmatprep.subr.bf16.mxu0 0
      %454 = vmatpush1.bf16.msra.mxu0 0
      %455 = vmatprep.subr.bf16.mxu0 0
      %456 = vmatpush1.bf16.msra.mxu0 0
      %457 = vmatprep.subr.bf16.mxu0 0
      %458 = vmatpush1.bf16.msra.mxu0 0
      %459 = vmatprep.subr.bf16.mxu0 0
      %460 = vmatpush1.bf16.msra.mxu0 0
      %461 = vmatprep.subr.bf16.mxu0 0
      %462 = vmatpush1.bf16.msra.mxu0 0
      %463 = vmatprep.subr.bf16.mxu0 0
      %464 = vmatpush1.bf16.msra.mxu0 0
      %465 = vmatprep.subr.bf16.mxu0 0
      %466 = vmatpush1.bf16.msra.mxu0 0
      %467 = vmatprep.subr.bf16.mxu0 0
      %468 = vmatpush1.bf16.msra.mxu0 0
      %469 = vmatprep.subr.bf16.mxu0 0
      %470 = vmatpush1.bf16.msra.mxu0 0
      %471 = vmatprep.subr.bf16.mxu0 0
      %472 = vmatpush1.bf16.msra.mxu0 0
      %473 = vmatprep.subr.bf16.mxu0 0
      %474 = vmatpush1.bf16.msra.mxu0 0
      %475 = vmatprep.subr.bf16.mxu0 0
      %476 = vmatpush1.bf16.msra.mxu0 0
      %477 = vmatprep.mubr.bf16.mxu0 0
      %478 = vmatmul.mubr.bf16.gmra.mrb[0].mxu0 %v439
      %v479 = vpop.f32.mrb[0].mxu0
      %v480 = vadd.f32 0.0, %v479
      %v481 = vpop.f32.mrb[0].mxu0
      %v482 = vpop.f32.mrb[0].mxu0
      %v483 = vpop.f32.mrb[0].mxu0
      %484 = vdwg.mxu0
      %v485 = vpack.c.bf16 %v480, %v480
      %v486 = vld [vmem:[%s3] sm:$0xf]
      %488 = vrot.lane.b32.xlu0 %v372, 120
      %v489 = vpop.permute.xlu0 %488
      %490 = vrot.lane.b32.xlu0 %v373, 88
      %v491 = vpop.permute.xlu0 %490
      %v493 = vsel %vm377, %v489, 0
      %v496 = vsel %vm377, %v491, 0
      %498 = vmatprep.subr.bf16.mxu0 0
      %499 = vmatpush1.bf16.xpose.msra.mxu0 %v496
      %500 = vmatprep.subr.bf16.mxu0 0
      %501 = vmatpush1.bf16.xpose.msra.mxu0 0
      %502 = vmatprep.subr.bf16.mxu0 0
      %503 = vmatpush1.bf16.xpose.msra.mxu0 0
      %504 = vmatprep.subr.bf16.mxu0 0
      %505 = vmatpush1.bf16.xpose.msra.mxu0 0
      %506 = vmatprep.subr.bf16.mxu0 0
      %507 = vmatpush1.bf16.xpose.msra.mxu0 0
      %508 = vmatprep.subr.bf16.mxu0 0
      %509 = vmatpush1.bf16.xpose.msra.mxu0 0
      %510 = vmatprep.subr.bf16.mxu0 0
      %511 = vmatpush1.bf16.xpose.msra.mxu0 0
      %512 = vmatprep.subr.bf16.mxu0 0
      %513 = vmatpush1.bf16.xpose.msra.mxu0 0
      %514 = vmatprep.subr.bf16.mxu0 0
      %515 = vmatpush1.bf16.xpose.msra.mxu0 0
      %516 = vmatprep.subr.bf16.mxu0 0
      %517 = vmatpush1.bf16.xpose.msra.mxu0 0
      %518 = vmatprep.subr.bf16.mxu0 0
      %519 = vmatpush1.bf16.xpose.msra.mxu0 0
      %520 = vmatprep.subr.bf16.mxu0 0
      %521 = vmatpush1.bf16.xpose.msra.mxu0 0
      %522 = vmatprep.subr.bf16.mxu0 0
      %523 = vmatpush1.bf16.xpose.msra.mxu0 0
      %524 = vmatprep.subr.bf16.mxu0 0
      %525 = vmatpush1.bf16.xpose.msra.mxu0 0
      %526 = vmatprep.subr.bf16.mxu0 0
      %527 = vmatpush1.bf16.xpose.msra.mxu0 0
      %528 = vmatprep.subr.bf16.mxu0 0
      %529 = vmatpush1.bf16.xpose.msra.mxu0 0
      %530 = vmatprep.mubr.bf16.mxu0 0
      %531 = vmatmul.mubr.bf16.gmra.mrb[0].mxu0 %v493
      %v532 = vpop.f32.mrb[0].mxu0
      %v533 = vadd.f32 %v302, %v532
      %v534 = vpop.f32.mrb[0].mxu0
      %v535 = vpop.f32.mrb[0].mxu0
      %v536 = vpop.f32.mrb[0].mxu0
      %537 = vdwg.mxu0
      %v538 = vsel %vm377, %v533, -inf
      %539 = vmax.xlane.f32.xlu0 %v538
      %v540 = vpop.xlane.xlu0 %539
      %v541 = vsub.f32 %v533, %v540
      %v542 = vmul.f32 %v541, 1.442695
      %v543 = vpow.pop %v542
      %v544 = vsel %vm377, %v543, 0.0
      %545 = vadd.xlane.f32.xlu0 %v544
      %v546 = vpop.xlane.xlu0 %545
      %v547 = vrcp.pop %v546
      %v548 = vmul.f32 %v543, %v547
      %v549 = vpack.c.bf16 %v548, %v548
      %550 = vrot.lane.b32.xlu0 %v373, 56
      %v551 = vpop.permute.xlu0 %550
      %v553 = vsel %vm377, %v549, 0
      %v556 = vsel %vm441, %v551, 0
      %558 = vmatprep.subr.bf16.mxu0 0
      %559 = vmatpush1.bf16.msra.mxu0 %v556
      %560 = vmatprep.subr.bf16.mxu0 0
      %561 = vmatpush1.bf16.msra.mxu0 0
      %562 = vmatprep.subr.bf16.mxu0 0
      %563 = vmatpush1.bf16.msra.mxu0 0
      %564 = vmatprep.subr.bf16.mxu0 0
      %565 = vmatpush1.bf16.msra.mxu0 0
      %566 = vmatprep.subr.bf16.mxu0 0
      %567 = vmatpush1.bf16.msra.mxu0 0
      %568 = vmatprep.subr.bf16.mxu0 0
      %569 = vmatpush1.bf16.msra.mxu0 0
      %570 = vmatprep.subr.bf16.mxu0 0
      %571 = vmatpush1.bf16.msra.mxu0 0
      %572 = vmatprep.subr.bf16.mxu0 0
      %573 = vmatpush1.bf16.msra.mxu0 0
      %574 = vmatprep.subr.bf16.mxu0 0
      %575 = vmatpush1.bf16.msra.mxu0 0
      %576 = vmatprep.subr.bf16.mxu0 0
      %577 = vmatpush1.bf16.msra.mxu0 0
      %578 = vmatprep.subr.bf16.mxu0 0
      %579 = vmatpush1.bf16.msra.mxu0 0
      %580 = vmatprep.subr.bf16.mxu0 0
      %581 = vmatpush1.bf16.msra.mxu0 0
      %582 = vmatprep.subr.bf16.mxu0 0
      %583 = vmatpush1.bf16.msra.mxu0 0
      %584 = vmatprep.subr.bf16.mxu0 0
      %585 = vmatpush1.bf16.msra.mxu0 0
      %586 = vmatprep.subr.bf16.mxu0 0
      %587 = vmatpush1.bf16.msra.mxu0 0
      %588 = vmatprep.subr.bf16.mxu0 0
      %589 = vmatpush1.bf16.msra.mxu0 0
      %590 = vmatprep.mubr.bf16.mxu0 0
      %591 = vmatmul.mubr.bf16.gmra.mrb[0].mxu0 %v553
      %v592 = vpop.f32.mrb[0].mxu0
      %v593 = vadd.f32 0.0, %v592
      %v594 = vpop.f32.mrb[0].mxu0
      %v595 = vpop.f32.mrb[0].mxu0
      %v596 = vpop.f32.mrb[0].mxu0
      %597 = vdwg.mxu0
      %v598 = vpack.c.bf16 %v593, %v593
      %v599 = vld [vmem:[%s3 + $0x4] sm:$0xf]
      %v601 = vsel %vm377, %v598, 0
      %v604 = vsel %vm441, %v599, 0
      %606 = vmatprep.subr.bf16.mxu0 0
      %607 = vmatpush1.bf16.msra.mxu0 %v604
      %608 = vmatprep.subr.bf16.mxu0 0
      %609 = vmatpush1.bf16.msra.mxu0 0
      %610 = vmatprep.subr.bf16.mxu0 0
      %611 = vmatpush1.bf16.msra.mxu0 0
      %612 = vmatprep.subr.bf16.mxu0 0
      %613 = vmatpush1.bf16.msra.mxu0 0
      %614 = vmatprep.subr.bf16.mxu0 0
      %615 = vmatpush1.bf16.msra.mxu0 0
      %616 = vmatprep.subr.bf16.mxu0 0
      %617 = vmatpush1.bf16.msra.mxu0 0
      %618 = vmatprep.subr.bf16.mxu0 0
      %619 = vmatpush1.bf16.msra.mxu0 0
      %620 = vmatprep.subr.bf16.mxu0 0
      %621 = vmatpush1.bf16.msra.mxu0 0
      %622 = vmatprep.subr.bf16.mxu0 0
      %623 = vmatpush1.bf16.msra.mxu0 0
      %624 = vmatprep.subr.bf16.mxu0 0
      %625 = vmatpush1.bf16.msra.mxu0 0
      %626 = vmatprep.subr.bf16.mxu0 0
      %627 = vmatpush1.bf16.msra.mxu0 0
      %628 = vmatprep.subr.bf16.mxu0 0
      %629 = vmatpush1.bf16.msra.mxu0 0
      %630 = vmatprep.subr.bf16.mxu0 0
      %631 = vmatpush1.bf16.msra.mxu0 0
      %632 = vmatprep.subr.bf16.mxu0 0
      %633 = vmatpush1.bf16.msra.mxu0 0
      %634 = vmatprep.subr.bf16.mxu0 0
      %635 = vmatpush1.bf16.msra.mxu0 0
      %636 = vmatprep.subr.bf16.mxu0 0
      %637 = vmatpush1.bf16.msra.mxu0 0
      %638 = vmatprep.mubr.bf16.mxu0 0
      %639 = vmatmul.mubr.bf16.gmra.mrb[0].mxu0 %v601
      %v640 = vpop.f32.mrb[0].mxu0
      %v641 = vadd.f32 0.0, %v640
      %v642 = vpop.f32.mrb[0].mxu0
      %v643 = vpop.f32.mrb[0].mxu0
      %v644 = vpop.f32.mrb[0].mxu0
      %645 = vdwg.mxu0
      %v647 = vsel %vm377, %v485, 0
      %v650 = vsel %vm441, %v486, 0
      %652 = vmatprep.subr.bf16.mxu0 0
      %653 = vmatpush1.bf16.msra.mxu0 %v650
      %654 = vmatprep.subr.bf16.mxu0 0
      %655 = vmatpush1.bf16.msra.mxu0 0
      %656 = vmatprep.subr.bf16.mxu0 0
      %657 = vmatpush1.bf16.msra.mxu0 0
      %658 = vmatprep.subr.bf16.mxu0 0
      %659 = vmatpush1.bf16.msra.mxu0 0
      %660 = vmatprep.subr.bf16.mxu0 0
      %661 = vmatpush1.bf16.msra.mxu0 0
      %662 = vmatprep.subr.bf16.mxu0 0
      %663 = vmatpush1.bf16.msra.mxu0 0
      %664 = vmatprep.subr.bf16.mxu0 0
      %665 = vmatpush1.bf16.msra.mxu0 0
      %666 = vmatprep.subr.bf16.mxu0 0
      %667 = vmatpush1.bf16.msra.mxu0 0
      %668 = vmatprep.subr.bf16.mxu0 0
      %669 = vmatpush1.bf16.msra.mxu0 0
      %670 = vmatprep.subr.bf16.mxu0 0
      %671 = vmatpush1.bf16.msra.mxu0 0
      %672 = vmatprep.subr.bf16.mxu0 0
      %673 = vmatpush1.bf16.msra.mxu0 0
      %674 = vmatprep.subr.bf16.mxu0 0
      %675 = vmatpush1.bf16.msra.mxu0 0
      %676 = vmatprep.subr.bf16.mxu0 0
      %677 = vmatpush1.bf16.msra.mxu0 0
      %678 = vmatprep.subr.bf16.mxu0 0
      %679 = vmatpush1.bf16.msra.mxu0 0
      %680 = vmatprep.subr.bf16.mxu0 0
      %681 = vmatpush1.bf16.msra.mxu0 0
      %682 = vmatprep.subr.bf16.mxu0 0
      %683 = vmatpush1.bf16.msra.mxu0 0
      %684 = vmatprep.mubr.bf16.mxu0 0
      %685 = vmatmul.mubr.bf16.gmra.mrb[0].mxu0 %v647
      %v686 = vpop.f32.mrb[0].mxu0
      %v687 = vadd.f32 %v641, %v686
      %v688 = vpop.f32.mrb[0].mxu0
      %v689 = vpop.f32.mrb[0].mxu0
      %v690 = vpop.f32.mrb[0].mxu0
      %691 = vdwg.mxu0
      %692 = vrot.lane.b32.xlu0 %v372, 112
      %v693 = vpop.permute.xlu0 %692
      %694 = vrot.lane.b32.xlu0 %v373, 80
      %v695 = vpop.permute.xlu0 %694
      %v697 = vsel %vm377, %v693, 0
      %v700 = vsel %vm377, %v695, 0
      %702 = vmatprep.subr.bf16.mxu0 0
      %703 = vmatpush1.bf16.xpose.msra.mxu0 %v700
      %704 = vmatprep.subr.bf16.mxu0 0
      %705 = vmatpush1.bf16.xpose.msra.mxu0 0
      %706 = vmatprep.subr.bf16.mxu0 0
      %707 = vmatpush1.bf16.xpose.msra.mxu0 0
      %708 = vmatprep.subr.bf16.mxu0 0
      %709 = vmatpush1.bf16.xpose.msra.mxu0 0
      %710 = vmatprep.subr.bf16.mxu0 0
      %711 = vmatpush1.bf16.xpose.msra.mxu0 0
      %712 = vmatprep.subr.bf16.mxu0 0
      %713 = vmatpush1.bf16.xpose.msra.mxu0 0
      %714 = vmatprep.subr.bf16.mxu0 0
      %715 = vmatpush1.bf16.xpose.msra.mxu0 0
      %716 = vmatprep.subr.bf16.mxu0 0
      %717 = vmatpush1.bf16.xpose.msra.mxu0 0
      %718 = vmatprep.subr.bf16.mxu0 0
      %719 = vmatpush1.bf16.xpose.msra.mxu0 0
      %720 = vmatprep.subr.bf16.mxu0 0
      %721 = vmatpush1.bf16.xpose.msra.mxu0 0
      %722 = vmatprep.subr.bf16.mxu0 0
      %723 = vmatpush1.bf16.xpose.msra.mxu0 0
      %724 = vmatprep.subr.bf16.mxu0 0
      %725 = vmatpush1.bf16.xpose.msra.mxu0 0
      %726 = vmatprep.subr.bf16.mxu0 0
      %727 = vmatpush1.bf16.xpose.msra.mxu0 0
      %728 = vmatprep.subr.bf16.mxu0 0
      %729 = vmatpush1.bf16.xpose.msra.mxu0 0
      %730 = vmatprep.subr.bf16.mxu0 0
      %731 = vmatpush1.bf16.xpose.msra.mxu0 0
      %732 = vmatprep.subr.bf16.mxu0 0
      %733 = vmatpush1.bf16.xpose.msra.mxu0 0
      %734 = vmatprep.mubr.bf16.mxu0 0
      %735 = vmatmul.mubr.bf16.gmra.mrb[0].mxu0 %v697
      %v736 = vpop.f32.mrb[0].mxu0
      %v737 = vadd.f32 %v302, %v736
      %v738 = vpop.f32.mrb[0].mxu0
      %v739 = vpop.f32.mrb[0].mxu0
      %v740 = vpop.f32.mrb[0].mxu0
      %741 = vdwg.mxu0
      %v742 = vsel %vm377, %v737, -inf
      %743 = vmax.xlane.f32.xlu0 %v742
      %v744 = vpop.xlane.xlu0 %743
      %v745 = vsub.f32 %v737, %v744
      %v746 = vmul.f32 %v745, 1.442695
      %v747 = vpow.pop %v746
      %v748 = vsel %vm377, %v747, 0.0
      %749 = vadd.xlane.f32.xlu0 %v748
      %v750 = vpop.xlane.xlu0 %749
      %v751 = vrcp.pop %v750
      %v752 = vmul.f32 %v747, %v751
      %v753 = vpack.c.bf16 %v752, %v752
      %754 = vrot.lane.b32.xlu0 %v373, 48
      %v755 = vpop.permute.xlu0 %754
      %v757 = vsel %vm377, %v753, 0
      %v760 = vsel %vm441, %v755, 0
      %762 = vmatprep.subr.bf16.mxu0 0
      %763 = vmatpush1.bf16.msra.mxu0 %v760
      %764 = vmatprep.subr.bf16.mxu0 0
      %765 = vmatpush1.bf16.msra.mxu0 0
      %766 = vmatprep.subr.bf16.mxu0 0
      %767 = vmatpush1.bf16.msra.mxu0 0
      %768 = vmatprep.subr.bf16.mxu0 0
      %769 = vmatpush1.bf16.msra.mxu0 0
      %770 = vmatprep.subr.bf16.mxu0 0
      %771 = vmatpush1.bf16.msra.mxu0 0
      %772 = vmatprep.subr.bf16.mxu0 0
      %773 = vmatpush1.bf16.msra.mxu0 0
      %774 = vmatprep.subr.bf16.mxu0 0
      %775 = vmatpush1.bf16.msra.mxu0 0
      %776 = vmatprep.subr.bf16.mxu0 0
      %777 = vmatpush1.bf16.msra.mxu0 0
      %778 = vmatprep.subr.bf16.mxu0 0
      %779 = vmatpush1.bf16.msra.mxu0 0
      %780 = vmatprep.subr.bf16.mxu0 0
      %781 = vmatpush1.bf16.msra.mxu0 0
      %782 = vmatprep.subr.bf16.mxu0 0
      %783 = vmatpush1.bf16.msra.mxu0 0
      %784 = vmatprep.subr.bf16.mxu0 0
      %785 = vmatpush1.bf16.msra.mxu0 0
      %786 = vmatprep.subr.bf16.mxu0 0
      %787 = vmatpush1.bf16.msra.mxu0 0
      %788 = vmatprep.subr.bf16.mxu0 0
      %789 = vmatpush1.bf16.msra.mxu0 0
      %790 = vmatprep.subr.bf16.mxu0 0
      %791 = vmatpush1.bf16.msra.mxu0 0
      %792 = vmatprep.subr.bf16.mxu0 0
      %793 = vmatpush1.bf16.msra.mxu0 0
      %794 = vmatprep.mubr.bf16.mxu0 0
      %795 = vmatmul.mubr.bf16.gmra.mrb[0].mxu0 %v757
      %v796 = vpop.f32.mrb[0].mxu0
      %v797 = vadd.f32 0.0, %v796
      %v798 = vpop.f32.mrb[0].mxu0
      %v799 = vpop.f32.mrb[0].mxu0
      %v800 = vpop.f32.mrb[0].mxu0
      %801 = vdwg.mxu0
      %v802 = vpack.c.bf16 %v797, %v797
      %v803 = vld [vmem:[%s3 + $0x8] sm:$0xf]
      %v805 = vsel %vm377, %v802, 0
      %v808 = vsel %vm441, %v803, 0
      %810 = vmatprep.subr.bf16.mxu0 0
      %811 = vmatpush1.bf16.msra.mxu0 %v808
      %812 = vmatprep.subr.bf16.mxu0 0
      %813 = vmatpush1.bf16.msra.mxu0 0
      %814 = vmatprep.subr.bf16.mxu0 0
      %815 = vmatpush1.bf16.msra.mxu0 0
      %816 = vmatprep.subr.bf16.mxu0 0
      %817 = vmatpush1.bf16.msra.mxu0 0
      %818 = vmatprep.subr.bf16.mxu0 0
      %819 = vmatpush1.bf16.msra.mxu0 0
      %820 = vmatprep.subr.bf16.mxu0 0
      %821 = vmatpush1.bf16.msra.mxu0 0
      %822 = vmatprep.subr.bf16.mxu0 0
      %823 = vmatpush1.bf16.msra.mxu0 0
      %824 = vmatprep.subr.bf16.mxu0 0
      %825 = vmatpush1.bf16.msra.mxu0 0
      %826 = vmatprep.subr.bf16.mxu0 0
      %827 = vmatpush1.bf16.msra.mxu0 0
      %828 = vmatprep.subr.bf16.mxu0 0
      %829 = vmatpush1.bf16.msra.mxu0 0
      %830 = vmatprep.subr.bf16.mxu0 0
      %831 = vmatpush1.bf16.msra.mxu0 0
      %832 = vmatprep.subr.bf16.mxu0 0
      %833 = vmatpush1.bf16.msra.mxu0 0
      %834 = vmatprep.subr.bf16.mxu0 0
      %835 = vmatpush1.bf16.msra.mxu0 0
      %836 = vmatprep.subr.bf16.mxu0 0
      %837 = vmatpush1.bf16.msra.mxu0 0
      %838 = vmatprep.subr.bf16.mxu0 0
      %839 = vmatpush1.bf16.msra.mxu0 0
      %840 = vmatprep.subr.bf16.mxu0 0
      %841 = vmatpush1.bf16.msra.mxu0 0
      %842 = vmatprep.mubr.bf16.mxu0 0
      %843 = vmatmul.mubr.bf16.gmra.mrb[0].mxu0 %v805
      %v844 = vpop.f32.mrb[0].mxu0
      %v845 = vadd.f32 0.0, %v844
      %v846 = vpop.f32.mrb[0].mxu0
      %v847 = vpop.f32.mrb[0].mxu0
      %v848 = vpop.f32.mrb[0].mxu0
      %849 = vdwg.mxu0
      %v850 = vadd.f32 %v687, %v845
      %851 = vrot.lane.b32.xlu0 %v372, 104
      %v852 = vpop.permute.xlu0 %851
      %853 = vrot.lane.b32.xlu0 %v373, 72
      %v854 = vpop.permute.xlu0 %853
      %v856 = vsel %vm377, %v852, 0
      %v859 = vsel %vm377, %v854, 0
      %861 = vmatprep.subr.bf16.mxu0 0
      %862 = vmatpush1.bf16.xpose.msra.mxu0 %v859
      %863 = vmatprep.subr.bf16.mxu0 0
      %864 = vmatpush1.bf16.xpose.msra.mxu0 0
      %865 = vmatprep.subr.bf16.mxu0 0
      %866 = vmatpush1.bf16.xpose.msra.mxu0 0
      %867 = vmatprep.subr.bf16.mxu0 0
      %868 = vmatpush1.bf16.xpose.msra.mxu0 0
      %869 = vmatprep.subr.bf16.mxu0 0
      %870 = vmatpush1.bf16.xpose.msra.mxu0 0
      %871 = vmatprep.subr.bf16.mxu0 0
      %872 = vmatpush1.bf16.xpose.msra.mxu0 0
      %873 = vmatprep.subr.bf16.mxu0 0
      %874 = vmatpush1.bf16.xpose.msra.mxu0 0
      %875 = vmatprep.subr.bf16.mxu0 0
      %876 = vmatpush1.bf16.xpose.msra.mxu0 0
      %877 = vmatprep.subr.bf16.mxu0 0
      %878 = vmatpush1.bf16.xpose.msra.mxu0 0
      %879 = vmatprep.subr.bf16.mxu0 0
      %880 = vmatpush1.bf16.xpose.msra.mxu0 0
      %881 = vmatprep.subr.bf16.mxu0 0
      %882 = vmatpush1.bf16.xpose.msra.mxu0 0
      %883 = vmatprep.subr.bf16.mxu0 0
      %884 = vmatpush1.bf16.xpose.msra.mxu0 0
      %885 = vmatprep.subr.bf16.mxu0 0
      %886 = vmatpush1.bf16.xpose.msra.mxu0 0
      %887 = vmatprep.subr.bf16.mxu0 0
      %888 = vmatpush1.bf16.xpose.msra.mxu0 0
      %889 = vmatprep.subr.bf16.mxu0 0
      %890 = vmatpush1.bf16.xpose.msra.mxu0 0
      %891 = vmatprep.subr.bf16.mxu0 0
      %892 = vmatpush1.bf16.xpose.msra.mxu0 0
      %893 = vmatprep.mubr.bf16.mxu0 0
      %894 = vmatmul.mubr.bf16.gmra.mrb[0].mxu0 %v856
      %v895 = vpop.f32.mrb[0].mxu0
      %v896 = vadd.f32 %v302, %v895
      %v897 = vpop.f32.mrb[0].mxu0
      %v898 = vpop.f32.mrb[0].mxu0
      %v899 = vpop.f32.mrb[0].mxu0
      %900 = vdwg.mxu0
      %v901 = vsel %vm377, %v896, -inf
      %902 = vmax.xlane.f32.xlu0 %v901
      %v903 = vpop.xlane.xlu0 %902
      %v904 = vsub.f32 %v896, %v903
      %v905 = vmul.f32 %v904, 1.442695
      %v906 = vpow.pop %v905
      %v907 = vsel %vm377, %v906, 0.0
      %908 = vadd.xlane.f32.xlu0 %v907
      %v909 = vpop.xlane.xlu0 %908
      %v910 = vrcp.pop %v909
      %v911 = vmul.f32 %v906, %v910
      %v912 = vpack.c.bf16 %v911, %v911
      %913 = vrot.lane.b32.xlu0 %v373, 40
      %v914 = vpop.permute.xlu0 %913
      %v916 = vsel %vm377, %v912, 0
      %v919 = vsel %vm441, %v914, 0
      %921 = vmatprep.subr.bf16.mxu0 0
      %922 = vmatpush1.bf16.msra.mxu0 %v919
      %923 = vmatprep.subr.bf16.mxu0 0
      %924 = vmatpush1.bf16.msra.mxu0 0
      %925 = vmatprep.subr.bf16.mxu0 0
      %926 = vmatpush1.bf16.msra.mxu0 0
      %927 = vmatprep.subr.bf16.mxu0 0
      %928 = vmatpush1.bf16.msra.mxu0 0
      %929 = vmatprep.subr.bf16.mxu0 0
      %930 = vmatpush1.bf16.msra.mxu0 0
      %931 = vmatprep.subr.bf16.mxu0 0
      %932 = vmatpush1.bf16.msra.mxu0 0
      %933 = vmatprep.subr.bf16.mxu0 0
      %934 = vmatpush1.bf16.msra.mxu0 0
      %935 = vmatprep.subr.bf16.mxu0 0
      %936 = vmatpush1.bf16.msra.mxu0 0
      %937 = vmatprep.subr.bf16.mxu0 0
      %938 = vmatpush1.bf16.msra.mxu0 0
      %939 = vmatprep.subr.bf16.mxu0 0
      %940 = vmatpush1.bf16.msra.mxu0 0
      %941 = vmatprep.subr.bf16.mxu0 0
      %942 = vmatpush1.bf16.msra.mxu0 0
      %943 = vmatprep.subr.bf16.mxu0 0
      %944 = vmatpush1.bf16.msra.mxu0 0
      %945 = vmatprep.subr.bf16.mxu0 0
      %946 = vmatpush1.bf16.msra.mxu0 0
      %947 = vmatprep.subr.bf16.mxu0 0
      %948 = vmatpush1.bf16.msra.mxu0 0
      %949 = vmatprep.subr.bf16.mxu0 0
      %950 = vmatpush1.bf16.msra.mxu0 0
      %951 = vmatprep.subr.bf16.mxu0 0
      %952 = vmatpush1.bf16.msra.mxu0 0
      %953 = vmatprep.mubr.bf16.mxu0 0
      %954 = vmatmul.mubr.bf16.gmra.mrb[0].mxu0 %v916
      %v955 = vpop.f32.mrb[0].mxu0
      %v956 = vadd.f32 0.0, %v955
      %v957 = vpop.f32.mrb[0].mxu0
      %v958 = vpop.f32.mrb[0].mxu0
      %v959 = vpop.f32.mrb[0].mxu0
      %960 = vdwg.mxu0
      %v961 = vpack.c.bf16 %v956, %v956
      %v962 = vld [vmem:[%s3 + $0xc] sm:$0xf]
      %v964 = vsel %vm377, %v961, 0
      %v967 = vsel %vm441, %v962, 0
      %969 = vmatprep.subr.bf16.mxu0 0
      %970 = vmatpush1.bf16.msra.mxu0 %v967
      %971 = vmatprep.subr.bf16.mxu0 0
      %972 = vmatpush1.bf16.msra.mxu0 0
      %973 = vmatprep.subr.bf16.mxu0 0
      %974 = vmatpush1.bf16.msra.mxu0 0
      %975 = vmatprep.subr.bf16.mxu0 0
      %976 = vmatpush1.bf16.msra.mxu0 0
      %977 = vmatprep.subr.bf16.mxu0 0
      %978 = vmatpush1.bf16.msra.mxu0 0
      %979 = vmatprep.subr.bf16.mxu0 0
      %980 = vmatpush1.bf16.msra.mxu0 0
      %981 = vmatprep.subr.bf16.mxu0 0
      %982 = vmatpush1.bf16.msra.mxu0 0
      %983 = vmatprep.subr.bf16.mxu0 0
      %984 = vmatpush1.bf16.msra.mxu0 0
      %985 = vmatprep.subr.bf16.mxu0 0
      %986 = vmatpush1.bf16.msra.mxu0 0
      %987 = vmatprep.subr.bf16.mxu0 0
      %988 = vmatpush1.bf16.msra.mxu0 0
      %989 = vmatprep.subr.bf16.mxu0 0
      %990 = vmatpush1.bf16.msra.mxu0 0
      %991 = vmatprep.subr.bf16.mxu0 0
      %992 = vmatpush1.bf16.msra.mxu0 0
      %993 = vmatprep.subr.bf16.mxu0 0
      %994 = vmatpush1.bf16.msra.mxu0 0
      %995 = vmatprep.subr.bf16.mxu0 0
      %996 = vmatpush1.bf16.msra.mxu0 0
      %997 = vmatprep.subr.bf16.mxu0 0
      %998 = vmatpush1.bf16.msra.mxu0 0
      %999 = vmatprep.subr.bf16.mxu0 0
      %1000 = vmatpush1.bf16.msra.mxu0 0
      %1001 = vmatprep.mubr.bf16.mxu0 0
      %1002 = vmatmul.mubr.bf16.gmra.mrb[0].mxu0 %v964
      %v1003 = vpop.f32.mrb[0].mxu0
      %v1004 = vadd.f32 0.0, %v1003
      %v1005 = vpop.f32.mrb[0].mxu0
      %v1006 = vpop.f32.mrb[0].mxu0
      %v1007 = vpop.f32.mrb[0].mxu0
      %1008 = vdwg.mxu0
      %v1009 = vadd.f32 %v850, %v1004
      %v1010 = vld [vmem:[%s4] sm:$0x1]
      %v1012 = vlaneseq
      %v1013 = vshrl.u32 %v1012, 7
      %v1014 = vsub.s32 0, %v1013
      %v1015 = vrot.slane %v1010, %v1014
      %v1017 = vadd.f32 %v1009, %v1015
      %v1018 = vunpack.c.l.bf16 %v303
      %v1019 = vadd.f32 %v1017, %v1018
      %v1020 = vsel %vm327, %v1019, 0.0
      %1021 = vadd.xlane.f32.xlu0 %v1020
      %v1022 = vpop.xlane.xlu0 %1021
      %v1023 = vrcp.pop 32.0
      %v1024 = vmul.f32 %v1022, %v1023
      %v1025 = vsub.f32 %v1019, %v1024
      %v1026 = vmul.f32 %v1025, %v1025
      %v1027 = vsel %vm327, %v1026, 0.0
      %1028 = vadd.xlane.f32.xlu0 %v1027
      %v1029 = vpop.xlane.xlu0 %1028
      %v1030 = vmul.f32 %v1029, %v1023
      %v1031 = vadd.f32 %v1030, 1e-05
      %v1032 = vrsqrt.pop %v1031
      %v1033 = vmul.f32 %v1025, %v1032
      %v1034 = vld [vmem:[%s5] sm:$0x1]
      %v1036 = vlaneseq
      %v1037 = vshrl.u32 %v1036, 7
      %v1038 = vsub.s32 0, %v1037
      %v1039 = vrot.slane %v1034, %v1038
      %v1041 = vmul.f32 %v1033, %v1039
      %v1042 = vld [vmem:[%s6] sm:$0x1]
      %v1044 = vlaneseq
      %v1045 = vshrl.u32 %v1044, 7
      %v1046 = vsub.s32 0, %v1045
      %v1047 = vrot.slane %v1042, %v1046
      %v1049 = vadd.f32 %v1041, %v1047
      %v1050 = vpack.c.bf16 %v1049, %v1049
      %vm1051 = vcmask 257024
      %1052 = vst.msk [vmem:[%s300] sm:$0xf] %vm1051, %v1050
      %p1053 = scmp.lt.s32.totalorder %s19, 1
      %s1054 = scalar_select %p1053, %s19, 1
      %s1055 = smul.addr %s1054, 4
      %s1056 = scalar_lea.vmem %s8, %s1055
      // Predicated region
      $region53: #{transformer_forward.15} parent=51 // pred_check
        %p1057 = pneg %p210
      $region54: #{transformer_forward.15} parent=51 // pred_check_branch
        %1059 = sbr.rel (%p1057) target = $region56
      $region55: #{transformer_forward.15} parent=51 // pred_region
        _
      $region56: #{transformer_forward.15} parent=51 // pred_fallthru
        _
    $region52: #{transformer_forward.15} parent=5 // pred_fallthru
      _
    %p1060 = scmp.le.s32.totalorder 2, %s14
    // Predicated region
    $region57: #{transformer_forward.15} parent=5 // pred_check
      %p1061 = pneg %p1060
    $region58: #{transformer_forward.15} parent=5 // pred_check_branch
      %1063 = sbr.rel (%p1061) target = $region60
    $region59: #{transformer_forward.15} parent=5 // pred_region
      %s1064 = ssub.s32 %s14, 2
      // Predicated region
      $region61: #{transformer_forward.15} parent=59 // pred_check
        %p1065 = pneg %p216
      $region62: #{transformer_forward.15} parent=59 // pred_check_branch
        %1067 = sbr.rel (%p1065) target = $region64
      $region63: #{transformer_forward.15} parent=59 // pred_region
        %p1068 = scmp.lt.s32.totalorder %s20, 1
        %s1069 = scalar_select %p1068, %s20, 1
        %s1070 = smul.addr %s1069, 4
        %s1071 = scalar_lea.vmem %s8, %s1070
      $region64: #{transformer_forward.15} parent=59 // pred_fallthru
        _
    $region60: #{transformer_forward.15} parent=5 // pred_fallthru
      _
  $region6: #{transformer_forward.15} parent=0 // loop_footer
    %s18 = sadd.s32 1, %s14
  $region7: #{transformer_forward.15} parent=0 // loop_footer_branch
    %13 = sbr.rel target = $region3
  $region8: #{transformer_forward.15} parent=0 // loop_exit
    _

// kernel: transformer_forward.16
$region0: #{transformer_forward.16}
  #allocation0 [shape = 'u32[]', space=smem, size = 0x4, offset = 0x4, fixed_abs, tag = 'smem constant byte address 0x4 - core index']
  #allocation1 [shape = 'u32[144,128]{1,0:T(1,128)}', space=vmem, size = 0x12000, scoped, tag = 'internal scratch']
  %s0 = inlined_call_operand.vmem [shape: bf16[2,8,32], index: 0, kind: input, shape index: {}]
  %s1 = inlined_call_operand.vmem [shape: bf16[2,8,32], index: 1, kind: input, shape index: {}]
  %s2 = inlined_call_operand.vmem [shape: bf16[32,32], index: 2, kind: input, shape index: {}]
  %s3 = inlined_call_operand.vmem [shape: f32[1,32], index: 3, kind: input, shape index: {}]
  %s4 = inlined_call_operand.vmem [shape: bf16[32,64], index: 4, kind: input, shape index: {}]
  %s5 = inlined_call_operand.vmem [shape: f32[1,64], index: 5, kind: input, shape index: {}]
  %s6 = inlined_call_operand.vmem [shape: bf16[32,32], index: 6, kind: input, shape index: {}]
  %s7 = inlined_call_operand.vmem [shape: f32[1,32], index: 7, kind: input, shape index: {}]
  %s8 = inlined_call_operand.vmem [shape: f32[1,32], index: 8, kind: input, shape index: {}]
  %s9 = inlined_call_operand.vmem [shape: f32[1,32], index: 9, kind: input, shape index: {}]
  %s10 = inlined_call_operand.vmem [shape: bf16[2,8,32], index: 10, kind: output, shape index: {}]
  %s11 = sld [smem:[#allocation0]]
  $region73: #{transformer_forward.16} parent=0
    _
  %s13 = ssub.s32 1, %s11
  %s14 = scalar_select 0, %s13, %s11
  loop: start=0, step=1, limit=4
  $region2: #{transformer_forward.16} parent=0 // loop_pre_header
    _
  $region3: #{transformer_forward.16} parent=0 // loop_header
    %s16 = sphi 0, %s20
    %p17 = scmp.ge.s32.totalorder %s16, 4
    %s26 = sphi 0, %s28
    %s29 = sphi 0, %s26
    %s30 = sphi 0, %s29
    %s46 = sphi 0, %s30
    %s52 = sphi 0, %s54
    %s55 = sphi 0, %s52
    %s56 = sphi 0, %s55
    %s72 = sphi 0, %s56
    %s76 = sphi 0, %s76
    %s78 = sphi 0, %s76
    %s79 = sphi 0, %s78
    %s93 = sphi 0, %s79
    %s97 = sphi 0, %s97
    %s99 = sphi 0, %s97
    %s100 = sphi 0, %s99
    %s114 = sphi 0, %s100
    %s118 = sphi 0, %s118
    %s120 = sphi 0, %s118
    %s121 = sphi 0, %s120
    %s135 = sphi 0, %s121
    %s139 = sphi 0, %s139
    %s141 = sphi 0, %s139
    %s142 = sphi 0, %s141
    %s156 = sphi 0, %s142
    %s160 = sphi 0, %s160
    %s162 = sphi 0, %s160
    %s163 = sphi 0, %s162
    %s177 = sphi 0, %s163
    %s181 = sphi 0, %s181
    %s183 = sphi 0, %s181
    %s184 = sphi 0, %s183
    %s198 = sphi 0, %s184
    %s202 = sphi 0, %s202
    %s204 = sphi 0, %s202
    %s205 = sphi 0, %s204
    %s219 = sphi 0, %s205
    %s223 = sphi 0, %s223
    %s225 = sphi 0, %s223
    %s226 = sphi 0, %s225
    %s240 = sphi 0, %s226
    %s246 = sphi 0, %s248
    %s249 = sphi 0, %s246
    %s250 = sphi 0, %s249
    %s266 = sphi 0, %s250
  $region4: #{transformer_forward.16} parent=0 // loop_header_branch
    %19 = sbr.rel (%p17) target = $region8
  $region5: #{transformer_forward.16} parent=0 // loop_body
    %s21 = ssub.s32 %s16, 1
    %s22 = ssub.s32 %s16, 2
    %s23 = sadd.s32 %s16, 1
    %s24 = ssub.s32 %s16, %s23
    %p25 = scmp.eq.s32.totalorder %s24, 0
    %s27 = sadd.s32 %s26, 1
    %s28 = scalar_select %p25, %s26, %s27
    %p31 = pneg %p25
    %p32 = scmp.eq.s32.totalorder %s16, 1
    %p33 = por %p31, %p32
    %p34 = scmp.ne.s32.totalorder %s26, %s29
    %p35 = scmp.eq.s32.totalorder %s16, 0
    %p36 = por %p34, %p35
    %p37 = scmp.ne.s32.totalorder %s26, %s29
    %p38 = scmp.eq.s32.totalorder %s21, 1
    %p39 = por %p37, %p38
    %p40 = scmp.ne.s32.totalorder %s29, %s30
    %p41 = scmp.eq.s32.totalorder %s21, 0
    %p42 = por %p40, %p41
    %p43 = scmp.ne.s32.totalorder %s29, %s30
    %p44 = scmp.eq.s32.totalorder %s22, 1
    %p45 = por %p43, %p44
    %p47 = scmp.ne.s32.totalorder %s30, %s46
    %p48 = scmp.eq.s32.totalorder %s22, 0
    %p49 = por %p47, %p48
    %s50 = ssub.s32 %s16, %s23
    %p51 = scmp.eq.s32.totalorder %s50, 0
    %s53 = sadd.s32 %s52, 1
    %s54 = scalar_select %p51, %s52, %s53
    %p57 = pneg %p51
    %p58 = scmp.eq.s32.totalorder %s16, 1
    %p59 = por %p57, %p58
    %p60 = scmp.ne.s32.totalorder %s52, %s55
    %p61 = scmp.eq.s32.totalorder %s16, 0
    %p62 = por %p60, %p61
    %p63 = scmp.ne.s32.totalorder %s52, %s55
    %p64 = scmp.eq.s32.totalorder %s21, 1
    %p65 = por %p63, %p64
    %p66 = scmp.ne.s32.totalorder %s55, %s56
    %p67 = scmp.eq.s32.totalorder %s21, 0
    %p68 = por %p66, %p67
    %p69 = scmp.ne.s32.totalorder %s55, %s56
    %p70 = scmp.eq.s32.totalorder %s22, 1
    %p71 = por %p69, %p70
    %p73 = scmp.ne.s32.totalorder %s56, %s72
    %p74 = scmp.eq.s32.totalorder %s22, 0
    %p75 = por %p73, %p74
    %s77 = sadd.s32 %s76, 1
    %p80 = scmp.eq.s32.totalorder %s16, 1
    %p81 = scmp.ne.s32.totalorder %s76, %s78
    %p82 = scmp.eq.s32.totalorder %s16, 0
    %p83 = por %p81, %p82
    %p84 = scmp.ne.s32.totalorder %s76, %s78
    %p85 = scmp.eq.s32.totalorder %s21, 1
    %p86 = por %p84, %p85
    %p87 = scmp.ne.s32.totalorder %s78, %s79
    %p88 = scmp.eq.s32.totalorder %s21, 0
    %p89 = por %p87, %p88
    %p90 = scmp.ne.s32.totalorder %s78, %s79
    %p91 = scmp.eq.s32.totalorder %s22, 1
    %p92 = por %p90, %p91
    %p94 = scmp.ne.s32.totalorder %s79, %s93
    %p95 = scmp.eq.s32.totalorder %s22, 0
    %p96 = por %p94, %p95
    %s98 = sadd.s32 %s97, 1
    %p101 = scmp.eq.s32.totalorder %s16, 1
    %p102 = scmp.ne.s32.totalorder %s97, %s99
    %p103 = scmp.eq.s32.totalorder %s16, 0
    %p104 = por %p102, %p103
    %p105 = scmp.ne.s32.totalorder %s97, %s99
    %p106 = scmp.eq.s32.totalorder %s21, 1
    %p107 = por %p105, %p106
    %p108 = scmp.ne.s32.totalorder %s99, %s100
    %p109 = scmp.eq.s32.totalorder %s21, 0
    %p110 = por %p108, %p109
    %p111 = scmp.ne.s32.totalorder %s99, %s100
    %p112 = scmp.eq.s32.totalorder %s22, 1
    %p113 = por %p111, %p112
    %p115 = scmp.ne.s32.totalorder %s100, %s114
    %p116 = scmp.eq.s32.totalorder %s22, 0
    %p117 = por %p115, %p116
    %s119 = sadd.s32 %s118, 1
    %p122 = scmp.eq.s32.totalorder %s16, 1
    %p123 = scmp.ne.s32.totalorder %s118, %s120
    %p124 = scmp.eq.s32.totalorder %s16, 0
    %p125 = por %p123, %p124
    %p126 = scmp.ne.s32.totalorder %s118, %s120
    %p127 = scmp.eq.s32.totalorder %s21, 1
    %p128 = por %p126, %p127
    %p129 = scmp.ne.s32.totalorder %s120, %s121
    %p130 = scmp.eq.s32.totalorder %s21, 0
    %p131 = por %p129, %p130
    %p132 = scmp.ne.s32.totalorder %s120, %s121
    %p133 = scmp.eq.s32.totalorder %s22, 1
    %p134 = por %p132, %p133
    %p136 = scmp.ne.s32.totalorder %s121, %s135
    %p137 = scmp.eq.s32.totalorder %s22, 0
    %p138 = por %p136, %p137
    %s140 = sadd.s32 %s139, 1
    %p143 = scmp.eq.s32.totalorder %s16, 1
    %p144 = scmp.ne.s32.totalorder %s139, %s141
    %p145 = scmp.eq.s32.totalorder %s16, 0
    %p146 = por %p144, %p145
    %p147 = scmp.ne.s32.totalorder %s139, %s141
    %p148 = scmp.eq.s32.totalorder %s21, 1
    %p149 = por %p147, %p148
    %p150 = scmp.ne.s32.totalorder %s141, %s142
    %p151 = scmp.eq.s32.totalorder %s21, 0
    %p152 = por %p150, %p151
    %p153 = scmp.ne.s32.totalorder %s141, %s142
    %p154 = scmp.eq.s32.totalorder %s22, 1
    %p155 = por %p153, %p154
    %p157 = scmp.ne.s32.totalorder %s142, %s156
    %p158 = scmp.eq.s32.totalorder %s22, 0
    %p159 = por %p157, %p158
    %s161 = sadd.s32 %s160, 1
    %p164 = scmp.eq.s32.totalorder %s16, 1
    %p165 = scmp.ne.s32.totalorder %s160, %s162
    %p166 = scmp.eq.s32.totalorder %s16, 0
    %p167 = por %p165, %p166
    %p168 = scmp.ne.s32.totalorder %s160, %s162
    %p169 = scmp.eq.s32.totalorder %s21, 1
    %p170 = por %p168, %p169
    %p171 = scmp.ne.s32.totalorder %s162, %s163
    %p172 = scmp.eq.s32.totalorder %s21, 0
    %p173 = por %p171, %p172
    %p174 = scmp.ne.s32.totalorder %s162, %s163
    %p175 = scmp.eq.s32.totalorder %s22, 1
    %p176 = por %p174, %p175
    %p178 = scmp.ne.s32.totalorder %s163, %s177
    %p179 = scmp.eq.s32.totalorder %s22, 0
    %p180 = por %p178, %p179
    %s182 = sadd.s32 %s181, 1
    %p185 = scmp.eq.s32.totalorder %s16, 1
    %p186 = scmp.ne.s32.totalorder %s181, %s183
    %p187 = scmp.eq.s32.totalorder %s16, 0
    %p188 = por %p186, %p187
    %p189 = scmp.ne.s32.totalorder %s181, %s183
    %p190 = scmp.eq.s32.totalorder %s21, 1
    %p191 = por %p189, %p190
    %p192 = scmp.ne.s32.totalorder %s183, %s184
    %p193 = scmp.eq.s32.totalorder %s21, 0
    %p194 = por %p192, %p193
    %p195 = scmp.ne.s32.totalorder %s183, %s184
    %p196 = scmp.eq.s32.totalorder %s22, 1
    %p197 = por %p195, %p196
    %p199 = scmp.ne.s32.totalorder %s184, %s198
    %p200 = scmp.eq.s32.totalorder %s22, 0
    %p201 = por %p199, %p200
    %s203 = sadd.s32 %s202, 1
    %p206 = scmp.eq.s32.totalorder %s16, 1
    %p207 = scmp.ne.s32.totalorder %s202, %s204
    %p208 = scmp.eq.s32.totalorder %s16, 0
    %p209 = por %p207, %p208
    %p210 = scmp.ne.s32.totalorder %s202, %s204
    %p211 = scmp.eq.s32.totalorder %s21, 1
    %p212 = por %p210, %p211
    %p213 = scmp.ne.s32.totalorder %s204, %s205
    %p214 = scmp.eq.s32.totalorder %s21, 0
    %p215 = por %p213, %p214
    %p216 = scmp.ne.s32.totalorder %s204, %s205
    %p217 = scmp.eq.s32.totalorder %s22, 1
    %p218 = por %p216, %p217
    %p220 = scmp.ne.s32.totalorder %s205, %s219
    %p221 = scmp.eq.s32.totalorder %s22, 0
    %p222 = por %p220, %p221
    %s224 = sadd.s32 %s223, 1
    %p227 = scmp.eq.s32.totalorder %s16, 1
    %p228 = scmp.ne.s32.totalorder %s223, %s225
    %p229 = scmp.eq.s32.totalorder %s16, 0
    %p230 = por %p228, %p229
    %p231 = scmp.ne.s32.totalorder %s223, %s225
    %p232 = scmp.eq.s32.totalorder %s21, 1
    %p233 = por %p231, %p232
    %p234 = scmp.ne.s32.totalorder %s225, %s226
    %p235 = scmp.eq.s32.totalorder %s21, 0
    %p236 = por %p234, %p235
    %p237 = scmp.ne.s32.totalorder %s225, %s226
    %p238 = scmp.eq.s32.totalorder %s22, 1
    %p239 = por %p237, %p238
    %p241 = scmp.ne.s32.totalorder %s226, %s240
    %p242 = scmp.eq.s32.totalorder %s22, 0
    %p243 = por %p241, %p242
    %s244 = ssub.s32 %s16, %s23
    %p245 = scmp.eq.s32.totalorder %s244, 0
    %s247 = sadd.s32 %s246, 1
    %s248 = scalar_select %p245, %s246, %s247
    %p251 = pneg %p245
    %p252 = scmp.eq.s32.totalorder %s16, 1
    %p253 = por %p251, %p252
    %p254 = scmp.ne.s32.totalorder %s246, %s249
    %p255 = scmp.eq.s32.totalorder %s16, 0
    %p256 = por %p254, %p255
    %p257 = scmp.ne.s32.totalorder %s246, %s249
    %p258 = scmp.eq.s32.totalorder %s21, 1
    %p259 = por %p257, %p258
    %p260 = scmp.ne.s32.totalorder %s249, %s250
    %p261 = scmp.eq.s32.totalorder %s21, 0
    %p262 = por %p260, %p261
    %p263 = scmp.ne.s32.totalorder %s249, %s250
    %p264 = scmp.eq.s32.totalorder %s22, 1
    %p265 = por %p263, %p264
    %p267 = scmp.ne.s32.totalorder %s250, %s266
    %p268 = scmp.eq.s32.totalorder %s22, 0
    %p269 = por %p267, %p268
    %p270 = scmp.le.s32.totalorder 1, %s16
    %p271 = scmp.lt.s32.totalorder %s16, 3
    %p272 = pnand %p270, %p271
    %p273 = pneg %p272
    // Predicated region
    $region9: #{transformer_forward.16} parent=5 // pred_check
      _
    $region10: #{transformer_forward.16} parent=5 // pred_check_branch
      %275 = sbr.rel (%p272) target = $region12
    $region11: #{transformer_forward.16} parent=5 // pred_region
      %s276 = ssub.s32 %s16, 1
      // Predicated region
      $region13: #{transformer_forward.16} parent=11 // pred_check
        %p277 = pneg %p89
      $region14: #{transformer_forward.16} parent=11 // pred_check_branch
        %279 = sbr.rel (%p277) target = $region16
      $region15: #{transformer_forward.16} parent=11 // pred_region
        _
      $region16: #{transformer_forward.16} parent=11 // pred_fallthru
        _
      // Predicated region
      $region17: #{transformer_forward.16} parent=11 // pred_check
        %p280 = pneg %p110
      $region18: #{transformer_forward.16} parent=11 // pred_check_branch
        %282 = sbr.rel (%p280) target = $region20
      $region19: #{transformer_forward.16} parent=11 // pred_region
        _
      $region20: #{transformer_forward.16} parent=11 // pred_fallthru
        _
      // Predicated region
      $region21: #{transformer_forward.16} parent=11 // pred_check
        %p283 = pneg %p131
      $region22: #{transformer_forward.16} parent=11 // pred_check_branch
        %285 = sbr.rel (%p283) target = $region24
      $region23: #{transformer_forward.16} parent=11 // pred_region
        _
      $region24: #{transformer_forward.16} parent=11 // pred_fallthru
        _
      // Predicated region
      $region25: #{transformer_forward.16} parent=11 // pred_check
        %p286 = pneg %p152
      $region26: #{transformer_forward.16} parent=11 // pred_check_branch
        %288 = sbr.rel (%p286) target = $region28
      $region27: #{transformer_forward.16} parent=11 // pred_region
        _
      $region28: #{transformer_forward.16} parent=11 // pred_fallthru
        _
      // Predicated region
      $region29: #{transformer_forward.16} parent=11 // pred_check
        %p289 = pneg %p173
      $region30: #{transformer_forward.16} parent=11 // pred_check_branch
        %291 = sbr.rel (%p289) target = $region32
      $region31: #{transformer_forward.16} parent=11 // pred_region
        _
      $region32: #{transformer_forward.16} parent=11 // pred_fallthru
        _
      // Predicated region
      $region33: #{transformer_forward.16} parent=11 // pred_check
        %p292 = pneg %p194
      $region34: #{transformer_forward.16} parent=11 // pred_check_branch
        %294 = sbr.rel (%p292) target = $region36
      $region35: #{transformer_forward.16} parent=11 // pred_region
        _
      $region36: #{transformer_forward.16} parent=11 // pred_fallthru
        _
      // Predicated region
      $region37: #{transformer_forward.16} parent=11 // pred_check
        %p295 = pneg %p215
      $region38: #{transformer_forward.16} parent=11 // pred_check_branch
        %297 = sbr.rel (%p295) target = $region40
      $region39: #{transformer_forward.16} parent=11 // pred_region
        _
      $region40: #{transformer_forward.16} parent=11 // pred_fallthru
        _
      // Predicated region
      $region41: #{transformer_forward.16} parent=11 // pred_check
        %p298 = pneg %p236
      $region42: #{transformer_forward.16} parent=11 // pred_check_branch
        %300 = sbr.rel (%p298) target = $region44
      $region43: #{transformer_forward.16} parent=11 // pred_region
        _
      $region44: #{transformer_forward.16} parent=11 // pred_fallthru
        _
    $region12: #{transformer_forward.16} parent=5 // pred_fallthru
      _
    %p301 = scmp.lt.s32.totalorder %s16, 2
    // Predicated region
    $region45: #{transformer_forward.16} parent=5 // pred_check
      %p302 = pneg %p301
    $region46: #{transformer_forward.16} parent=5 // pred_check_branch
      %304 = sbr.rel (%p302) target = $region48
    $region47: #{transformer_forward.16} parent=5 // pred_region
      // Predicated region
      $region49: #{transformer_forward.16} parent=47 // pred_check
        %p305 = pneg %p36
      $region50: #{transformer_forward.16} parent=47 // pred_check_branch
        %307 = sbr.rel (%p305) target = $region52
      $region51: #{transformer_forward.16} parent=47 // pred_region
        %p308 = scmp.lt.s32.totalorder %s16, 1
        %s309 = scalar_select %p308, %s16, 1
        %s310 = smul.addr %s309, 4
        %s311 = scalar_lea.vmem %s0, %s310
      $region52: #{transformer_forward.16} parent=47 // pred_fallthru
        _
      // Predicated region
      $region53: #{transformer_forward.16} parent=47 // pred_check
        %p312 = pneg %p62
      $region54: #{transformer_forward.16} parent=47 // pred_check_branch
        %314 = sbr.rel (%p312) target = $region56
      $region55: #{transformer_forward.16} parent=47 // pred_region
        %p315 = scmp.lt.s32.totalorder %s16, 1
        %s316 = scalar_select %p315, %s16, 1
        %s317 = smul.addr %s316, 4
        %s318 = scalar_lea.vmem %s1, %s317
      $region56: #{transformer_forward.16} parent=47 // pred_fallthru
        _
    $region48: #{transformer_forward.16} parent=5 // pred_fallthru
      _
    %p319 = scmp.le.s32.totalorder 1, %s16
    %p320 = scmp.lt.s32.totalorder %s16, 3
    %p321 = pnand %p319, %p320
    %p322 = pneg %p321
    // Predicated region
    $region57: #{transformer_forward.16} parent=5 // pred_check
      _
    $region58: #{transformer_forward.16} parent=5 // pred_check_branch
      %324 = sbr.rel (%p321) target = $region60
    $region59: #{transformer_forward.16} parent=5 // pred_region
      %s325 = ssub.s32 %s16, 1
      %p326 = scmp.lt.s32.totalorder %s21, 1
      %s327 = scalar_select %p326, %s21, 1
      %s328 = smul.addr %s327, 4
      %s329 = scalar_lea.vmem %s0, %s328
      %p330 = pneg %p42
      %p331 = pneg %p39
      %p332 = scmp.lt.s32.totalorder %s21, 1
      %s333 = scalar_select %p332, %s21, 1
      %s334 = smul.addr %s333, 4
      %s335 = scalar_lea.vmem %s1, %s334
      %p336 = pneg %p68
      %p337 = pneg %p65
      %p338 = pneg %p89
      %p339 = pneg %p86
      %p340 = pneg %p110
      %p341 = pneg %p107
      %p342 = pneg %p131
      %p343 = pneg %p128
      %p344 = pneg %p152
      %p345 = pneg %p149
      %p346 = pneg %p173
      %p347 = pneg %p170
      %p348 = pneg %p194
      %p349 = pneg %p191
      %p350 = pneg %p215
      %p351 = pneg %p212
      %p352 = pneg %p236
      %p353 = pneg %p233
      %p354 = pneg %p262
      %p355 = pneg %p259
      %p356 = scmp.lt.s32.totalorder %s21, 1
      %s357 = scalar_select %p356, %s21, 1
      %s358 = smul.addr %s357, 4
      %s359 = scalar_lea.vmem %s10, %s358
      %p360 = scmp.lt.s32.totalorder %s21, 1
      %s361 = scalar_select %p360, %s21, 1
      %s362 = smul.addr %s361, 4
      %s363 = scalar_lea.vmem %s0, %s362
      %p364 = scmp.lt.s32.totalorder %s21, 1
      %s365 = scalar_select %p364, %s21, 1
      %s366 = smul.addr %s365, 4
      %s367 = scalar_lea.vmem %s1, %s366
      %p368 = scmp.lt.s32.totalorder %s21, 1
      %s369 = scalar_select %p368, %s21, 1
      %s370 = smul.addr %s369, 4
      %s371 = scalar_lea.vmem %s10, %s370
      %v373 = vld [vmem:[%s363] sm:$0xf]
      %v374 = vld [vmem:[%s367] sm:$0xf]
      %v375 = vld [vmem:[%s2] sm:$0xf]
      %v376 = vld [vmem:[%s2 + $0x4] sm:$0xf]
      %v377 = vld [vmem:[%s2 + $0x8] sm:$0xf]
      %v378 = vld [vmem:[%s2 + $0xc] sm:$0xf]
      %v379 = vld [vmem:[%s3] sm:$0x1]
      %v381 = vlaneseq
      %v382 = vshrl.u32 %v381, 7
      %v383 = vsub.s32 0, %v382
      %v384 = vrot.slane %v379, %v383
      %v390 = vunpack.c.l.b16 %v375
      %v391 = vunpack.c.l.b16 %v376
      %v392 = vunpack.c.l.b16 %v377
      %v393 = vunpack.c.l.b16 %v378
      %v394 = vpack.c.b16 %v391, %v390
      %v395 = vpack.c.b16 %v393, %v392
      %vm398 = vcmask 261120
      %v400 = vsel %vm398, %v373, 0
      %402 = vmatprep.subr.bf16.mxu0 0
      %403 = vmatpush1.bf16.msra.mxu0 %v394
      %404 = vmatprep.subr.bf16.mxu0 0
      %405 = vmatpush1.bf16.msra.mxu0 %v395
      %406 = vmatprep.subr.bf16.mxu0 0
      %407 = vmatpush1.bf16.msra.mxu0 0
      %408 = vmatprep.subr.bf16.mxu0 0
      %409 = vmatpush1.bf16.msra.mxu0 0
      %410 = vmatprep.subr.bf16.mxu0 0
      %411 = vmatpush1.bf16.msra.mxu0 0
      %412 = vmatprep.subr.bf16.mxu0 0
      %413 = vmatpush1.bf16.msra.mxu0 0
      %414 = vmatprep.subr.bf16.mxu0 0
      %415 = vmatpush1.bf16.msra.mxu0 0
      %416 = vmatprep.subr.bf16.mxu0 0
      %417 = vmatpush1.bf16.msra.mxu0 0
      %418 = vmatprep.subr.bf16.mxu0 0
      %419 = vmatpush1.bf16.msra.mxu0 0
      %420 = vmatprep.subr.bf16.mxu0 0
      %421 = vmatpush1.bf16.msra.mxu0 0
      %422 = vmatprep.subr.bf16.mxu0 0
      %423 = vmatpush1.bf16.msra.mxu0 0
      %424 = vmatprep.subr.bf16.mxu0 0
      %425 = vmatpush1.bf16.msra.mxu0 0
      %426 = vmatprep.subr.bf16.mxu0 0
      %427 = vmatpush1.bf16.msra.mxu0 0
      %428 = vmatprep.subr.bf16.mxu0 0
      %429 = vmatpush1.bf16.msra.mxu0 0
      %430 = vmatprep.subr.bf16.mxu0 0
      %431 = vmatpush1.bf16.msra.mxu0 0
      %432 = vmatprep.subr.bf16.mxu0 0
      %433 = vmatpush1.bf16.msra.mxu0 0
      %434 = vmatprep.mubr.bf16.mxu0 0
      %435 = vmatmul.mubr.bf16.gmra.mrb[0].mxu0 %v400
      %v436 = vpop.f32.mrb[0].mxu0
      %v437 = vadd.f32 %v384, %v436
      %v438 = vpop.f32.mrb[0].mxu0
      %v439 = vpop.f32.mrb[0].mxu0
      %v440 = vpop.f32.mrb[0].mxu0
      %441 = vdwg.mxu0
      %v442 = vmul.f32 %v437, 0.35355338
      %v443 = vpack.c.bf16 %v442, %v442
      %v444 = vld [vmem:[%s4] sm:$0xf]
      %v445 = vld [vmem:[%s4 + $0x4] sm:$0xf]
      %v446 = vld [vmem:[%s4 + $0x8] sm:$0xf]
      %v447 = vld [vmem:[%s4 + $0xc] sm:$0xf]
      %v448 = vld [vmem:[%s5] sm:$0x1]
      %v450 = vlaneseq
      %v451 = vshrl.u32 %v450, 7
      %v452 = vsub.s32 0, %v451
      %v453 = vrot.slane %v448, %v452
      %v459 = vunpack.c.l.b16 %v444
      %v460 = vunpack.c.l.b16 %v445
      %v461 = vunpack.c.l.b16 %v446
      %v462 = vunpack.c.l.b16 %v447
      %v463 = vpack.c.b16 %v460, %v459
      %v464 = vpack.c.b16 %v462, %v461
      %v468 = vsel %vm398, %v374, 0
      %470 = vmatprep.subr.bf16.mxu0 0
      %471 = vmatpush1.bf16.msra.mxu0 %v463
      %472 = vmatprep.subr.bf16.mxu0 0
      %473 = vmatpush1.bf16.msra.mxu0 %v464
      %474 = vmatprep.subr.bf16.mxu0 0
      %475 = vmatpush1.bf16.msra.mxu0 0
      %476 = vmatprep.subr.bf16.mxu0 0
      %477 = vmatpush1.bf16.msra.mxu0 0
      %478 = vmatprep.subr.bf16.mxu0 0
      %479 = vmatpush1.bf16.msra.mxu0 0
      %480 = vmatprep.subr.bf16.mxu0 0
      %481 = vmatpush1.bf16.msra.mxu0 0
      %482 = vmatprep.subr.bf16.mxu0 0
      %483 = vmatpush1.bf16.msra.mxu0 0
      %484 = vmatprep.subr.bf16.mxu0 0
      %485 = vmatpush1.bf16.msra.mxu0 0
      %486 = vmatprep.subr.bf16.mxu0 0
      %487 = vmatpush1.bf16.msra.mxu0 0
      %488 = vmatprep.subr.bf16.mxu0 0
      %489 = vmatpush1.bf16.msra.mxu0 0
      %490 = vmatprep.subr.bf16.mxu0 0
      %491 = vmatpush1.bf16.msra.mxu0 0
      %492 = vmatprep.subr.bf16.mxu0 0
      %493 = vmatpush1.bf16.msra.mxu0 0
      %494 = vmatprep.subr.bf16.mxu0 0
      %495 = vmatpush1.bf16.msra.mxu0 0
      %496 = vmatprep.subr.bf16.mxu0 0
      %497 = vmatpush1.bf16.msra.mxu0 0
      %498 = vmatprep.subr.bf16.mxu0 0
      %499 = vmatpush1.bf16.msra.mxu0 0
      %500 = vmatprep.subr.bf16.mxu0 0
      %501 = vmatpush1.bf16.msra.mxu0 0
      %502 = vmatprep.mubr.bf16.mxu0 0
      %503 = vmatmul.mubr.bf16.gmra.mrb[0].mxu0 %v468
      %v504 = vpop.f32.mrb[0].mxu0
      %v505 = vadd.f32 %v453, %v504
      %v506 = vpop.f32.mrb[0].mxu0
      %v507 = vpop.f32.mrb[0].mxu0
      %v508 = vpop.f32.mrb[0].mxu0
      %509 = vdwg.mxu0
      %v510 = vpack.c.bf16 %v505, %v505
      %vm511 = vcmask 64512
      %v513 = vsel %vm511, %v443, 0
      %v516 = vsel %vm511, %v510, 0
      %518 = vmatprep.subr.bf16.mxu0 0
      %519 = vmatpush1.bf16.xpose.msra.mxu0 %v516
      %520 = vmatprep.subr.bf16.mxu0 0
      %521 = vmatpush1.bf16.xpose.msra.mxu0 0
      %522 = vmatprep.subr.bf16.mxu0 0
      %523 = vmatpush1.bf16.xpose.msra.mxu0 0
      %524 = vmatprep.subr.bf16.mxu0 0
      %525 = vmatpush1.bf16.xpose.msra.mxu0 0
      %526 = vmatprep.subr.bf16.mxu0 0
      %527 = vmatpush1.bf16.xpose.msra.mxu0 0
      %528 = vmatprep.subr.bf16.mxu0 0
      %529 = vmatpush1.bf16.xpose.msra.mxu0 0
      %530 = vmatprep.subr.bf16.mxu0 0
      %531 = vmatpush1.bf16.xpose.msra.mxu0 0
      %532 = vmatprep.subr.bf16.mxu0 0
      %533 = vmatpush1.bf16.xpose.msra.mxu0 0
      %534 = vmatprep.subr.bf16.mxu0 0
      %535 = vmatpush1.bf16.xpose.msra.mxu0 0
      %536 = vmatprep.subr.bf16.mxu0 0
      %537 = vmatpush1.bf16.xpose.msra.mxu0 0
      %538 = vmatprep.subr.bf16.mxu0 0
      %539 = vmatpush1.bf16.xpose.msra.mxu0 0
      %540 = vmatprep.subr.bf16.mxu0 0
      %541 = vmatpush1.bf16.xpose.msra.mxu0 0
      %542 = vmatprep.subr.bf16.mxu0 0
      %543 = vmatpush1.bf16.xpose.msra.mxu0 0
      %544 = vmatprep.subr.bf16.mxu0 0
      %545 = vmatpush1.bf16.xpose.msra.mxu0 0
      %546 = vmatprep.subr.bf16.mxu0 0
      %547 = vmatpush1.bf16.xpose.msra.mxu0 0
      %548 = vmatprep.subr.bf16.mxu0 0
      %549 = vmatpush1.bf16.xpose.msra.mxu0 0
      %550 = vmatprep.mubr.bf16.mxu0 0
      %551 = vmatmul.mubr.bf16.gmra.mrb[0].mxu0 %v513
      %v552 = vpop.f32.mrb[0].mxu0
      %v553 = vadd.f32 0.0, %v552
      %v554 = vpop.f32.mrb[0].mxu0
      %v555 = vpop.f32.mrb[0].mxu0
      %v556 = vpop.f32.mrb[0].mxu0
      %557 = vdwg.mxu0
      %v558 = vsel %vm511, %v553, -inf
      %559 = vmax.xlane.f32.xlu0 %v558
      %v560 = vpop.xlane.xlu0 %559
      %v561 = vsub.f32 %v553, %v560
      %v562 = vmul.f32 %v561, 1.442695
      %v563 = vpow.pop %v562
      %v564 = vsel %vm511, %v563, 0.0
      %565 = vadd.xlane.f32.xlu0 %v564
      %v566 = vpop.xlane.xlu0 %565
      %v567 = vrcp.pop %v566
      %v568 = vmul.f32 %v563, %v567
      %v569 = vpack.c.bf16 %v568, %v568
      %571 = vrot.lane.b32.xlu0 %v510, 96
      %v572 = vpop.permute.xlu0 %571
      %v574 = vsel %vm511, %v569, 0
      %vm576 = vcmask 1043456
      %v578 = vsel %vm576, %v572, 0
      %580 = vmatprep.subr.bf16.mxu0 0
      %581 = vmatpush1.bf16.msra.mxu0 %v578
      %582 = vmatprep.subr.bf16.mxu0 0
      %583 = vmatpush1.bf16.msra.mxu0 0
      %584 = vmatprep.subr.bf16.mxu0 0
      %585 = vmatpush1.bf16.msra.mxu0 0
      %586 = vmatprep.subr.bf16.mxu0 0
      %587 = vmatpush1.bf16.msra.mxu0 0
      %588 = vmatprep.subr.bf16.mxu0 0
      %589 = vmatpush1.bf16.msra.mxu0 0
      %590 = vmatprep.subr.bf16.mxu0 0
      %591 = vmatpush1.bf16.msra.mxu0 0
      %592 = vmatprep.subr.bf16.mxu0 0
      %593 = vmatpush1.bf16.msra.mxu0 0
      %594 = vmatprep.subr.bf16.mxu0 0
      %595 = vmatpush1.bf16.msra.mxu0 0
      %596 = vmatprep.subr.bf16.mxu0 0
      %597 = vmatpush1.bf16.msra.mxu0 0
      %598 = vmatprep.subr.bf16.mxu0 0
      %599 = vmatpush1.bf16.msra.mxu0 0
      %600 = vmatprep.subr.bf16.mxu0 0
      %601 = vmatpush1.bf16.msra.mxu0 0
      %602 = vmatprep.subr.bf16.mxu0 0
      %603 = vmatpush1.bf16.msra.mxu0 0
      %604 = vmatprep.subr.bf16.mxu0 0
      %605 = vmatpush1.bf16.msra.mxu0 0
      %606 = vmatprep.subr.bf16.mxu0 0
      %607 = vmatpush1.bf16.msra.mxu0 0
      %608 = vmatprep.subr.bf16.mxu0 0
      %609 = vmatpush1.bf16.msra.mxu0 0
      %610 = vmatprep.subr.bf16.mxu0 0
      %611 = vmatpush1.bf16.msra.mxu0 0
      %612 = vmatprep.mubr.bf16.mxu0 0
      %613 = vmatmul.mubr.bf16.gmra.mrb[0].mxu0 %v574
      %v614 = vpop.f32.mrb[0].mxu0
      %v615 = vadd.f32 0.0, %v614
      %v616 = vpop.f32.mrb[0].mxu0
      %v617 = vpop.f32.mrb[0].mxu0
      %v618 = vpop.f32.mrb[0].mxu0
      %619 = vdwg.mxu0
      %v620 = vpack.c.bf16 %v615, %v615
      %v621 = vld [vmem:[%s6] sm:$0xf]
      %623 = vrot.lane.b32.xlu0 %v443, 120
      %v624 = vpop.permute.xlu0 %623
      %625 = vrot.lane.b32.xlu0 %v510, 120
      %v626 = vpop.permute.xlu0 %625
      %v628 = vsel %vm511, %v624, 0
      %v631 = vsel %vm511, %v626, 0
      %633 = vmatprep.subr.bf16.mxu0 0
      %634 = vmatpush1.bf16.xpose.msra.mxu0 %v631
      %635 = vmatprep.subr.bf16.mxu0 0
      %636 = vmatpush1.bf16.xpose.msra.mxu0 0
      %637 = vmatprep.subr.bf16.mxu0 0
      %638 = vmatpush1.bf16.xpose.msra.mxu0 0
      %639 = vmatprep.subr.bf16.mxu0 0
      %640 = vmatpush1.bf16.xpose.msra.mxu0 0
      %641 = vmatprep.subr.bf16.mxu0 0
      %642 = vmatpush1.bf16.xpose.msra.mxu0 0
      %643 = vmatprep.subr.bf16.mxu0 0
      %644 = vmatpush1.bf16.xpose.msra.mxu0 0
      %645 = vmatprep.subr.bf16.mxu0 0
      %646 = vmatpush1.bf16.xpose.msra.mxu0 0
      %647 = vmatprep.subr.bf16.mxu0 0
      %648 = vmatpush1.bf16.xpose.msra.mxu0 0
      %649 = vmatprep.subr.bf16.mxu0 0
      %650 = vmatpush1.bf16.xpose.msra.mxu0 0
      %651 = vmatprep.subr.bf16.mxu0 0
      %652 = vmatpush1.bf16.xpose.msra.mxu0 0
      %653 = vmatprep.subr.bf16.mxu0 0
      %654 = vmatpush1.bf16.xpose.msra.mxu0 0
      %655 = vmatprep.subr.bf16.mxu0 0
      %656 = vmatpush1.bf16.xpose.msra.mxu0 0
      %657 = vmatprep.subr.bf16.mxu0 0
      %658 = vmatpush1.bf16.xpose.msra.mxu0 0
      %659 = vmatprep.subr.bf16.mxu0 0
      %660 = vmatpush1.bf16.xpose.msra.mxu0 0
      %661 = vmatprep.subr.bf16.mxu0 0
      %662 = vmatpush1.bf16.xpose.msra.mxu0 0
      %663 = vmatprep.subr.bf16.mxu0 0
      %664 = vmatpush1.bf16.xpose.msra.mxu0 0
      %665 = vmatprep.mubr.bf16.mxu0 0
      %666 = vmatmul.mubr.bf16.gmra.mrb[0].mxu0 %v628
      %v667 = vpop.f32.mrb[0].mxu0
      %v668 = vadd.f32 0.0, %v667
      %v669 = vpop.f32.mrb[0].mxu0
      %v670 = vpop.f32.mrb[0].mxu0
      %v671 = vpop.f32.mrb[0].mxu0
      %672 = vdwg.mxu0
      %v673 = vsel %vm511, %v668, -inf
      %674 = vmax.xlane.f32.xlu0 %v673
      %v675 = vpop.xlane.xlu0 %674
      %v676 = vsub.f32 %v668, %v675
      %v677 = vmul.f32 %v676, 1.442695
      %v678 = vpow.pop %v677
      %v679 = vsel %vm511, %v678, 0.0
      %680 = vadd.xlane.f32.xlu0 %v679
      %v681 = vpop.xlane.xlu0 %680
      %v682 = vrcp.pop %v681
      %v683 = vmul.f32 %v678, %v682
      %v684 = vpack.c.bf16 %v683, %v683
      %685 = vrot.lane.b32.xlu0 %v510, 88
      %v686 = vpop.permute.xlu0 %685
      %v688 = vsel %vm511, %v684, 0
      %v691 = vsel %vm576, %v686, 0
      %693 = vmatprep.subr.bf16.mxu0 0
      %694 = vmatpush1.bf16.msra.mxu0 %v691
      %695 = vmatprep.subr.bf16.mxu0 0
      %696 = vmatpush1.bf16.msra.mxu0 0
      %697 = vmatprep.subr.bf16.mxu0 0
      %698 = vmatpush1.bf16.msra.mxu0 0
      %699 = vmatprep.subr.bf16.mxu0 0
      %700 = vmatpush1.bf16.msra.mxu0 0
      %701 = vmatprep.subr.bf16.mxu0 0
      %702 = vmatpush1.bf16.msra.mxu0 0
      %703 = vmatprep.subr.bf16.mxu0 0
      %704 = vmatpush1.bf16.msra.mxu0 0
      %705 = vmatprep.subr.bf16.mxu0 0
      %706 = vmatpush1.bf16.msra.mxu0 0
      %707 = vmatprep.subr.bf16.mxu0 0
      %708 = vmatpush1.bf16.msra.mxu0 0
      %709 = vmatprep.subr.bf16.mxu0 0
      %710 = vmatpush1.bf16.msra.mxu0 0
      %711 = vmatprep.subr.bf16.mxu0 0
      %712 = vmatpush1.bf16.msra.mxu0 0
      %713 = vmatprep.subr.bf16.mxu0 0
      %714 = vmatpush1.bf16.msra.mxu0 0
      %715 = vmatprep.subr.bf16.mxu0 0
      %716 = vmatpush1.bf16.msra.mxu0 0
      %717 = vmatprep.subr.bf16.mxu0 0
      %718 = vmatpush1.bf16.msra.mxu0 0
      %719 = vmatprep.subr.bf16.mxu0 0
      %720 = vmatpush1.bf16.msra.mxu0 0
      %721 = vmatprep.subr.bf16.mxu0 0
      %722 = vmatpush1.bf16.msra.mxu0 0
      %723 = vmatprep.subr.bf16.mxu0 0
      %724 = vmatpush1.bf16.msra.mxu0 0
      %725 = vmatprep.mubr.bf16.mxu0 0
      %726 = vmatmul.mubr.bf16.gmra.mrb[0].mxu0 %v688
      %v727 = vpop.f32.mrb[0].mxu0
      %v728 = vadd.f32 0.0, %v727
      %v729 = vpop.f32.mrb[0].mxu0
      %v730 = vpop.f32.mrb[0].mxu0
      %v731 = vpop.f32.mrb[0].mxu0
      %732 = vdwg.mxu0
      %v733 = vpack.c.bf16 %v728, %v728
      %v734 = vld [vmem:[%s6 + $0x4] sm:$0xf]
      %v736 = vsel %vm511, %v733, 0
      %v739 = vsel %vm576, %v734, 0
      %741 = vmatprep.subr.bf16.mxu0 0
      %742 = vmatpush1.bf16.msra.mxu0 %v739
      %743 = vmatprep.subr.bf16.mxu0 0
      %744 = vmatpush1.bf16.msra.mxu0 0
      %745 = vmatprep.subr.bf16.mxu0 0
      %746 = vmatpush1.bf16.msra.mxu0 0
      %747 = vmatprep.subr.bf16.mxu0 0
      %748 = vmatpush1.bf16.msra.mxu0 0
      %749 = vmatprep.subr.bf16.mxu0 0
      %750 = vmatpush1.bf16.msra.mxu0 0
      %751 = vmatprep.subr.bf16.mxu0 0
      %752 = vmatpush1.bf16.msra.mxu0 0
      %753 = vmatprep.subr.bf16.mxu0 0
      %754 = vmatpush1.bf16.msra.mxu0 0
      %755 = vmatprep.subr.bf16.mxu0 0
      %756 = vmatpush1.bf16.msra.mxu0 0
      %757 = vmatprep.subr.bf16.mxu0 0
      %758 = vmatpush1.bf16.msra.mxu0 0
      %759 = vmatprep.subr.bf16.mxu0 0
      %760 = vmatpush1.bf16.msra.mxu0 0
      %761 = vmatprep.subr.bf16.mxu0 0
      %762 = vmatpush1.bf16.msra.mxu0 0
      %763 = vmatprep.subr.bf16.mxu0 0
      %764 = vmatpush1.bf16.msra.mxu0 0
      %765 = vmatprep.subr.bf16.mxu0 0
      %766 = vmatpush1.bf16.msra.mxu0 0
      %767 = vmatprep.subr.bf16.mxu0 0
      %768 = vmatpush1.bf16.msra.mxu0 0
      %769 = vmatprep.subr.bf16.mxu0 0
      %770 = vmatpush1.bf16.msra.mxu0 0
      %771 = vmatprep.subr.bf16.mxu0 0
      %772 = vmatpush1.bf16.msra.mxu0 0
      %773 = vmatprep.mubr.bf16.mxu0 0
      %774 = vmatmul.mubr.bf16.gmra.mrb[0].mxu0 %v736
      %v775 = vpop.f32.mrb[0].mxu0
      %v776 = vadd.f32 0.0, %v775
      %v777 = vpop.f32.mrb[0].mxu0
      %v778 = vpop.f32.mrb[0].mxu0
      %v779 = vpop.f32.mrb[0].mxu0
      %780 = vdwg.mxu0
      %v782 = vsel %vm511, %v620, 0
      %v785 = vsel %vm576, %v621, 0
      %787 = vmatprep.subr.bf16.mxu0 0
      %788 = vmatpush1.bf16.msra.mxu0 %v785
      %789 = vmatprep.subr.bf16.mxu0 0
      %790 = vmatpush1.bf16.msra.mxu0 0
      %791 = vmatprep.subr.bf16.mxu0 0
      %792 = vmatpush1.bf16.msra.mxu0 0
      %793 = vmatprep.subr.bf16.mxu0 0
      %794 = vmatpush1.bf16.msra.mxu0 0
      %795 = vmatprep.subr.bf16.mxu0 0
      %796 = vmatpush1.bf16.msra.mxu0 0
      %797 = vmatprep.subr.bf16.mxu0 0
      %798 = vmatpush1.bf16.msra.mxu0 0
      %799 = vmatprep.subr.bf16.mxu0 0
      %800 = vmatpush1.bf16.msra.mxu0 0
      %801 = vmatprep.subr.bf16.mxu0 0
      %802 = vmatpush1.bf16.msra.mxu0 0
      %803 = vmatprep.subr.bf16.mxu0 0
      %804 = vmatpush1.bf16.msra.mxu0 0
      %805 = vmatprep.subr.bf16.mxu0 0
      %806 = vmatpush1.bf16.msra.mxu0 0
      %807 = vmatprep.subr.bf16.mxu0 0
      %808 = vmatpush1.bf16.msra.mxu0 0
      %809 = vmatprep.subr.bf16.mxu0 0
      %810 = vmatpush1.bf16.msra.mxu0 0
      %811 = vmatprep.subr.bf16.mxu0 0
      %812 = vmatpush1.bf16.msra.mxu0 0
      %813 = vmatprep.subr.bf16.mxu0 0
      %814 = vmatpush1.bf16.msra.mxu0 0
      %815 = vmatprep.subr.bf16.mxu0 0
      %816 = vmatpush1.bf16.msra.mxu0 0
      %817 = vmatprep.subr.bf16.mxu0 0
      %818 = vmatpush1.bf16.msra.mxu0 0
      %819 = vmatprep.mubr.bf16.mxu0 0
      %820 = vmatmul.mubr.bf16.gmra.mrb[0].mxu0 %v782
      %v821 = vpop.f32.mrb[0].mxu0
      %v822 = vadd.f32 %v776, %v821
      %v823 = vpop.f32.mrb[0].mxu0
      %v824 = vpop.f32.mrb[0].mxu0
      %v825 = vpop.f32.mrb[0].mxu0
      %826 = vdwg.mxu0
      %827 = vrot.lane.b32.xlu0 %v443, 112
      %v828 = vpop.permute.xlu0 %827
      %829 = vrot.lane.b32.xlu0 %v510, 112
      %v830 = vpop.permute.xlu0 %829
      %v832 = vsel %vm511, %v828, 0
      %v835 = vsel %vm511, %v830, 0
      %837 = vmatprep.subr.bf16.mxu0 0
      %838 = vmatpush1.bf16.xpose.msra.mxu0 %v835
      %839 = vmatprep.subr.bf16.mxu0 0
      %840 = vmatpush1.bf16.xpose.msra.mxu0 0
      %841 = vmatprep.subr.bf16.mxu0 0
      %842 = vmatpush1.bf16.xpose.msra.mxu0 0
      %843 = vmatprep.subr.bf16.mxu0 0
      %844 = vmatpush1.bf16.xpose.msra.mxu0 0
      %845 = vmatprep.subr.bf16.mxu0 0
      %846 = vmatpush1.bf16.xpose.msra.mxu0 0
      %847 = vmatprep.subr.bf16.mxu0 0
      %848 = vmatpush1.bf16.xpose.msra.mxu0 0
      %849 = vmatprep.subr.bf16.mxu0 0
      %850 = vmatpush1.bf16.xpose.msra.mxu0 0
      %851 = vmatprep.subr.bf16.mxu0 0
      %852 = vmatpush1.bf16.xpose.msra.mxu0 0
      %853 = vmatprep.subr.bf16.mxu0 0
      %854 = vmatpush1.bf16.xpose.msra.mxu0 0
      %855 = vmatprep.subr.bf16.mxu0 0
      %856 = vmatpush1.bf16.xpose.msra.mxu0 0
      %857 = vmatprep.subr.bf16.mxu0 0
      %858 = vmatpush1.bf16.xpose.msra.mxu0 0
      %859 = vmatprep.subr.bf16.mxu0 0
      %860 = vmatpush1.bf16.xpose.msra.mxu0 0
      %861 = vmatprep.subr.bf16.mxu0 0
      %862 = vmatpush1.bf16.xpose.msra.mxu0 0
      %863 = vmatprep.subr.bf16.mxu0 0
      %864 = vmatpush1.bf16.xpose.msra.mxu0 0
      %865 = vmatprep.subr.bf16.mxu0 0
      %866 = vmatpush1.bf16.xpose.msra.mxu0 0
      %867 = vmatprep.subr.bf16.mxu0 0
      %868 = vmatpush1.bf16.xpose.msra.mxu0 0
      %869 = vmatprep.mubr.bf16.mxu0 0
      %870 = vmatmul.mubr.bf16.gmra.mrb[0].mxu0 %v832
      %v871 = vpop.f32.mrb[0].mxu0
      %v872 = vadd.f32 0.0, %v871
      %v873 = vpop.f32.mrb[0].mxu0
      %v874 = vpop.f32.mrb[0].mxu0
      %v875 = vpop.f32.mrb[0].mxu0
      %876 = vdwg.mxu0
      %v877 = vsel %vm511, %v872, -inf
      %878 = vmax.xlane.f32.xlu0 %v877
      %v879 = vpop.xlane.xlu0 %878
      %v880 = vsub.f32 %v872, %v879
      %v881 = vmul.f32 %v880, 1.442695
      %v882 = vpow.pop %v881
      %v883 = vsel %vm511, %v882, 0.0
      %884 = vadd.xlane.f32.xlu0 %v883
      %v885 = vpop.xlane.xlu0 %884
      %v886 = vrcp.pop %v885
      %v887 = vmul.f32 %v882, %v886
      %v888 = vpack.c.bf16 %v887, %v887
      %889 = vrot.lane.b32.xlu0 %v510, 80
      %v890 = vpop.permute.xlu0 %889
      %v892 = vsel %vm511, %v888, 0
      %v895 = vsel %vm576, %v890, 0
      %897 = vmatprep.subr.bf16.mxu0 0
      %898 = vmatpush1.bf16.msra.mxu0 %v895
      %899 = vmatprep.subr.bf16.mxu0 0
      %900 = vmatpush1.bf16.msra.mxu0 0
      %901 = vmatprep.subr.bf16.mxu0 0
      %902 = vmatpush1.bf16.msra.mxu0 0
      %903 = vmatprep.subr.bf16.mxu0 0
      %904 = vmatpush1.bf16.msra.mxu0 0
      %905 = vmatprep.subr.bf16.mxu0 0
      %906 = vmatpush1.bf16.msra.mxu0 0
      %907 = vmatprep.subr.bf16.mxu0 0
      %908 = vmatpush1.bf16.msra.mxu0 0
      %909 = vmatprep.subr.bf16.mxu0 0
      %910 = vmatpush1.bf16.msra.mxu0 0
      %911 = vmatprep.subr.bf16.mxu0 0
      %912 = vmatpush1.bf16.msra.mxu0 0
      %913 = vmatprep.subr.bf16.mxu0 0
      %914 = vmatpush1.bf16.msra.mxu0 0
      %915 = vmatprep.subr.bf16.mxu0 0
      %916 = vmatpush1.bf16.msra.mxu0 0
      %917 = vmatprep.subr.bf16.mxu0 0
      %918 = vmatpush1.bf16.msra.mxu0 0
      %919 = vmatprep.subr.bf16.mxu0 0
      %920 = vmatpush1.bf16.msra.mxu0 0
      %921 = vmatprep.subr.bf16.mxu0 0
      %922 = vmatpush1.bf16.msra.mxu0 0
      %923 = vmatprep.subr.bf16.mxu0 0
      %924 = vmatpush1.bf16.msra.mxu0 0
      %925 = vmatprep.subr.bf16.mxu0 0
      %926 = vmatpush1.bf16.msra.mxu0 0
      %927 = vmatprep.subr.bf16.mxu0 0
      %928 = vmatpush1.bf16.msra.mxu0 0
      %929 = vmatprep.mubr.bf16.mxu0 0
      %930 = vmatmul.mubr.bf16.gmra.mrb[0].mxu0 %v892
      %v931 = vpop.f32.mrb[0].mxu0
      %v932 = vadd.f32 0.0, %v931
      %v933 = vpop.f32.mrb[0].mxu0
      %v934 = vpop.f32.mrb[0].mxu0
      %v935 = vpop.f32.mrb[0].mxu0
      %936 = vdwg.mxu0
      %v937 = vpack.c.bf16 %v932, %v932
      %v938 = vld [vmem:[%s6 + $0x8] sm:$0xf]
      %v940 = vsel %vm511, %v937, 0
      %v943 = vsel %vm576, %v938, 0
      %945 = vmatprep.subr.bf16.mxu0 0
      %946 = vmatpush1.bf16.msra.mxu0 %v943
      %947 = vmatprep.subr.bf16.mxu0 0
      %948 = vmatpush1.bf16.msra.mxu0 0
      %949 = vmatprep.subr.bf16.mxu0 0
      %950 = vmatpush1.bf16.msra.mxu0 0
      %951 = vmatprep.subr.bf16.mxu0 0
      %952 = vmatpush1.bf16.msra.mxu0 0
      %953 = vmatprep.subr.bf16.mxu0 0
      %954 = vmatpush1.bf16.msra.mxu0 0
      %955 = vmatprep.subr.bf16.mxu0 0
      %956 = vmatpush1.bf16.msra.mxu0 0
      %957 = vmatprep.subr.bf16.mxu0 0
      %958 = vmatpush1.bf16.msra.mxu0 0
      %959 = vmatprep.subr.bf16.mxu0 0
      %960 = vmatpush1.bf16.msra.mxu0 0
      %961 = vmatprep.subr.bf16.mxu0 0
      %962 = vmatpush1.bf16.msra.mxu0 0
      %963 = vmatprep.subr.bf16.mxu0 0
      %964 = vmatpush1.bf16.msra.mxu0 0
      %965 = vmatprep.subr.bf16.mxu0 0
      %966 = vmatpush1.bf16.msra.mxu0 0
      %967 = vmatprep.subr.bf16.mxu0 0
      %968 = vmatpush1.bf16.msra.mxu0 0
      %969 = vmatprep.subr.bf16.mxu0 0
      %970 = vmatpush1.bf16.msra.mxu0 0
      %971 = vmatprep.subr.bf16.mxu0 0
      %972 = vmatpush1.bf16.msra.mxu0 0
      %973 = vmatprep.subr.bf16.mxu0 0
      %974 = vmatpush1.bf16.msra.mxu0 0
      %975 = vmatprep.subr.bf16.mxu0 0
      %976 = vmatpush1.bf16.msra.mxu0 0
      %977 = vmatprep.mubr.bf16.mxu0 0
      %978 = vmatmul.mubr.bf16.gmra.mrb[0].mxu0 %v940
      %v979 = vpop.f32.mrb[0].mxu0
      %v980 = vadd.f32 0.0, %v979
      %v981 = vpop.f32.mrb[0].mxu0
      %v982 = vpop.f32.mrb[0].mxu0
      %v983 = vpop.f32.mrb[0].mxu0
      %984 = vdwg.mxu0
      %v985 = vadd.f32 %v822, %v980
      %986 = vrot.lane.b32.xlu0 %v443, 104
      %v987 = vpop.permute.xlu0 %986
      %988 = vrot.lane.b32.xlu0 %v510, 104
      %v989 = vpop.permute.xlu0 %988
      %v991 = vsel %vm511, %v987, 0
      %v994 = vsel %vm511, %v989, 0
      %996 = vmatprep.subr.bf16.mxu0 0
      %997 = vmatpush1.bf16.xpose.msra.mxu0 %v994
      %998 = vmatprep.subr.bf16.mxu0 0
      %999 = vmatpush1.bf16.xpose.msra.mxu0 0
      %1000 = vmatprep.subr.bf16.mxu0 0
      %1001 = vmatpush1.bf16.xpose.msra.mxu0 0
      %1002 = vmatprep.subr.bf16.mxu0 0
      %1003 = vmatpush1.bf16.xpose.msra.mxu0 0
      %1004 = vmatprep.subr.bf16.mxu0 0
      %1005 = vmatpush1.bf16.xpose.msra.mxu0 0
      %1006 = vmatprep.subr.bf16.mxu0 0
      %1007 = vmatpush1.bf16.xpose.msra.mxu0 0
      %1008 = vmatprep.subr.bf16.mxu0 0
      %1009 = vmatpush1.bf16.xpose.msra.mxu0 0
      %1010 = vmatprep.subr.bf16.mxu0 0
      %1011 = vmatpush1.bf16.xpose.msra.mxu0 0
      %1012 = vmatprep.subr.bf16.mxu0 0
      %1013 = vmatpush1.bf16.xpose.msra.mxu0 0
      %1014 = vmatprep.subr.bf16.mxu0 0
      %1015 = vmatpush1.bf16.xpose.msra.mxu0 0
      %1016 = vmatprep.subr.bf16.mxu0 0
      %1017 = vmatpush1.bf16.xpose.msra.mxu0 0
      %1018 = vmatprep.subr.bf16.mxu0 0
      %1019 = vmatpush1.bf16.xpose.msra.mxu0 0
      %1020 = vmatprep.subr.bf16.mxu0 0
      %1021 = vmatpush1.bf16.xpose.msra.mxu0 0
      %1022 = vmatprep.subr.bf16.mxu0 0
      %1023 = vmatpush1.bf16.xpose.msra.mxu0 0
      %1024 = vmatprep.subr.bf16.mxu0 0
      %1025 = vmatpush1.bf16.xpose.msra.mxu0 0
      %1026 = vmatprep.subr.bf16.mxu0 0
      %1027 = vmatpush1.bf16.xpose.msra.mxu0 0
      %1028 = vmatprep.mubr.bf16.mxu0 0
      %1029 = vmatmul.mubr.bf16.gmra.mrb[0].mxu0 %v991
      %v1030 = vpop.f32.mrb[0].mxu0
      %v1031 = vadd.f32 0.0, %v1030
      %v1032 = vpop.f32.mrb[0].mxu0
      %v1033 = vpop.f32.mrb[0].mxu0
      %v1034 = vpop.f32.mrb[0].mxu0
      %1035 = vdwg.mxu0
      %v1036 = vsel %vm511, %v1031, -inf
      %1037 = vmax.xlane.f32.xlu0 %v1036
      %v1038 = vpop.xlane.xlu0 %1037
      %v1039 = vsub.f32 %v1031, %v1038
      %v1040 = vmul.f32 %v1039, 1.442695
      %v1041 = vpow.pop %v1040
      %v1042 = vsel %vm511, %v1041, 0.0
      %1043 = vadd.xlane.f32.xlu0 %v1042
      %v1044 = vpop.xlane.xlu0 %1043
      %v1045 = vrcp.pop %v1044
      %v1046 = vmul.f32 %v1041, %v1045
      %v1047 = vpack.c.bf16 %v1046, %v1046
      %1048 = vrot.lane.b32.xlu0 %v510, 72
      %v1049 = vpop.permute.xlu0 %1048
      %v1051 = vsel %vm511, %v1047, 0
      %v1054 = vsel %vm576, %v1049, 0
      %1056 = vmatprep.subr.bf16.mxu0 0
      %1057 = vmatpush1.bf16.msra.mxu0 %v1054
      %1058 = vmatprep.subr.bf16.mxu0 0
      %1059 = vmatpush1.bf16.msra.mxu0 0
      %1060 = vmatprep.subr.bf16.mxu0 0
      %1061 = vmatpush1.bf16.msra.mxu0 0
      %1062 = vmatprep.subr.bf16.mxu0 0
      %1063 = vmatpush1.bf16.msra.mxu0 0
      %1064 = vmatprep.subr.bf16.mxu0 0
      %1065 = vmatpush1.bf16.msra.mxu0 0
      %1066 = vmatprep.subr.bf16.mxu0 0
      %1067 = vmatpush1.bf16.msra.mxu0 0
      %1068 = vmatprep.subr.bf16.mxu0 0
      %1069 = vmatpush1.bf16.msra.mxu0 0
      %1070 = vmatprep.subr.bf16.mxu0 0
      %1071 = vmatpush1.bf16.msra.mxu0 0
      %1072 = vmatprep.subr.bf16.mxu0 0
      %1073 = vmatpush1.bf16.msra.mxu0 0
      %1074 = vmatprep.subr.bf16.mxu0 0
      %1075 = vmatpush1.bf16.msra.mxu0 0
      %1076 = vmatprep.subr.bf16.mxu0 0
      %1077 = vmatpush1.bf16.msra.mxu0 0
      %1078 = vmatprep.subr.bf16.mxu0 0
      %1079 = vmatpush1.bf16.msra.mxu0 0
      %1080 = vmatprep.subr.bf16.mxu0 0
      %1081 = vmatpush1.bf16.msra.mxu0 0
      %1082 = vmatprep.subr.bf16.mxu0 0
      %1083 = vmatpush1.bf16.msra.mxu0 0
      %1084 = vmatprep.subr.bf16.mxu0 0
      %1085 = vmatpush1.bf16.msra.mxu0 0
      %1086 = vmatprep.subr.bf16.mxu0 0
      %1087 = vmatpush1.bf16.msra.mxu0 0
      %1088 = vmatprep.mubr.bf16.mxu0 0
      %1089 = vmatmul.mubr.bf16.gmra.mrb[0].mxu0 %v1051
      %v1090 = vpop.f32.mrb[0].mxu0
      %v1091 = vadd.f32 0.0, %v1090
      %v1092 = vpop.f32.mrb[0].mxu0
      %v1093 = vpop.f32.mrb[0].mxu0
      %v1094 = vpop.f32.mrb[0].mxu0
      %1095 = vdwg.mxu0
      %v1096 = vpack.c.bf16 %v1091, %v1091
      %v1097 = vld [vmem:[%s6 + $0xc] sm:$0xf]
      %v1099 = vsel %vm511, %v1096, 0
      %v1102 = vsel %vm576, %v1097, 0
      %1104 = vmatprep.subr.bf16.mxu0 0
      %1105 = vmatpush1.bf16.msra.mxu0 %v1102
      %1106 = vmatprep.subr.bf16.mxu0 0
      %1107 = vmatpush1.bf16.msra.mxu0 0
      %1108 = vmatprep.subr.bf16.mxu0 0
      %1109 = vmatpush1.bf16.msra.mxu0 0
      %1110 = vmatprep.subr.bf16.mxu0 0
      %1111 = vmatpush1.bf16.msra.mxu0 0
      %1112 = vmatprep.subr.bf16.mxu0 0
      %1113 = vmatpush1.bf16.msra.mxu0 0
      %1114 = vmatprep.subr.bf16.mxu0 0
      %1115 = vmatpush1.bf16.msra.mxu0 0
      %1116 = vmatprep.subr.bf16.mxu0 0
      %1117 = vmatpush1.bf16.msra.mxu0 0
      %1118 = vmatprep.subr.bf16.mxu0 0
      %1119 = vmatpush1.bf16.msra.mxu0 0
      %1120 = vmatprep.subr.bf16.mxu0 0
      %1121 = vmatpush1.bf16.msra.mxu0 0
      %1122 = vmatprep.subr.bf16.mxu0 0
      %1123 = vmatpush1.bf16.msra.mxu0 0
      %1124 = vmatprep.subr.bf16.mxu0 0
      %1125 = vmatpush1.bf16.msra.mxu0 0
      %1126 = vmatprep.subr.bf16.mxu0 0
      %1127 = vmatpush1.bf16.msra.mxu0 0
      %1128 = vmatprep.subr.bf16.mxu0 0
      %1129 = vmatpush1.bf16.msra.mxu0 0
      %1130 = vmatprep.subr.bf16.mxu0 0
      %1131 = vmatpush1.bf16.msra.mxu0 0
      %1132 = vmatprep.subr.bf16.mxu0 0
      %1133 = vmatpush1.bf16.msra.mxu0 0
      %1134 = vmatprep.subr.bf16.mxu0 0
      %1135 = vmatpush1.bf16.msra.mxu0 0
      %1136 = vmatprep.mubr.bf16.mxu0 0
      %1137 = vmatmul.mubr.bf16.gmra.mrb[0].mxu0 %v1099
      %v1138 = vpop.f32.mrb[0].mxu0
      %v1139 = vadd.f32 0.0, %v1138
      %v1140 = vpop.f32.mrb[0].mxu0
      %v1141 = vpop.f32.mrb[0].mxu0
      %v1142 = vpop.f32.mrb[0].mxu0
      %1143 = vdwg.mxu0
      %v1144 = vadd.f32 %v985, %v1139
      %v1145 = vld [vmem:[%s7] sm:$0x1]
      %v1147 = vlaneseq
      %v1148 = vshrl.u32 %v1147, 7
      %v1149 = vsub.s32 0, %v1148
      %v1150 = vrot.slane %v1145, %v1149
      %v1152 = vadd.f32 %v1144, %v1150
      %v1153 = vunpack.c.l.bf16 %v373
      %v1154 = vadd.f32 %v1152, %v1153
      %v1155 = vsel %vm398, %v1154, 0.0
      %1156 = vadd.xlane.f32.xlu0 %v1155
      %v1157 = vpop.xlane.xlu0 %1156
      %v1158 = vrcp.pop 32.0
      %v1159 = vmul.f32 %v1157, %v1158
      %v1160 = vsub.f32 %v1154, %v1159
      %v1161 = vmul.f32 %v1160, %v1160
      %v1162 = vsel %vm398, %v1161, 0.0
      %1163 = vadd.xlane.f32.xlu0 %v1162
      %v1164 = vpop.xlane.xlu0 %1163
      %v1165 = vmul.f32 %v1164, %v1158
      %v1166 = vadd.f32 %v1165, 1e-05
      %v1167 = vrsqrt.pop %v1166
      %v1168 = vmul.f32 %v1160, %v1167
      %v1169 = vld [vmem:[%s8] sm:$0x1]
      %v1171 = vlaneseq
      %v1172 = vshrl.u32 %v1171, 7
      %v1173 = vsub.s32 0, %v1172
      %v1174 = vrot.slane %v1169, %v1173
      %v1176 = vmul.f32 %v1168, %v1174
      %v1177 = vld [vmem:[%s9] sm:$0x1]
      %v1179 = vlaneseq
      %v1180 = vshrl.u32 %v1179, 7
      %v1181 = vsub.s32 0, %v1180
      %v1182 = vrot.slane %v1177, %v1181
      %v1184 = vadd.f32 %v1176, %v1182
      %v1185 = vpack.c.bf16 %v1184, %v1184
      %vm1186 = vcmask 257024
      %1187 = vst.msk [vmem:[%s371] sm:$0xf] %vm1186, %v1185
      %p1188 = scmp.lt.s32.totalorder %s21, 1
      %s1189 = scalar_select %p1188, %s21, 1
      %s1190 = smul.addr %s1189, 4
      %s1191 = scalar_lea.vmem %s10, %s1190
      // Predicated region
      $region61: #{transformer_forward.16} parent=59 // pred_check
        %p1192 = pneg %p259
      $region62: #{transformer_forward.16} parent=59 // pred_check_branch
        %1194 = sbr.rel (%p1192) target = $region64
      $region63: #{transformer_forward.16} parent=59 // pred_region
        _
      $region64: #{transformer_forward.16} parent=59 // pred_fallthru
        _
    $region60: #{transformer_forward.16} parent=5 // pred_fallthru
      _
    %p1195 = scmp.le.s32.totalorder 2, %s16
    // Predicated region
    $region65: #{transformer_forward.16} parent=5 // pred_check
      %p1196 = pneg %p1195
    $region66: #{transformer_forward.16} parent=5 // pred_check_branch
      %1198 = sbr.rel (%p1196) target = $region68
    $region67: #{transformer_forward.16} parent=5 // pred_region
      %s1199 = ssub.s32 %s16, 2
      // Predicated region
      $region69: #{transformer_forward.16} parent=67 // pred_check
        %p1200 = pneg %p265
      $region70: #{transformer_forward.16} parent=67 // pred_check_branch
        %1202 = sbr.rel (%p1200) target = $region72
      $region71: #{transformer_forward.16} parent=67 // pred_region
        %p1203 = scmp.lt.s32.totalorder %s22, 1
        %s1204 = scalar_select %p1203, %s22, 1
        %s1205 = smul.addr %s1204, 4
        %s1206 = scalar_lea.vmem %s10, %s1205
      $region72: #{transformer_forward.16} parent=67 // pred_fallthru
        _
    $region68: #{transformer_forward.16} parent=5 // pred_fallthru
      _
  $region6: #{transformer_forward.16} parent=0 // loop_footer
    %s20 = sadd.s32 1, %s16
  $region7: #{transformer_forward.16} parent=0 // loop_footer_branch
    %15 = sbr.rel target = $region3
  $region8: #{transformer_forward.16} parent=0 // loop_exit
    _

// kernel: transformer_forward.21
$region0: #{transformer_forward.21}
  #allocation0 [shape = 'u32[]', space=smem, size = 0x4, offset = 0x4, fixed_abs, tag = 'smem constant byte address 0x4 - core index']
  #allocation1 [shape = 'u32[144,128]{1,0:T(1,128)}', space=vmem, size = 0x12000, scoped, tag = 'internal scratch']
  %s0 = inlined_call_operand.vmem [shape: bf16[16,32], index: 0, kind: input, shape index: {}]
  %s1 = inlined_call_operand.vmem [shape: bf16[32,60], index: 1, kind: input, shape index: {}]
  %s2 = inlined_call_operand.vmem [shape: f32[1,60], index: 2, kind: input, shape index: {}]
  %s3 = inlined_call_operand.hbm [shape: f32[16,60], index: 3, kind: output, shape index: {}]
  %s4 = sld [smem:[#allocation0]]
  $region45: #{transformer_forward.21} parent=0
    _
  %s6 = ssub.s32 1, %s4
  %s7 = scalar_select 0, %s6, %s4
  $region1: #{transformer_forward.21} parent=0
    #allocation2 [shape = 'u8[8192]{0}', space=vmem, size = 0x2000, scoped, tag = 'output window, operand 0']
    #allocation3 [shape = 's32[2]{0}', space=sflag, size = 0x8, scoped, tag = 'scoped memory for transformer_forward.21']
    %8 = vsyncpa [#allocation3], 0
    %s9 = scalar_lea.sflag [#allocation3], 1
    %10 = vsyncpa %s9, 0
    loop: start=0, step=1, limit=4
    $region2: #{transformer_forward.21} parent=1 // loop_pre_header
      _
    $region3: #{transformer_forward.21} parent=1 // loop_header
      %s12 = sphi 0, %s16
      %p13 = scmp.ge.s32.totalorder %s12, 4
      %s22 = sphi 0, %s24
      %s25 = sphi 0, %s22
      %s26 = sphi 0, %s25
      %s42 = sphi 0, %s26
      %s46 = sphi 0, %s46
      %s48 = sphi 0, %s46
      %s49 = sphi 0, %s48
      %s63 = sphi 0, %s49
      %s67 = sphi 0, %s67
      %s69 = sphi 0, %s67
      %s70 = sphi 0, %s69
      %s84 = sphi 0, %s70
      %s90 = sphi 0, %s92
      %s93 = sphi 0, %s90
      %s94 = sphi 0, %s93
      %s110 = sphi 0, %s94
    $region4: #{transformer_forward.21} parent=1 // loop_header_branch
      %15 = sbr.rel (%p13) target = $region8
    $region5: #{transformer_forward.21} parent=1 // loop_body
      %s17 = ssub.s32 %s12, 1
      %s18 = ssub.s32 %s12, 2
      %s19 = sadd.s32 %s12, 1
      %s20 = ssub.s32 %s12, %s19
      %p21 = scmp.eq.s32.totalorder %s20, 0
      %s23 = sadd.s32 %s22, 1
      %s24 = scalar_select %p21, %s22, %s23
      %p27 = pneg %p21
      %p28 = scmp.eq.s32.totalorder %s12, 1
      %p29 = por %p27, %p28
      %p30 = scmp.ne.s32.totalorder %s22, %s25
      %p31 = scmp.eq.s32.totalorder %s12, 0
      %p32 = por %p30, %p31
      %p33 = scmp.ne.s32.totalorder %s22, %s25
      %p34 = scmp.eq.s32.totalorder %s17, 1
      %p35 = por %p33, %p34
      %p36 = scmp.ne.s32.totalorder %s25, %s26
      %p37 = scmp.eq.s32.totalorder %s17, 0
      %p38 = por %p36, %p37
      %p39 = scmp.ne.s32.totalorder %s25, %s26
      %p40 = scmp.eq.s32.totalorder %s18, 1
      %p41 = por %p39, %p40
      %p43 = scmp.ne.s32.totalorder %s26, %s42
      %p44 = scmp.eq.s32.totalorder %s18, 0
      %p45 = por %p43, %p44
      %s47 = sadd.s32 %s46, 1
      %p50 = scmp.eq.s32.totalorder %s12, 1
      %p51 = scmp.ne.s32.totalorder %s46, %s48
      %p52 = scmp.eq.s32.totalorder %s12, 0
      %p53 = por %p51, %p52
      %p54 = scmp.ne.s32.totalorder %s46, %s48
      %p55 = scmp.eq.s32.totalorder %s17, 1
      %p56 = por %p54, %p55
      %p57 = scmp.ne.s32.totalorder %s48, %s49
      %p58 = scmp.eq.s32.totalorder %s17, 0
      %p59 = por %p57, %p58
      %p60 = scmp.ne.s32.totalorder %s48, %s49
      %p61 = scmp.eq.s32.totalorder %s18, 1
      %p62 = por %p60, %p61
      %p64 = scmp.ne.s32.totalorder %s49, %s63
      %p65 = scmp.eq.s32.totalorder %s18, 0
      %p66 = por %p64, %p65
      %s68 = sadd.s32 %s67, 1
      %p71 = scmp.eq.s32.totalorder %s12, 1
      %p72 = scmp.ne.s32.totalorder %s67, %s69
      %p73 = scmp.eq.s32.totalorder %s12, 0
      %p74 = por %p72, %p73
      %p75 = scmp.ne.s32.totalorder %s67, %s69
      %p76 = scmp.eq.s32.totalorder %s17, 1
      %p77 = por %p75, %p76
      %p78 = scmp.ne.s32.totalorder %s69, %s70
      %p79 = scmp.eq.s32.totalorder %s17, 0
      %p80 = por %p78, %p79
      %p81 = scmp.ne.s32.totalorder %s69, %s70
      %p82 = scmp.eq.s32.totalorder %s18, 1
      %p83 = por %p81, %p82
      %p85 = scmp.ne.s32.totalorder %s70, %s84
      %p86 = scmp.eq.s32.totalorder %s18, 0
      %p87 = por %p85, %p86
      %s88 = ssub.s32 %s12, %s19
      %p89 = scmp.eq.s32.totalorder %s88, 0
      %s91 = sadd.s32 %s90, 1
      %s92 = scalar_select %p89, %s90, %s91
      %p95 = pneg %p89
      %p96 = scmp.eq.s32.totalorder %s12, 1
      %p97 = por %p95, %p96
      %p98 = scmp.ne.s32.totalorder %s90, %s93
      %p99 = scmp.eq.s32.totalorder %s12, 0
      %p100 = por %p98, %p99
      %p101 = scmp.ne.s32.totalorder %s90, %s93
      %p102 = scmp.eq.s32.totalorder %s17, 1
      %p103 = por %p101, %p102
      %p104 = scmp.ne.s32.totalorder %s93, %s94
      %p105 = scmp.eq.s32.totalorder %s17, 0
      %p106 = por %p104, %p105
      %p107 = scmp.ne.s32.totalorder %s93, %s94
      %p108 = scmp.eq.s32.totalorder %s18, 1
      %p109 = por %p107, %p108
      %p111 = scmp.ne.s32.totalorder %s94, %s110
      %p112 = scmp.eq.s32.totalorder %s18, 0
      %p113 = por %p111, %p112
      %p114 = scmp.le.s32.totalorder 1, %s12
      %p115 = scmp.lt.s32.totalorder %s12, 3
      %p116 = pnand %p114, %p115
      %p117 = pneg %p116
      // Predicated region
      $region9: #{transformer_forward.21} parent=5 // pred_check
        _
      $region10: #{transformer_forward.21} parent=5 // pred_check_branch
        %119 = sbr.rel (%p116) target = $region12
      $region11: #{transformer_forward.21} parent=5 // pred_region
        %s120 = ssub.s32 %s12, 1
        // Predicated region
        $region13: #{transformer_forward.21} parent=11 // pred_check
          %p121 = pneg %p59
        $region14: #{transformer_forward.21} parent=11 // pred_check_branch
          %123 = sbr.rel (%p121) target = $region16
        $region15: #{transformer_forward.21} parent=11 // pred_region
          _
        $region16: #{transformer_forward.21} parent=11 // pred_fallthru
          _
        // Predicated region
        $region17: #{transformer_forward.21} parent=11 // pred_check
          %p124 = pneg %p80
        $region18: #{transformer_forward.21} parent=11 // pred_check_branch
          %126 = sbr.rel (%p124) target = $region20
        $region19: #{transformer_forward.21} parent=11 // pred_region
          _
        $region20: #{transformer_forward.21} parent=11 // pred_fallthru
          _
      $region12: #{transformer_forward.21} parent=5 // pred_fallthru
        _
      %p127 = scmp.lt.s32.totalorder %s12, 2
      // Predicated region
      $region21: #{transformer_forward.21} parent=5 // pred_check
        %p128 = pneg %p127
      $region22: #{transformer_forward.21} parent=5 // pred_check_branch
        %130 = sbr.rel (%p128) target = $region24
      $region23: #{transformer_forward.21} parent=5 // pred_region
        // Predicated region
        $region25: #{transformer_forward.21} parent=23 // pred_check
          %p131 = pneg %p32
        $region26: #{transformer_forward.21} parent=23 // pred_check_branch
          %133 = sbr.rel (%p131) target = $region28
        $region27: #{transformer_forward.21} parent=23 // pred_region
          %p134 = scmp.lt.s32.totalorder %s12, 1
          %s135 = scalar_select %p134, %s12, 1
          %s136 = smul.addr %s135, 4
          %s137 = scalar_lea.vmem %s0, %s136
        $region28: #{transformer_forward.21} parent=23 // pred_fallthru
          _
      $region24: #{transformer_forward.21} parent=5 // pred_fallthru
        _
      %p138 = scmp.le.s32.totalorder 1, %s12
      %p139 = scmp.lt.s32.totalorder %s12, 3
      %p140 = pnand %p138, %p139
      %p141 = pneg %p140
      // Predicated region
      $region29: #{transformer_forward.21} parent=5 // pred_check
        _
      $region30: #{transformer_forward.21} parent=5 // pred_check_branch
        %143 = sbr.rel (%p140) target = $region32
      $region31: #{transformer_forward.21} parent=5 // pred_region
        %s144 = ssub.s32 %s12, 1
        %p145 = scmp.lt.s32.totalorder %s17, 1
        %s146 = scalar_select %p145, %s17, 1
        %s147 = smul.addr %s146, 4
        %s148 = scalar_lea.vmem %s0, %s147
        %p149 = pneg %p38
        %p150 = pneg %p35
        %p151 = pneg %p59
        %p152 = pneg %p56
        %p153 = pneg %p80
        %p154 = pneg %p77
        %p155 = pneg %p106
        %p156 = pneg %p103
        %s157 = sand.u32 %s93, 1
        %s158 = scalar_lea.sflag [#allocation3], %s157
        %s159 = sand.u32 %s93, 1
        %s160 = smul.addr %s159, 8
        %s161 = scalar_lea.vmem [#allocation2], %s160
        %p162 = scmp.lt.s32.totalorder %s17, 1
        %s163 = scalar_select %p162, %s17, 1
        %s164 = smul.addr %s163, 4
        %s165 = scalar_lea.vmem %s0, %s164
        %v167 = vld [vmem:[%s165] sm:$0xf]
        %v168 = vld [vmem:[%s1] sm:$0xf]
        %v169 = vld [vmem:[%s1 + $0x4] sm:$0xf]
        %v170 = vld [vmem:[%s1 + $0x8] sm:$0xf]
        %v171 = vld [vmem:[%s1 + $0xc] sm:$0xf]
        %v172 = vld [vmem:[%s2] sm:$0x1]
        %v174 = vlaneseq
        %v175 = vshrl.u32 %v174, 7
        %v176 = vsub.s32 0, %v175
        %v177 = vrot.slane %v172, %v176
        %v183 = vunpack.c.l.b16 %v168
        %v184 = vunpack.c.l.b16 %v169
        %v185 = vunpack.c.l.b16 %v170
        %v186 = vunpack.c.l.b16 %v171
        %v187 = vpack.c.b16 %v184, %v183
        %v188 = vpack.c.b16 %v186, %v185
        %vm191 = vcmask 261120
        %v193 = vsel %vm191, %v167, 0
        %195 = vmatprep.subr.bf16.mxu0 0
        %196 = vmatpush1.bf16.msra.mxu0 %v187
        %197 = vmatprep.subr.bf16.mxu0 0
        %198 = vmatpush1.bf16.msra.mxu0 %v188
        %199 = vmatprep.subr.bf16.mxu0 0
        %200 = vmatpush1.bf16.msra.mxu0 0
        %201 = vmatprep.subr.bf16.mxu0 0
        %202 = vmatpush1.bf16.msra.mxu0 0
        %203 = vmatprep.subr.bf16.mxu0 0
        %204 = vmatpush1.bf16.msra.mxu0 0
        %205 = vmatprep.subr.bf16.mxu0 0
        %206 = vmatpush1.bf16.msra.mxu0 0
        %207 = vmatprep.subr.bf16.mxu0 0
        %208 = vmatpush1.bf16.msra.mxu0 0
        %209 = vmatprep.subr.bf16.mxu0 0
        %210 = vmatpush1.bf16.msra.mxu0 0
        %211 = vmatprep.subr.bf16.mxu0 0
        %212 = vmatpush1.bf16.msra.mxu0 0
        %213 = vmatprep.subr.bf16.mxu0 0
        %214 = vmatpush1.bf16.msra.mxu0 0
        %215 = vmatprep.subr.bf16.mxu0 0
        %216 = vmatpush1.bf16.msra.mxu0 0
        %217 = vmatprep.subr.bf16.mxu0 0
        %218 = vmatpush1.bf16.msra.mxu0 0
        %219 = vmatprep.subr.bf16.mxu0 0
        %220 = vmatpush1.bf16.msra.mxu0 0
        %221 = vmatprep.subr.bf16.mxu0 0
        %222 = vmatpush1.bf16.msra.mxu0 0
        %223 = vmatprep.subr.bf16.mxu0 0
        %224 = vmatpush1.bf16.msra.mxu0 0
        %225 = vmatprep.subr.bf16.mxu0 0
        %226 = vmatpush1.bf16.msra.mxu0 0
        %227 = vmatprep.mubr.bf16.mxu0 0
        %228 = vmatmul.mubr.bf16.gmra.mrb[0].mxu0 %v193
        %v229 = vpop.f32.mrb[0].mxu0
        %v230 = vadd.f32 %v177, %v229
        %v231 = vpop.f32.mrb[0].mxu0
        %v232 = vpop.f32.mrb[0].mxu0
        %v233 = vpop.f32.mrb[0].mxu0
        %234 = vdwg.mxu0
        %vm235 = vcmask 490496
        %236 = vst.msk [vmem:[%s161] sm:$0xff] %vm235, %v230
        %s237 = sand.u32 %s93, 1
        %s238 = scalar_lea.sflag [#allocation3], %s237
        %s239 = sand.u32 %s93, 1
        %s240 = smul.addr %s239, 8
        %s241 = scalar_lea.vmem [#allocation2], %s240
        // Predicated region
        $region33: #{transformer_forward.21} parent=31 // pred_check
          %p242 = pneg %p103
        $region34: #{transformer_forward.21} parent=31 // pred_check_branch
          %244 = sbr.rel (%p242) target = $region36
        $region35: #{transformer_forward.21} parent=31 // pred_region
          %s246 = ssub.s32 128, 128
          %247 = vsyncadd %s238, %s246
          %s248 = smul.addr %s17, 128
          %s249 = scalar_lea.hbm %s3, %s248
          %s251 = sshll.u32 %s241, 4
          %s252 = int_to_ptr.vmem [resolvable:$true] %s251
          %254 = dma.vmem_to_hbm [thread:$0]  %s252, 128, %s249, %s238
        $region36: #{transformer_forward.21} parent=31 // pred_fallthru
          _
      $region32: #{transformer_forward.21} parent=5 // pred_fallthru
        _
      %p255 = scmp.le.s32.totalorder 2, %s12
      // Predicated region
      $region37: #{transformer_forward.21} parent=5 // pred_check
        %p256 = pneg %p255
      $region38: #{transformer_forward.21} parent=5 // pred_check_branch
        %258 = sbr.rel (%p256) target = $region40
      $region39: #{transformer_forward.21} parent=5 // pred_region
        %s259 = ssub.s32 %s12, 2
        // Predicated region
        $region41: #{transformer_forward.21} parent=39 // pred_check
          %p260 = pneg %p109
        $region42: #{transformer_forward.21} parent=39 // pred_check_branch
          %262 = sbr.rel (%p260) target = $region44
        $region43: #{transformer_forward.21} parent=39 // pred_region
          %s263 = sand.u32 %s94, 1
          %s264 = scalar_lea.sflag [#allocation3], %s263
          %s265 = sand.u32 %s94, 1
          %s266 = smul.addr %s265, 8
          %s267 = scalar_lea.vmem [#allocation2], %s266
          %268 = dma.done %s264, 128
        $region44: #{transformer_forward.21} parent=39 // pred_fallthru
          _
      $region40: #{transformer_forward.21} parent=5 // pred_fallthru
        _
    $region6: #{transformer_forward.21} parent=1 // loop_footer
      %s16 = sadd.s32 1, %s12
    $region7: #{transformer_forward.21} parent=1 // loop_footer_branch
      %11 = sbr.rel target = $region3
    $region8: #{transformer_forward.21} parent=1 // loop_exit
      _
    %269 = vsyncpa [#allocation3], 1
    %s270 = scalar_lea.sflag [#allocation3], 1
    %271 = vsyncpa %s270, 1

</llo_original>
